<compile_context>
chip_gen: v5e
topology: v5e:2x2
jax: 0.10.0
libtpu: 0.0.40
codegen_flags: <defaults>
</compile_context>

<pallas_src>
import numpy as np
import jax
import jax.numpy as jnp
from jax.experimental import pallas as pl
from jax.experimental.pallas import tpu as pltpu

# ---- module hyperparameters (mirror DynamicPositionTimeBias.__init__ defaults) ----
DIM = 32                  # MLP hidden dim
HEADS = 4
DEPTH = 2                 # hard-coded below: one hidden Linear(dim, dim)
NUM_MEM = 1
MAX_POS = 512
POS_INTERVALS_NUM = 1
TIME_INTERVALS = np.array([1.0, 24.0, 168.0], dtype=np.float64)
POS_INTERVALS = np.array(
    [pow(MAX_POS, 1.0 - i / float(POS_INTERVALS_NUM)) for i in range(POS_INTERVALS_NUM)],
    dtype=np.float64,
)
NUM_FEATS = POS_INTERVALS_NUM + len(TIME_INTERVALS)

MATMUL_DTYPE = jnp.bfloat16   # MXU operand dtype (accumulation stays f32)
ACT_DTYPE = jnp.bfloat16      # hidden activations; use jnp.float32 on v5e (no bf16 VPU/EUP)
PAIR_TARGET = 32768           # ~pairs (TR * J) per grid step
ROW_TILE_MAX = 32             # cap on rows per step (= static unroll factor)


def _cdiv(a, b):
    return -(-a // b)


def _round_up(a, b):
    return _cdiv(a, b) * b


def _row_tile(J):
    """Rows of i per grid step: multiple of 8, sized so TR * J ~ PAIR_TARGET."""
    by_target = _round_up(_cdiv(PAIR_TARGET, J), 8)
    return max(8, min(ROW_TILE_MAX, _round_up(J, 8), by_target))


def _silu(x):
    # x * sigmoid(x) == 0.5x + 0.5x*tanh(0.5x): one EUP push (tanh) per element.
    h = 0.5 * x
    return h + h * jnp.tanh(h)


def _frac(x, inv):
    # ((x mod iv) / iv) == x*inv - floor(x*inv) for iv > 0 (floor-mod), no divide.
    y = x * inv
    return y - jnp.floor(y)


def _bias_kernel(ti_ref, tj_ref, w0t_ref, b0_ref, w1t_ref, b1_ref,
                 wft_ref, bf_ref, o_ref):
    # ti_ref: (1, TR, 1) f32   row times for this row tile (zeros past J)
    # tj_ref: (1, 1, J)  f32   column times (full row, num_mem front padded with 0)
    # w0t:    (DIM, NUM_FEATS) bf16,  b0: (DIM, 1) f32
    # w1t:    (DIM, DIM)       bf16,  b1: (DIM, 1) f32
    # wft:    (HEADS, DIM)     bf16,  bf: (HEADS, 1) f32
    # o_ref:  (1, HEADS, TR, J) f32   final-layout bias block
    _, _, TR, J = o_ref.shape
    inv_pos = [1.0 / float(v) for v in POS_INTERVALS]
    inv_time = [1.0 / float(v) for v in TIME_INTERVALS]

    ti = ti_ref[0]                     # (TR, 1)
    tj = tj_ref[0]                     # (1, J)
    w0t = w0t_ref[...]
    b0 = b0_ref[...]
    w1t = w1t_ref[...]
    b1 = b1_ref[...]
    wft = wft_ref[...]
    bf = bf_ref[...]

    col = jax.lax.broadcasted_iota(jnp.int32, (1, J), 1)
    col_f = col.astype(jnp.float32)
    col_keep = col >= NUM_MEM          # (1, J) bool, masks the num_mem columns
    row0 = pl.program_id(0) * TR

    # Static unroll over the TR rows of this tile; each row is one full MLP
    # pass on a lane-dense (channels-in-sublanes, columns-in-lanes) slab.
    for rr in range(TR):
        row = row0 + rr
        td = ti[rr:rr + 1, :] - tj                          # (1, J) time diff
        pd = row.astype(jnp.float32) - col_f                # (1, J) position diff
        feats = ([_frac(pd, iv) for iv in inv_pos]
                 + [_frac(td, iv) for iv in inv_time])
        x = jnp.concatenate(feats, axis=0).astype(MATMUL_DTYPE)    # (NUM_FEATS, J)

        # layer 0 on the MXU (review item 1), f32 accumulation
        acc = jnp.dot(w0t, x, preferred_element_type=jnp.float32) + b0      # (DIM, J)
        h = _silu(acc.astype(ACT_DTYPE))
        # hidden layer (DEPTH - 1 == 1)
        z = jnp.dot(w1t, h, preferred_element_type=jnp.float32) + b1        # (DIM, J)
        h = _silu(z.astype(ACT_DTYPE))
        # final projection to heads
        out = jnp.dot(wft, h, preferred_element_type=jnp.float32) + bf      # (HEADS, J)

        keep = jnp.logical_and(row >= NUM_MEM, col_keep)                    # (1, J)
        o_ref[0, :, rr, :] = jnp.where(keep, out, 0.0)


def dynamic_position_time_bias(time_i, time_j, params):
    """time_i, time_j: (B, N) with N = j - num_mem.

    Returns (B, HEADS, N + NUM_MEM, N + NUM_MEM), matching the PyTorch module
    (the num_mem zero border is produced by the in-kernel mask)."""
    B, N = time_i.shape
    J = N + NUM_MEM
    TR = _row_tile(J)
    n_t = _cdiv(J, TR)
    Jr = n_t * TR
    w0, b0, w1, b1, wf, bf = params

    # Per-batch reference time keeps |t| small so the in-kernel f32 difference
    # and frac() keep their sub-interval resolution for large absolute stamps.
    tref = jnp.minimum(jnp.min(time_i, axis=1, keepdims=True),
                       jnp.min(time_j, axis=1, keepdims=True))
    ti = (time_i - tref).astype(jnp.float32)
    tj = (time_j - tref).astype(jnp.float32)
    # Pad the num_mem border (masked in-kernel) and the row axis up to Jr so
    # every row tile reads defined zeros; extra data is only O(B*J).
    ti_col = jnp.pad(ti, ((0, 0), (NUM_MEM, Jr - J)))[:, :, None]   # (B, Jr, 1)
    tj_row = jnp.pad(tj, ((0, 0), (NUM_MEM, 0)))[:, None, :]        # (B, 1, J)

    # Weights pre-transposed so every matmul is (out, K) @ (K, lanes).
    w0t = jnp.asarray(w0, jnp.float32).T.astype(MATMUL_DTYPE)       # (DIM, NUM_FEATS)
    b0c = jnp.asarray(b0, jnp.float32).reshape(DIM, 1)
    w1t = jnp.asarray(w1, jnp.float32).T.astype(MATMUL_DTYPE)       # (DIM, DIM)
    b1c = jnp.asarray(b1, jnp.float32).reshape(DIM, 1)
    wft = jnp.asarray(wf, jnp.float32).T.astype(MATMUL_DTYPE)       # (HEADS, DIM)
    bfc = jnp.asarray(bf, jnp.float32).reshape(HEADS, 1)

    const2 = lambda t, b: (0, 0)   # full-block weight/bias specs (never re-DMA'd)

    # TODO(synk): optionally emit a bf16 bias output on v5e if the consumer's
    #             attention add tolerates it (halves store bytes).
    out = pl.pallas_call(
        _bias_kernel,
        out_shape=jax.ShapeDtypeStruct((B, HEADS, J, J), jnp.float32),
        grid=(n_t, B),
        in_specs=[
            pl.BlockSpec((1, TR, 1), lambda t, b: (b, t, 0)),    # row times
            pl.BlockSpec((1, 1, J), lambda t, b: (b, 0, 0)),     # column times
            pl.BlockSpec(w0t.shape, const2),
            pl.BlockSpec(b0c.shape, const2),
            pl.BlockSpec(w1t.shape, const2),
            pl.BlockSpec(b1c.shape, const2),
            pl.BlockSpec(wft.shape, const2),
            pl.BlockSpec(bfc.shape, const2),
        ],
        out_specs=pl.BlockSpec((1, HEADS, TR, J), lambda t, b: (b, 0, t, 0)),
        compiler_params=pltpu.CompilerParams(
            dimension_semantics=("parallel", "parallel"),
            vmem_limit_bytes=32 * 1024 * 1024,
        ),
    )(ti_col, tj_row, w0t, b0c, w1t, b1c, wft, bfc)
    return out


def init_params(key):
    """Deterministic Linear params (uniform +-1/sqrt(fan_in), like nn.Linear).
    Layout: weights stored as (in, out), biases as (out,)."""
    k = jax.random.split(key, 6)
    s0 = 1.0 / np.sqrt(NUM_FEATS)
    s1 = 1.0 / np.sqrt(DIM)
    w0 = jax.random.uniform(k[0], (NUM_FEATS, DIM), jnp.float32, -s0, s0)
    b0 = jax.random.uniform(k[1], (DIM,), jnp.float32, -s0, s0)
    w1 = jax.random.uniform(k[2], (DIM, DIM), jnp.float32, -s1, s1)
    b1 = jax.random.uniform(k[3], (DIM,), jnp.float32, -s1, s1)
    wf = jax.random.uniform(k[4], (DIM, HEADS), jnp.float32, -s1, s1)
    bf = jax.random.uniform(k[5], (HEADS,), jnp.float32, -s1, s1)
    return (w0, b0, w1, b1, wf, bf)


def reference(time_i, time_j, params):
    """Pure-JAX f32 reference mirroring the PyTorch forward."""
    w0, b0, w1, b1, wf, bf = params
    B, N = time_i.shape
    pos_iv = jnp.asarray(POS_INTERVALS, jnp.float32)
    t_iv = jnp.asarray(TIME_INTERVALS, jnp.float32)
    seq = jnp.arange(N, dtype=jnp.float32)
    pos_diff = jnp.mod(seq[:, None, None] - seq[None, :, None], pos_iv) / pos_iv
    pos_diff_b = jnp.broadcast_to(pos_diff[None], (B, N, N, POS_INTERVALS_NUM))
    td = time_i[:, :, None, None] - time_j[:, None, :, None]
    time_diff = jnp.mod(td, t_iv) / t_iv
    diffs = jnp.concatenate([pos_diff_b, time_diff], axis=3).astype(jnp.float32)
    x = diffs.reshape(-1, NUM_FEATS)
    h = jax.nn.silu(x @ w0 + b0)
    h = jax.nn.silu(h @ w1 + b1)
    out = h @ wf + bf
    bias = out.reshape(B, N, N, HEADS).transpose(0, 3, 1, 2)
    return jnp.pad(bias, ((0, 0), (0, 0), (NUM_MEM, 0), (NUM_MEM, 0)))


if __name__ == "__main__":
    key = jax.random.PRNGKey(0)
    kp, kt = jax.random.split(key)
    params = init_params(kp)

    B = 2
    J = 9                        # i == j == 9  ->  n = J - num_mem = 8
    N = J - NUM_MEM
    # monotone "timestamps" per batch element
    time_i = jnp.cumsum(jax.random.uniform(kt, (B, N), jnp.float32, 0.0, 50.0), axis=1)
    time_j = time_i

    bias = dynamic_position_time_bias(time_i, time_j, params)
    bias = jax.block_until_ready(bias)
    assert bias.shape == (B, HEADS, J, J), bias.shape

    ref = reference(time_i, time_j, params)
    # Tolerance accounts for bf16 MXU operands and bf16 hidden activations
    # (f32 accumulation) in the kernel vs. the pure-f32 reference.
    np.testing.assert_allclose(np.asarray(bias), np.asarray(ref), rtol=3e-2, atol=3e-2)
    print("KERNEL_OK")
</pallas_src>

<mosaic_0001>
module attributes {stable_mosaic.version = 11 : i64} {
  func.func @_bias_kernel(%arg0: i32, %arg1: i32, %arg2: memref<1x16x1xf32, #tpu.memory_space<vmem>>, %arg3: memref<1x1x9xf32, #tpu.memory_space<vmem>>, %arg4: memref<32x4xbf16, #tpu.memory_space<vmem>>, %arg5: memref<32x1xf32, #tpu.memory_space<vmem>>, %arg6: memref<32x32xbf16, #tpu.memory_space<vmem>>, %arg7: memref<32x1xf32, #tpu.memory_space<vmem>>, %arg8: memref<4x32xbf16, #tpu.memory_space<vmem>>, %arg9: memref<4x1xf32, #tpu.memory_space<vmem>>, %arg10: memref<1x4x16x9xf32, #tpu.memory_space<vmem>>) attributes {dimension_semantics = [#tpu.dimension_semantics<parallel>, #tpu.dimension_semantics<parallel>], iteration_bounds = array<i64: 1, 2>, scalar_prefetch = 0 : i64, scratch_operands = 0 : i64, tpu.core_type = #tpu.core_type<tc>, window_params = [{transform_indices = @transform_0, window_bounds = array<i64: 1, 16, 1>}, {transform_indices = @transform_1, window_bounds = array<i64: 1, 1, 9>}, {pipeline_mode = #tpu.pipeline_mode<synchronous>, transform_indices = @transform_2, window_bounds = array<i64: 32, 4>}, {pipeline_mode = #tpu.pipeline_mode<synchronous>, transform_indices = @transform_3, window_bounds = array<i64: 32, 1>}, {pipeline_mode = #tpu.pipeline_mode<synchronous>, transform_indices = @transform_4, window_bounds = array<i64: 32, 32>}, {pipeline_mode = #tpu.pipeline_mode<synchronous>, transform_indices = @transform_5, window_bounds = array<i64: 32, 1>}, {pipeline_mode = #tpu.pipeline_mode<synchronous>, transform_indices = @transform_6, window_bounds = array<i64: 4, 32>}, {pipeline_mode = #tpu.pipeline_mode<synchronous>, transform_indices = @transform_7, window_bounds = array<i64: 4, 1>}, {transform_indices = @transform_8, window_bounds = array<i64: 1, 4, 16, 9>}]} {
    %c0 = arith.constant 0 : index
    %c0_0 = arith.constant 0 : index
    %c0_1 = arith.constant 0 : index
    %0 = vector.load %arg2[%c0, %c0_0, %c0_1] : memref<1x16x1xf32, #tpu.memory_space<vmem>>, vector<1x16x1xf32>
    %1 = vector.shape_cast %0 : vector<1x16x1xf32> to vector<16x1xf32>
    %c0_2 = arith.constant 0 : index
    %c0_3 = arith.constant 0 : index
    %c0_4 = arith.constant 0 : index
    %2 = vector.load %arg3[%c0_2, %c0_3, %c0_4] : memref<1x1x9xf32, #tpu.memory_space<vmem>>, vector<1x1x9xf32>
    %3 = vector.shape_cast %2 : vector<1x1x9xf32> to vector<1x9xf32>
    %c0_5 = arith.constant 0 : index
    %c0_6 = arith.constant 0 : index
    %4 = vector.load %arg4[%c0_5, %c0_6] : memref<32x4xbf16, #tpu.memory_space<vmem>>, vector<32x4xbf16>
    %c0_7 = arith.constant 0 : index
    %c0_8 = arith.constant 0 : index
    %5 = vector.load %arg5[%c0_7, %c0_8] : memref<32x1xf32, #tpu.memory_space<vmem>>, vector<32x1xf32>
    %c0_9 = arith.constant 0 : index
    %c0_10 = arith.constant 0 : index
    %6 = vector.load %arg6[%c0_9, %c0_10] : memref<32x32xbf16, #tpu.memory_space<vmem>>, vector<32x32xbf16>
    %c0_11 = arith.constant 0 : index
    %c0_12 = arith.constant 0 : index
    %7 = vector.load %arg7[%c0_11, %c0_12] : memref<32x1xf32, #tpu.memory_space<vmem>>, vector<32x1xf32>
    %c0_13 = arith.constant 0 : index
    %c0_14 = arith.constant 0 : index
    %8 = vector.load %arg8[%c0_13, %c0_14] : memref<4x32xbf16, #tpu.memory_space<vmem>>, vector<4x32xbf16>
    %c0_15 = arith.constant 0 : index
    %c0_16 = arith.constant 0 : index
    %9 = vector.load %arg9[%c0_15, %c0_16] : memref<4x1xf32, #tpu.memory_space<vmem>>, vector<4x1xf32>
    %10 = tpu.iota {dimensions = array<i32: 1>} : vector<1x9xi32>
    %11 = arith.sitofp %10 : vector<1x9xi32> to vector<1x9xf32>
    %c1_i32 = arith.constant 1 : i32
    %12 = vector.broadcast %c1_i32 : i32 to vector<1x9xi32>
    %13 = arith.cmpi sge, %10, %12 : vector<1x9xi32>
    %c16_i32 = arith.constant 16 : i32
    %14 = arith.muli %arg0, %c16_i32 : i32
    %c0_i32 = arith.constant 0 : i32
    %15 = arith.addi %14, %c0_i32 : i32
    %16 = vector.extract_strided_slice %1 {offsets = [0, 0], sizes = [1, 1], strides = [1, 1]} : vector<16x1xf32> to vector<1x1xf32>
    %17 = vector.broadcast %16 : vector<1x1xf32> to vector<1x9xf32>
    %18 = arith.subf %17, %3 : vector<1x9xf32>
    %19 = arith.sitofp %15 : i32 to f32
    %20 = vector.broadcast %19 : f32 to vector<1x9xf32>
    %21 = arith.subf %20, %11 : vector<1x9xf32>
    %cst = arith.constant 0.001953125 : f32
    %22 = vector.broadcast %cst : f32 to vector<1x9xf32>
    %23 = arith.mulf %21, %22 : vector<1x9xf32>
    %24 = math.floor %23 : vector<1x9xf32>
    %25 = arith.subf %23, %24 : vector<1x9xf32>
    %cst_17 = arith.constant 1.000000e+00 : f32
    %26 = vector.broadcast %cst_17 : f32 to vector<1x9xf32>
    %27 = arith.mulf %18, %26 : vector<1x9xf32>
    %28 = math.floor %27 : vector<1x9xf32>
    %29 = arith.subf %27, %28 : vector<1x9xf32>
    %cst_18 = arith.constant 0.0416666679 : f32
    %30 = vector.broadcast %cst_18 : f32 to vector<1x9xf32>
    %31 = arith.mulf %18, %30 : vector<1x9xf32>
    %32 = math.floor %31 : vector<1x9xf32>
    %33 = arith.subf %31, %32 : vector<1x9xf32>
    %cst_19 = arith.constant 0.00595238106 : f32
    %34 = vector.broadcast %cst_19 : f32 to vector<1x9xf32>
    %35 = arith.mulf %18, %34 : vector<1x9xf32>
    %36 = math.floor %35 : vector<1x9xf32>
    %37 = arith.subf %35, %36 : vector<1x9xf32>
    %38 = tpu.concatenate %25, %29, %33, %37 in 0 : vector<1x9xf32>, vector<1x9xf32>, vector<1x9xf32>, vector<1x9xf32> -> vector<4x9xf32>
    %39 = arith.truncf %38 : vector<4x9xf32> to vector<4x9xbf16>
    %cst_20 = arith.constant dense<0.000000e+00> : vector<32x9xf32>
    %40 = tpu.matmul %4, %39, %cst_20 {dimension_numbers = #tpu.dot_dimension_numbers<[1], [0], [0], [1], [0, 0, 1, 1], [], []>} : vector<32x4xbf16>, vector<4x9xbf16>, vector<32x9xf32> -> vector<32x9xf32>
    %41 = vector.broadcast %5 : vector<32x1xf32> to vector<32x9xf32>
    %42 = arith.addf %40, %41 : vector<32x9xf32>
    %43 = arith.truncf %42 : vector<32x9xf32> to vector<32x9xbf16>
    %cst_21 = arith.constant 5.000000e-01 : bf16
    %44 = vector.broadcast %cst_21 : bf16 to vector<32x9xbf16>
    %45 = arith.mulf %44, %43 : vector<32x9xbf16>
    %46 = math.tanh %45 : vector<32x9xbf16>
    %47 = arith.mulf %45, %46 : vector<32x9xbf16>
    %48 = arith.addf %45, %47 : vector<32x9xbf16>
    %cst_22 = arith.constant dense<0.000000e+00> : vector<32x9xf32>
    %49 = tpu.matmul %6, %48, %cst_22 {dimension_numbers = #tpu.dot_dimension_numbers<[1], [0], [0], [1], [0, 0, 1, 1], [], []>} : vector<32x32xbf16>, vector<32x9xbf16>, vector<32x9xf32> -> vector<32x9xf32>
    %50 = vector.broadcast %7 : vector<32x1xf32> to vector<32x9xf32>
    %51 = arith.addf %49, %50 : vector<32x9xf32>
    %52 = arith.truncf %51 : vector<32x9xf32> to vector<32x9xbf16>
    %cst_23 = arith.constant 5.000000e-01 : bf16
    %53 = vector.broadcast %cst_23 : bf16 to vector<32x9xbf16>
    %54 = arith.mulf %53, %52 : vector<32x9xbf16>
    %55 = math.tanh %54 : vector<32x9xbf16>
    %56 = arith.mulf %54, %55 : vector<32x9xbf16>
    %57 = arith.addf %54, %56 : vector<32x9xbf16>
    %cst_24 = arith.constant dense<0.000000e+00> : vector<4x9xf32>
    %58 = tpu.matmul %8, %57, %cst_24 {dimension_numbers = #tpu.dot_dimension_numbers<[1], [0], [0], [1], [0, 0, 1, 1], [], []>} : vector<4x32xbf16>, vector<32x9xbf16>, vector<4x9xf32> -> vector<4x9xf32>
    %59 = vector.broadcast %9 : vector<4x1xf32> to vector<4x9xf32>
    %60 = arith.addf %58, %59 : vector<4x9xf32>
    %c1_i32_25 = arith.constant 1 : i32
    %61 = arith.cmpi sge, %15, %c1_i32_25 : i32
    %62 = vector.broadcast %61 : i1 to vector<1x9xi1>
    %63 = arith.andi %62, %13 : vector<1x9xi1>
    %cst_26 = arith.constant 0.000000e+00 : f32
    %64 = vector.shape_cast %63 : vector<1x9xi1> to vector<1x9xi1>
    %65 = vector.broadcast %64 : vector<1x9xi1> to vector<4x9xi1>
    %66 = vector.broadcast %cst_26 : f32 to vector<4x9xf32>
    %67 = arith.select %65, %60, %66 : vector<4x9xi1>, vector<4x9xf32>
    %c0_27 = arith.constant 0 : index
    %c0_28 = arith.constant 0 : index
    %c0_29 = arith.constant 0 : index
    %c0_30 = arith.constant 0 : index
    %68 = vector.load %arg10[%c0_27, %c0_28, %c0_29, %c0_30] : memref<1x4x16x9xf32, #tpu.memory_space<vmem>>, vector<1x4x1x9xf32>
    %69 = vector.shape_cast %68 : vector<1x4x1x9xf32> to vector<4x9xf32>
    %70 = vector.shape_cast %67 : vector<4x9xf32> to vector<1x4x1x9xf32>
    tpu.vector_store %arg10[%c0_27, %c0_28, %c0_29, %c0_30], %70 {strides = array<i32>} : memref<1x4x16x9xf32, #tpu.memory_space<vmem>>, vector<1x4x1x9xf32>,
    %c1_i32_31 = arith.constant 1 : i32
    %71 = arith.addi %14, %c1_i32_31 : i32
    %72 = vector.extract_strided_slice %1 {offsets = [1, 0], sizes = [1, 1], strides = [1, 1]} : vector<16x1xf32> to vector<1x1xf32>
    %73 = vector.broadcast %72 : vector<1x1xf32> to vector<1x9xf32>
    %74 = arith.subf %73, %3 : vector<1x9xf32>
    %75 = arith.sitofp %71 : i32 to f32
    %76 = vector.broadcast %75 : f32 to vector<1x9xf32>
    %77 = arith.subf %76, %11 : vector<1x9xf32>
    %cst_32 = arith.constant 0.001953125 : f32
    %78 = vector.broadcast %cst_32 : f32 to vector<1x9xf32>
    %79 = arith.mulf %77, %78 : vector<1x9xf32>
    %80 = math.floor %79 : vector<1x9xf32>
    %81 = arith.subf %79, %80 : vector<1x9xf32>
    %cst_33 = arith.constant 1.000000e+00 : f32
    %82 = vector.broadcast %cst_33 : f32 to vector<1x9xf32>
    %83 = arith.mulf %74, %82 : vector<1x9xf32>
    %84 = math.floor %83 : vector<1x9xf32>
    %85 = arith.subf %83, %84 : vector<1x9xf32>
    %cst_34 = arith.constant 0.0416666679 : f32
    %86 = vector.broadcast %cst_34 : f32 to vector<1x9xf32>
    %87 = arith.mulf %74, %86 : vector<1x9xf32>
    %88 = math.floor %87 : vector<1x9xf32>
    %89 = arith.subf %87, %88 : vector<1x9xf32>
    %cst_35 = arith.constant 0.00595238106 : f32
    %90 = vector.broadcast %cst_35 : f32 to vector<1x9xf32>
    %91 = arith.mulf %74, %90 : vector<1x9xf32>
    %92 = math.floor %91 : vector<1x9xf32>
    %93 = arith.subf %91, %92 : vector<1x9xf32>
    %94 = tpu.concatenate %81, %85, %89, %93 in 0 : vector<1x9xf32>, vector<1x9xf32>, vector<1x9xf32>, vector<1x9xf32> -> vector<4x9xf32>
    %95 = arith.truncf %94 : vector<4x9xf32> to vector<4x9xbf16>
    %cst_36 = arith.constant dense<0.000000e+00> : vector<32x9xf32>
    %96 = tpu.matmul %4, %95, %cst_36 {dimension_numbers = #tpu.dot_dimension_numbers<[1], [0], [0], [1], [0, 0, 1, 1], [], []>} : vector<32x4xbf16>, vector<4x9xbf16>, vector<32x9xf32> -> vector<32x9xf32>
    %97 = vector.broadcast %5 : vector<32x1xf32> to vector<32x9xf32>
    %98 = arith.addf %96, %97 : vector<32x9xf32>
    %99 = arith.truncf %98 : vector<32x9xf32> to vector<32x9xbf16>
    %cst_37 = arith.constant 5.000000e-01 : bf16
    %100 = vector.broadcast %cst_37 : bf16 to vector<32x9xbf16>
    %101 = arith.mulf %100, %99 : vector<32x9xbf16>
    %102 = math.tanh %101 : vector<32x9xbf16>
    %103 = arith.mulf %101, %102 : vector<32x9xbf16>
    %104 = arith.addf %101, %103 : vector<32x9xbf16>
    %cst_38 = arith.constant dense<0.000000e+00> : vector<32x9xf32>
    %105 = tpu.matmul %6, %104, %cst_38 {dimension_numbers = #tpu.dot_dimension_numbers<[1], [0], [0], [1], [0, 0, 1, 1], [], []>} : vector<32x32xbf16>, vector<32x9xbf16>, vector<32x9xf32> -> vector<32x9xf32>
    %106 = vector.broadcast %7 : vector<32x1xf32> to vector<32x9xf32>
    %107 = arith.addf %105, %106 : vector<32x9xf32>
    %108 = arith.truncf %107 : vector<32x9xf32> to vector<32x9xbf16>
    %cst_39 = arith.constant 5.000000e-01 : bf16
    %109 = vector.broadcast %cst_39 : bf16 to vector<32x9xbf16>
    %110 = arith.mulf %109, %108 : vector<32x9xbf16>
    %111 = math.tanh %110 : vector<32x9xbf16>
    %112 = arith.mulf %110, %111 : vector<32x9xbf16>
    %113 = arith.addf %110, %112 : vector<32x9xbf16>
    %cst_40 = arith.constant dense<0.000000e+00> : vector<4x9xf32>
    %114 = tpu.matmul %8, %113, %cst_40 {dimension_numbers = #tpu.dot_dimension_numbers<[1], [0], [0], [1], [0, 0, 1, 1], [], []>} : vector<4x32xbf16>, vector<32x9xbf16>, vector<4x9xf32> -> vector<4x9xf32>
    %115 = vector.broadcast %9 : vector<4x1xf32> to vector<4x9xf32>
    %116 = arith.addf %114, %115 : vector<4x9xf32>
    %c1_i32_41 = arith.constant 1 : i32
    %117 = arith.cmpi sge, %71, %c1_i32_41 : i32
    %118 = vector.broadcast %117 : i1 to vector<1x9xi1>
    %119 = arith.andi %118, %13 : vector<1x9xi1>
    %cst_42 = arith.constant 0.000000e+00 : f32
    %120 = vector.shape_cast %119 : vector<1x9xi1> to vector<1x9xi1>
    %121 = vector.broadcast %120 : vector<1x9xi1> to vector<4x9xi1>
    %122 = vector.broadcast %cst_42 : f32 to vector<4x9xf32>
    %123 = arith.select %121, %116, %122 : vector<4x9xi1>, vector<4x9xf32>
    %c0_43 = arith.constant 0 : index
    %c0_44 = arith.constant 0 : index
    %c1 = arith.constant 1 : index
    %c0_45 = arith.constant 0 : index
    %124 = vector.load %arg10[%c0_43, %c0_44, %c1, %c0_45] : memref<1x4x16x9xf32, #tpu.memory_space<vmem>>, vector<1x4x1x9xf32>
    %125 = vector.shape_cast %124 : vector<1x4x1x9xf32> to vector<4x9xf32>
    %126 = vector.shape_cast %123 : vector<4x9xf32> to vector<1x4x1x9xf32>
    tpu.vector_store %arg10[%c0_43, %c0_44, %c1, %c0_45], %126 {strides = array<i32>} : memref<1x4x16x9xf32, #tpu.memory_space<vmem>>, vector<1x4x1x9xf32>,
    %c2_i32 = arith.constant 2 : i32
    %127 = arith.addi %14, %c2_i32 : i32
    %128 = vector.extract_strided_slice %1 {offsets = [2, 0], sizes = [1, 1], strides = [1, 1]} : vector<16x1xf32> to vector<1x1xf32>
    %129 = vector.broadcast %128 : vector<1x1xf32> to vector<1x9xf32>
    %130 = arith.subf %129, %3 : vector<1x9xf32>
    %131 = arith.sitofp %127 : i32 to f32
    %132 = vector.broadcast %131 : f32 to vector<1x9xf32>
    %133 = arith.subf %132, %11 : vector<1x9xf32>
    %cst_46 = arith.constant 0.001953125 : f32
    %134 = vector.broadcast %cst_46 : f32 to vector<1x9xf32>
    %135 = arith.mulf %133, %134 : vector<1x9xf32>
    %136 = math.floor %135 : vector<1x9xf32>
    %137 = arith.subf %135, %136 : vector<1x9xf32>
    %cst_47 = arith.constant 1.000000e+00 : f32
    %138 = vector.broadcast %cst_47 : f32 to vector<1x9xf32>
    %139 = arith.mulf %130, %138 : vector<1x9xf32>
    %140 = math.floor %139 : vector<1x9xf32>
    %141 = arith.subf %139, %140 : vector<1x9xf32>
    %cst_48 = arith.constant 0.0416666679 : f32
    %142 = vector.broadcast %cst_48 : f32 to vector<1x9xf32>
    %143 = arith.mulf %130, %142 : vector<1x9xf32>
    %144 = math.floor %143 : vector<1x9xf32>
    %145 = arith.subf %143, %144 : vector<1x9xf32>
    %cst_49 = arith.constant 0.00595238106 : f32
    %146 = vector.broadcast %cst_49 : f32 to vector<1x9xf32>
    %147 = arith.mulf %130, %146 : vector<1x9xf32>
    %148 = math.floor %147 : vector<1x9xf32>
    %149 = arith.subf %147, %148 : vector<1x9xf32>
    %150 = tpu.concatenate %137, %141, %145, %149 in 0 : vector<1x9xf32>, vector<1x9xf32>, vector<1x9xf32>, vector<1x9xf32> -> vector<4x9xf32>
    %151 = arith.truncf %150 : vector<4x9xf32> to vector<4x9xbf16>
    %cst_50 = arith.constant dense<0.000000e+00> : vector<32x9xf32>
    %152 = tpu.matmul %4, %151, %cst_50 {dimension_numbers = #tpu.dot_dimension_numbers<[1], [0], [0], [1], [0, 0, 1, 1], [], []>} : vector<32x4xbf16>, vector<4x9xbf16>, vector<32x9xf32> -> vector<32x9xf32>
    %153 = vector.broadcast %5 : vector<32x1xf32> to vector<32x9xf32>
    %154 = arith.addf %152, %153 : vector<32x9xf32>
    %155 = arith.truncf %154 : vector<32x9xf32> to vector<32x9xbf16>
    %cst_51 = arith.constant 5.000000e-01 : bf16
    %156 = vector.broadcast %cst_51 : bf16 to vector<32x9xbf16>
    %157 = arith.mulf %156, %155 : vector<32x9xbf16>
    %158 = math.tanh %157 : vector<32x9xbf16>
    %159 = arith.mulf %157, %158 : vector<32x9xbf16>
    %160 = arith.addf %157, %159 : vector<32x9xbf16>
    %cst_52 = arith.constant dense<0.000000e+00> : vector<32x9xf32>
    %161 = tpu.matmul %6, %160, %cst_52 {dimension_numbers = #tpu.dot_dimension_numbers<[1], [0], [0], [1], [0, 0, 1, 1], [], []>} : vector<32x32xbf16>, vector<32x9xbf16>, vector<32x9xf32> -> vector<32x9xf32>
    %162 = vector.broadcast %7 : vector<32x1xf32> to vector<32x9xf32>
    %163 = arith.addf %161, %162 : vector<32x9xf32>
    %164 = arith.truncf %163 : vector<32x9xf32> to vector<32x9xbf16>
    %cst_53 = arith.constant 5.000000e-01 : bf16
    %165 = vector.broadcast %cst_53 : bf16 to vector<32x9xbf16>
    %166 = arith.mulf %165, %164 : vector<32x9xbf16>
    %167 = math.tanh %166 : vector<32x9xbf16>
    %168 = arith.mulf %166, %167 : vector<32x9xbf16>
    %169 = arith.addf %166, %168 : vector<32x9xbf16>
    %cst_54 = arith.constant dense<0.000000e+00> : vector<4x9xf32>
    %170 = tpu.matmul %8, %169, %cst_54 {dimension_numbers = #tpu.dot_dimension_numbers<[1], [0], [0], [1], [0, 0, 1, 1], [], []>} : vector<4x32xbf16>, vector<32x9xbf16>, vector<4x9xf32> -> vector<4x9xf32>
    %171 = vector.broadcast %9 : vector<4x1xf32> to vector<4x9xf32>
    %172 = arith.addf %170, %171 : vector<4x9xf32>
    %c1_i32_55 = arith.constant 1 : i32
    %173 = arith.cmpi sge, %127, %c1_i32_55 : i32
    %174 = vector.broadcast %173 : i1 to vector<1x9xi1>
    %175 = arith.andi %174, %13 : vector<1x9xi1>
    %cst_56 = arith.constant 0.000000e+00 : f32
    %176 = vector.shape_cast %175 : vector<1x9xi1> to vector<1x9xi1>
    %177 = vector.broadcast %176 : vector<1x9xi1> to vector<4x9xi1>
    %178 = vector.broadcast %cst_56 : f32 to vector<4x9xf32>
    %179 = arith.select %177, %172, %178 : vector<4x9xi1>, vector<4x9xf32>
    %c0_57 = arith.constant 0 : index
    %c0_58 = arith.constant 0 : index
    %c2 = arith.constant 2 : index
    %c0_59 = arith.constant 0 : index
    %180 = vector.load %arg10[%c0_57, %c0_58, %c2, %c0_59] : memref<1x4x16x9xf32, #tpu.memory_space<vmem>>, vector<1x4x1x9xf32>
    %181 = vector.shape_cast %180 : vector<1x4x1x9xf32> to vector<4x9xf32>
    %182 = vector.shape_cast %179 : vector<4x9xf32> to vector<1x4x1x9xf32>
    tpu.vector_store %arg10[%c0_57, %c0_58, %c2, %c0_59], %182 {strides = array<i32>} : memref<1x4x16x9xf32, #tpu.memory_space<vmem>>, vector<1x4x1x9xf32>,
    %c3_i32 = arith.constant 3 : i32
    %183 = arith.addi %14, %c3_i32 : i32
    %184 = vector.extract_strided_slice %1 {offsets = [3, 0], sizes = [1, 1], strides = [1, 1]} : vector<16x1xf32> to vector<1x1xf32>
    %185 = vector.broadcast %184 : vector<1x1xf32> to vector<1x9xf32>
    %186 = arith.subf %185, %3 : vector<1x9xf32>
    %187 = arith.sitofp %183 : i32 to f32
    %188 = vector.broadcast %187 : f32 to vector<1x9xf32>
    %189 = arith.subf %188, %11 : vector<1x9xf32>
    %cst_60 = arith.constant 0.001953125 : f32
    %190 = vector.broadcast %cst_60 : f32 to vector<1x9xf32>
    %191 = arith.mulf %189, %190 : vector<1x9xf32>
    %192 = math.floor %191 : vector<1x9xf32>
    %193 = arith.subf %191, %192 : vector<1x9xf32>
    %cst_61 = arith.constant 1.000000e+00 : f32
    %194 = vector.broadcast %cst_61 : f32 to vector<1x9xf32>
    %195 = arith.mulf %186, %194 : vector<1x9xf32>
    %196 = math.floor %195 : vector<1x9xf32>
    %197 = arith.subf %195, %196 : vector<1x9xf32>
    %cst_62 = arith.constant 0.0416666679 : f32
    %198 = vector.broadcast %cst_62 : f32 to vector<1x9xf32>
    %199 = arith.mulf %186, %198 : vector<1x9xf32>
    %200 = math.floor %199 : vector<1x9xf32>
    %201 = arith.subf %199, %200 : vector<1x9xf32>
    %cst_63 = arith.constant 0.00595238106 : f32
    %202 = vector.broadcast %cst_63 : f32 to vector<1x9xf32>
    %203 = arith.mulf %186, %202 : vector<1x9xf32>
    %204 = math.floor %203 : vector<1x9xf32>
    %205 = arith.subf %203, %204 : vector<1x9xf32>
    %206 = tpu.concatenate %193, %197, %201, %205 in 0 : vector<1x9xf32>, vector<1x9xf32>, vector<1x9xf32>, vector<1x9xf32> -> vector<4x9xf32>
    %207 = arith.truncf %206 : vector<4x9xf32> to vector<4x9xbf16>
    %cst_64 = arith.constant dense<0.000000e+00> : vector<32x9xf32>
    %208 = tpu.matmul %4, %207, %cst_64 {dimension_numbers = #tpu.dot_dimension_numbers<[1], [0], [0], [1], [0, 0, 1, 1], [], []>} : vector<32x4xbf16>, vector<4x9xbf16>, vector<32x9xf32> -> vector<32x9xf32>
    %209 = vector.broadcast %5 : vector<32x1xf32> to vector<32x9xf32>
    %210 = arith.addf %208, %209 : vector<32x9xf32>
    %211 = arith.truncf %210 : vector<32x9xf32> to vector<32x9xbf16>
    %cst_65 = arith.constant 5.000000e-01 : bf16
    %212 = vector.broadcast %cst_65 : bf16 to vector<32x9xbf16>
    %213 = arith.mulf %212, %211 : vector<32x9xbf16>
    %214 = math.tanh %213 : vector<32x9xbf16>
    %215 = arith.mulf %213, %214 : vector<32x9xbf16>
    %216 = arith.addf %213, %215 : vector<32x9xbf16>
    %cst_66 = arith.constant dense<0.000000e+00> : vector<32x9xf32>
    %217 = tpu.matmul %6, %216, %cst_66 {dimension_numbers = #tpu.dot_dimension_numbers<[1], [0], [0], [1], [0, 0, 1, 1], [], []>} : vector<32x32xbf16>, vector<32x9xbf16>, vector<32x9xf32> -> vector<32x9xf32>
    %218 = vector.broadcast %7 : vector<32x1xf32> to vector<32x9xf32>
    %219 = arith.addf %217, %218 : vector<32x9xf32>
    %220 = arith.truncf %219 : vector<32x9xf32> to vector<32x9xbf16>
    %cst_67 = arith.constant 5.000000e-01 : bf16
    %221 = vector.broadcast %cst_67 : bf16 to vector<32x9xbf16>
    %222 = arith.mulf %221, %220 : vector<32x9xbf16>
    %223 = math.tanh %222 : vector<32x9xbf16>
    %224 = arith.mulf %222, %223 : vector<32x9xbf16>
    %225 = arith.addf %222, %224 : vector<32x9xbf16>
    %cst_68 = arith.constant dense<0.000000e+00> : vector<4x9xf32>
    %226 = tpu.matmul %8, %225, %cst_68 {dimension_numbers = #tpu.dot_dimension_numbers<[1], [0], [0], [1], [0, 0, 1, 1], [], []>} : vector<4x32xbf16>, vector<32x9xbf16>, vector<4x9xf32> -> vector<4x9xf32>
    %227 = vector.broadcast %9 : vector<4x1xf32> to vector<4x9xf32>
    %228 = arith.addf %226, %227 : vector<4x9xf32>
    %c1_i32_69 = arith.constant 1 : i32
    %229 = arith.cmpi sge, %183, %c1_i32_69 : i32
    %230 = vector.broadcast %229 : i1 to vector<1x9xi1>
    %231 = arith.andi %230, %13 : vector<1x9xi1>
    %cst_70 = arith.constant 0.000000e+00 : f32
    %232 = vector.shape_cast %231 : vector<1x9xi1> to vector<1x9xi1>
    %233 = vector.broadcast %232 : vector<1x9xi1> to vector<4x9xi1>
    %234 = vector.broadcast %cst_70 : f32 to vector<4x9xf32>
    %235 = arith.select %233, %228, %234 : vector<4x9xi1>, vector<4x9xf32>
    %c0_71 = arith.constant 0 : index
    %c0_72 = arith.constant 0 : index
    %c3 = arith.constant 3 : index
    %c0_73 = arith.constant 0 : index
    %236 = vector.load %arg10[%c0_71, %c0_72, %c3, %c0_73] : memref<1x4x16x9xf32, #tpu.memory_space<vmem>>, vector<1x4x1x9xf32>
    %237 = vector.shape_cast %236 : vector<1x4x1x9xf32> to vector<4x9xf32>
    %238 = vector.shape_cast %235 : vector<4x9xf32> to vector<1x4x1x9xf32>
    tpu.vector_store %arg10[%c0_71, %c0_72, %c3, %c0_73], %238 {strides = array<i32>} : memref<1x4x16x9xf32, #tpu.memory_space<vmem>>, vector<1x4x1x9xf32>,
    %c4_i32 = arith.constant 4 : i32
    %239 = arith.addi %14, %c4_i32 : i32
    %240 = vector.extract_strided_slice %1 {offsets = [4, 0], sizes = [1, 1], strides = [1, 1]} : vector<16x1xf32> to vector<1x1xf32>
    %241 = vector.broadcast %240 : vector<1x1xf32> to vector<1x9xf32>
    %242 = arith.subf %241, %3 : vector<1x9xf32>
    %243 = arith.sitofp %239 : i32 to f32
    %244 = vector.broadcast %243 : f32 to vector<1x9xf32>
    %245 = arith.subf %244, %11 : vector<1x9xf32>
    %cst_74 = arith.constant 0.001953125 : f32
    %246 = vector.broadcast %cst_74 : f32 to vector<1x9xf32>
    %247 = arith.mulf %245, %246 : vector<1x9xf32>
    %248 = math.floor %247 : vector<1x9xf32>
    %249 = arith.subf %247, %248 : vector<1x9xf32>
    %cst_75 = arith.constant 1.000000e+00 : f32
    %250 = vector.broadcast %cst_75 : f32 to vector<1x9xf32>
    %251 = arith.mulf %242, %250 : vector<1x9xf32>
    %252 = math.floor %251 : vector<1x9xf32>
    %253 = arith.subf %251, %252 : vector<1x9xf32>
    %cst_76 = arith.constant 0.0416666679 : f32
    %254 = vector.broadcast %cst_76 : f32 to vector<1x9xf32>
    %255 = arith.mulf %242, %254 : vector<1x9xf32>
    %256 = math.floor %255 : vector<1x9xf32>
    %257 = arith.subf %255, %256 : vector<1x9xf32>
    %cst_77 = arith.constant 0.00595238106 : f32
    %258 = vector.broadcast %cst_77 : f32 to vector<1x9xf32>
    %259 = arith.mulf %242, %258 : vector<1x9xf32>
    %260 = math.floor %259 : vector<1x9xf32>
    %261 = arith.subf %259, %260 : vector<1x9xf32>
    %262 = tpu.concatenate %249, %253, %257, %261 in 0 : vector<1x9xf32>, vector<1x9xf32>, vector<1x9xf32>, vector<1x9xf32> -> vector<4x9xf32>
    %263 = arith.truncf %262 : vector<4x9xf32> to vector<4x9xbf16>
    %cst_78 = arith.constant dense<0.000000e+00> : vector<32x9xf32>
    %264 = tpu.matmul %4, %263, %cst_78 {dimension_numbers = #tpu.dot_dimension_numbers<[1], [0], [0], [1], [0, 0, 1, 1], [], []>} : vector<32x4xbf16>, vector<4x9xbf16>, vector<32x9xf32> -> vector<32x9xf32>
    %265 = vector.broadcast %5 : vector<32x1xf32> to vector<32x9xf32>
    %266 = arith.addf %264, %265 : vector<32x9xf32>
    %267 = arith.truncf %266 : vector<32x9xf32> to vector<32x9xbf16>
    %cst_79 = arith.constant 5.000000e-01 : bf16
    %268 = vector.broadcast %cst_79 : bf16 to vector<32x9xbf16>
    %269 = arith.mulf %268, %267 : vector<32x9xbf16>
    %270 = math.tanh %269 : vector<32x9xbf16>
    %271 = arith.mulf %269, %270 : vector<32x9xbf16>
    %272 = arith.addf %269, %271 : vector<32x9xbf16>
    %cst_80 = arith.constant dense<0.000000e+00> : vector<32x9xf32>
    %273 = tpu.matmul %6, %272, %cst_80 {dimension_numbers = #tpu.dot_dimension_numbers<[1], [0], [0], [1], [0, 0, 1, 1], [], []>} : vector<32x32xbf16>, vector<32x9xbf16>, vector<32x9xf32> -> vector<32x9xf32>
    %274 = vector.broadcast %7 : vector<32x1xf32> to vector<32x9xf32>
    %275 = arith.addf %273, %274 : vector<32x9xf32>
    %276 = arith.truncf %275 : vector<32x9xf32> to vector<32x9xbf16>
    %cst_81 = arith.constant 5.000000e-01 : bf16
    %277 = vector.broadcast %cst_81 : bf16 to vector<32x9xbf16>
    %278 = arith.mulf %277, %276 : vector<32x9xbf16>
    %279 = math.tanh %278 : vector<32x9xbf16>
    %280 = arith.mulf %278, %279 : vector<32x9xbf16>
    %281 = arith.addf %278, %280 : vector<32x9xbf16>
    %cst_82 = arith.constant dense<0.000000e+00> : vector<4x9xf32>
    %282 = tpu.matmul %8, %281, %cst_82 {dimension_numbers = #tpu.dot_dimension_numbers<[1], [0], [0], [1], [0, 0, 1, 1], [], []>} : vector<4x32xbf16>, vector<32x9xbf16>, vector<4x9xf32> -> vector<4x9xf32>
    %283 = vector.broadcast %9 : vector<4x1xf32> to vector<4x9xf32>
    %284 = arith.addf %282, %283 : vector<4x9xf32>
    %c1_i32_83 = arith.constant 1 : i32
    %285 = arith.cmpi sge, %239, %c1_i32_83 : i32
    %286 = vector.broadcast %285 : i1 to vector<1x9xi1>
    %287 = arith.andi %286, %13 : vector<1x9xi1>
    %cst_84 = arith.constant 0.000000e+00 : f32
    %288 = vector.shape_cast %287 : vector<1x9xi1> to vector<1x9xi1>
    %289 = vector.broadcast %288 : vector<1x9xi1> to vector<4x9xi1>
    %290 = vector.broadcast %cst_84 : f32 to vector<4x9xf32>
    %291 = arith.select %289, %284, %290 : vector<4x9xi1>, vector<4x9xf32>
    %c0_85 = arith.constant 0 : index
    %c0_86 = arith.constant 0 : index
    %c4 = arith.constant 4 : index
    %c0_87 = arith.constant 0 : index
    %292 = vector.load %arg10[%c0_85, %c0_86, %c4, %c0_87] : memref<1x4x16x9xf32, #tpu.memory_space<vmem>>, vector<1x4x1x9xf32>
    %293 = vector.shape_cast %292 : vector<1x4x1x9xf32> to vector<4x9xf32>
    %294 = vector.shape_cast %291 : vector<4x9xf32> to vector<1x4x1x9xf32>
    tpu.vector_store %arg10[%c0_85, %c0_86, %c4, %c0_87], %294 {strides = array<i32>} : memref<1x4x16x9xf32, #tpu.memory_space<vmem>>, vector<1x4x1x9xf32>,
    %c5_i32 = arith.constant 5 : i32
    %295 = arith.addi %14, %c5_i32 : i32
    %296 = vector.extract_strided_slice %1 {offsets = [5, 0], sizes = [1, 1], strides = [1, 1]} : vector<16x1xf32> to vector<1x1xf32>
    %297 = vector.broadcast %296 : vector<1x1xf32> to vector<1x9xf32>
    %298 = arith.subf %297, %3 : vector<1x9xf32>
    %299 = arith.sitofp %295 : i32 to f32
    %300 = vector.broadcast %299 : f32 to vector<1x9xf32>
    %301 = arith.subf %300, %11 : vector<1x9xf32>
    %cst_88 = arith.constant 0.001953125 : f32
    %302 = vector.broadcast %cst_88 : f32 to vector<1x9xf32>
    %303 = arith.mulf %301, %302 : vector<1x9xf32>
    %304 = math.floor %303 : vector<1x9xf32>
    %305 = arith.subf %303, %304 : vector<1x9xf32>
    %cst_89 = arith.constant 1.000000e+00 : f32
    %306 = vector.broadcast %cst_89 : f32 to vector<1x9xf32>
    %307 = arith.mulf %298, %306 : vector<1x9xf32>
    %308 = math.floor %307 : vector<1x9xf32>
    %309 = arith.subf %307, %308 : vector<1x9xf32>
    %cst_90 = arith.constant 0.0416666679 : f32
    %310 = vector.broadcast %cst_90 : f32 to vector<1x9xf32>
    %311 = arith.mulf %298, %310 : vector<1x9xf32>
    %312 = math.floor %311 : vector<1x9xf32>
    %313 = arith.subf %311, %312 : vector<1x9xf32>
    %cst_91 = arith.constant 0.00595238106 : f32
    %314 = vector.broadcast %cst_91 : f32 to vector<1x9xf32>
    %315 = arith.mulf %298, %314 : vector<1x9xf32>
    %316 = math.floor %315 : vector<1x9xf32>
    %317 = arith.subf %315, %316 : vector<1x9xf32>
    %318 = tpu.concatenate %305, %309, %313, %317 in 0 : vector<1x9xf32>, vector<1x9xf32>, vector<1x9xf32>, vector<1x9xf32> -> vector<4x9xf32>
    %319 = arith.truncf %318 : vector<4x9xf32> to vector<4x9xbf16>
    %cst_92 = arith.constant dense<0.000000e+00> : vector<32x9xf32>
    %320 = tpu.matmul %4, %319, %cst_92 {dimension_numbers = #tpu.dot_dimension_numbers<[1], [0], [0], [1], [0, 0, 1, 1], [], []>} : vector<32x4xbf16>, vector<4x9xbf16>, vector<32x9xf32> -> vector<32x9xf32>
    %321 = vector.broadcast %5 : vector<32x1xf32> to vector<32x9xf32>
    %322 = arith.addf %320, %321 : vector<32x9xf32>
    %323 = arith.truncf %322 : vector<32x9xf32> to vector<32x9xbf16>
    %cst_93 = arith.constant 5.000000e-01 : bf16
    %324 = vector.broadcast %cst_93 : bf16 to vector<32x9xbf16>
    %325 = arith.mulf %324, %323 : vector<32x9xbf16>
    %326 = math.tanh %325 : vector<32x9xbf16>
    %327 = arith.mulf %325, %326 : vector<32x9xbf16>
    %328 = arith.addf %325, %327 : vector<32x9xbf16>
    %cst_94 = arith.constant dense<0.000000e+00> : vector<32x9xf32>
    %329 = tpu.matmul %6, %328, %cst_94 {dimension_numbers = #tpu.dot_dimension_numbers<[1], [0], [0], [1], [0, 0, 1, 1], [], []>} : vector<32x32xbf16>, vector<32x9xbf16>, vector<32x9xf32> -> vector<32x9xf32>
    %330 = vector.broadcast %7 : vector<32x1xf32> to vector<32x9xf32>
    %331 = arith.addf %329, %330 : vector<32x9xf32>
    %332 = arith.truncf %331 : vector<32x9xf32> to vector<32x9xbf16>
    %cst_95 = arith.constant 5.000000e-01 : bf16
    %333 = vector.broadcast %cst_95 : bf16 to vector<32x9xbf16>
    %334 = arith.mulf %333, %332 : vector<32x9xbf16>
    %335 = math.tanh %334 : vector<32x9xbf16>
    %336 = arith.mulf %334, %335 : vector<32x9xbf16>
    %337 = arith.addf %334, %336 : vector<32x9xbf16>
    %cst_96 = arith.constant dense<0.000000e+00> : vector<4x9xf32>
    %338 = tpu.matmul %8, %337, %cst_96 {dimension_numbers = #tpu.dot_dimension_numbers<[1], [0], [0], [1], [0, 0, 1, 1], [], []>} : vector<4x32xbf16>, vector<32x9xbf16>, vector<4x9xf32> -> vector<4x9xf32>
    %339 = vector.broadcast %9 : vector<4x1xf32> to vector<4x9xf32>
    %340 = arith.addf %338, %339 : vector<4x9xf32>
    %c1_i32_97 = arith.constant 1 : i32
    %341 = arith.cmpi sge, %295, %c1_i32_97 : i32
    %342 = vector.broadcast %341 : i1 to vector<1x9xi1>
    %343 = arith.andi %342, %13 : vector<1x9xi1>
    %cst_98 = arith.constant 0.000000e+00 : f32
    %344 = vector.shape_cast %343 : vector<1x9xi1> to vector<1x9xi1>
    %345 = vector.broadcast %344 : vector<1x9xi1> to vector<4x9xi1>
    %346 = vector.broadcast %cst_98 : f32 to vector<4x9xf32>
    %347 = arith.select %345, %340, %346 : vector<4x9xi1>, vector<4x9xf32>
    %c0_99 = arith.constant 0 : index
    %c0_100 = arith.constant 0 : index
    %c5 = arith.constant 5 : index
    %c0_101 = arith.constant 0 : index
    %348 = vector.load %arg10[%c0_99, %c0_100, %c5, %c0_101] : memref<1x4x16x9xf32, #tpu.memory_space<vmem>>, vector<1x4x1x9xf32>
    %349 = vector.shape_cast %348 : vector<1x4x1x9xf32> to vector<4x9xf32>
    %350 = vector.shape_cast %347 : vector<4x9xf32> to vector<1x4x1x9xf32>
    tpu.vector_store %arg10[%c0_99, %c0_100, %c5, %c0_101], %350 {strides = array<i32>} : memref<1x4x16x9xf32, #tpu.memory_space<vmem>>, vector<1x4x1x9xf32>,
    %c6_i32 = arith.constant 6 : i32
    %351 = arith.addi %14, %c6_i32 : i32
    %352 = vector.extract_strided_slice %1 {offsets = [6, 0], sizes = [1, 1], strides = [1, 1]} : vector<16x1xf32> to vector<1x1xf32>
    %353 = vector.broadcast %352 : vector<1x1xf32> to vector<1x9xf32>
    %354 = arith.subf %353, %3 : vector<1x9xf32>
    %355 = arith.sitofp %351 : i32 to f32
    %356 = vector.broadcast %355 : f32 to vector<1x9xf32>
    %357 = arith.subf %356, %11 : vector<1x9xf32>
    %cst_102 = arith.constant 0.001953125 : f32
    %358 = vector.broadcast %cst_102 : f32 to vector<1x9xf32>
    %359 = arith.mulf %357, %358 : vector<1x9xf32>
    %360 = math.floor %359 : vector<1x9xf32>
    %361 = arith.subf %359, %360 : vector<1x9xf32>
    %cst_103 = arith.constant 1.000000e+00 : f32
    %362 = vector.broadcast %cst_103 : f32 to vector<1x9xf32>
    %363 = arith.mulf %354, %362 : vector<1x9xf32>
    %364 = math.floor %363 : vector<1x9xf32>
    %365 = arith.subf %363, %364 : vector<1x9xf32>
    %cst_104 = arith.constant 0.0416666679 : f32
    %366 = vector.broadcast %cst_104 : f32 to vector<1x9xf32>
    %367 = arith.mulf %354, %366 : vector<1x9xf32>
    %368 = math.floor %367 : vector<1x9xf32>
    %369 = arith.subf %367, %368 : vector<1x9xf32>
    %cst_105 = arith.constant 0.00595238106 : f32
    %370 = vector.broadcast %cst_105 : f32 to vector<1x9xf32>
    %371 = arith.mulf %354, %370 : vector<1x9xf32>
    %372 = math.floor %371 : vector<1x9xf32>
    %373 = arith.subf %371, %372 : vector<1x9xf32>
    %374 = tpu.concatenate %361, %365, %369, %373 in 0 : vector<1x9xf32>, vector<1x9xf32>, vector<1x9xf32>, vector<1x9xf32> -> vector<4x9xf32>
    %375 = arith.truncf %374 : vector<4x9xf32> to vector<4x9xbf16>
    %cst_106 = arith.constant dense<0.000000e+00> : vector<32x9xf32>
    %376 = tpu.matmul %4, %375, %cst_106 {dimension_numbers = #tpu.dot_dimension_numbers<[1], [0], [0], [1], [0, 0, 1, 1], [], []>} : vector<32x4xbf16>, vector<4x9xbf16>, vector<32x9xf32> -> vector<32x9xf32>
    %377 = vector.broadcast %5 : vector<32x1xf32> to vector<32x9xf32>
    %378 = arith.addf %376, %377 : vector<32x9xf32>
    %379 = arith.truncf %378 : vector<32x9xf32> to vector<32x9xbf16>
    %cst_107 = arith.constant 5.000000e-01 : bf16
    %380 = vector.broadcast %cst_107 : bf16 to vector<32x9xbf16>
    %381 = arith.mulf %380, %379 : vector<32x9xbf16>
    %382 = math.tanh %381 : vector<32x9xbf16>
    %383 = arith.mulf %381, %382 : vector<32x9xbf16>
    %384 = arith.addf %381, %383 : vector<32x9xbf16>
    %cst_108 = arith.constant dense<0.000000e+00> : vector<32x9xf32>
    %385 = tpu.matmul %6, %384, %cst_108 {dimension_numbers = #tpu.dot_dimension_numbers<[1], [0], [0], [1], [0, 0, 1, 1], [], []>} : vector<32x32xbf16>, vector<32x9xbf16>, vector<32x9xf32> -> vector<32x9xf32>
    %386 = vector.broadcast %7 : vector<32x1xf32> to vector<32x9xf32>
    %387 = arith.addf %385, %386 : vector<32x9xf32>
    %388 = arith.truncf %387 : vector<32x9xf32> to vector<32x9xbf16>
    %cst_109 = arith.constant 5.000000e-01 : bf16
    %389 = vector.broadcast %cst_109 : bf16 to vector<32x9xbf16>
    %390 = arith.mulf %389, %388 : vector<32x9xbf16>
    %391 = math.tanh %390 : vector<32x9xbf16>
    %392 = arith.mulf %390, %391 : vector<32x9xbf16>
    %393 = arith.addf %390, %392 : vector<32x9xbf16>
    %cst_110 = arith.constant dense<0.000000e+00> : vector<4x9xf32>
    %394 = tpu.matmul %8, %393, %cst_110 {dimension_numbers = #tpu.dot_dimension_numbers<[1], [0], [0], [1], [0, 0, 1, 1], [], []>} : vector<4x32xbf16>, vector<32x9xbf16>, vector<4x9xf32> -> vector<4x9xf32>
    %395 = vector.broadcast %9 : vector<4x1xf32> to vector<4x9xf32>
    %396 = arith.addf %394, %395 : vector<4x9xf32>
    %c1_i32_111 = arith.constant 1 : i32
    %397 = arith.cmpi sge, %351, %c1_i32_111 : i32
    %398 = vector.broadcast %397 : i1 to vector<1x9xi1>
    %399 = arith.andi %398, %13 : vector<1x9xi1>
    %cst_112 = arith.constant 0.000000e+00 : f32
    %400 = vector.shape_cast %399 : vector<1x9xi1> to vector<1x9xi1>
    %401 = vector.broadcast %400 : vector<1x9xi1> to vector<4x9xi1>
    %402 = vector.broadcast %cst_112 : f32 to vector<4x9xf32>
    %403 = arith.select %401, %396, %402 : vector<4x9xi1>, vector<4x9xf32>
    %c0_113 = arith.constant 0 : index
    %c0_114 = arith.constant 0 : index
    %c6 = arith.constant 6 : index
    %c0_115 = arith.constant 0 : index
    %404 = vector.load %arg10[%c0_113, %c0_114, %c6, %c0_115] : memref<1x4x16x9xf32, #tpu.memory_space<vmem>>, vector<1x4x1x9xf32>
    %405 = vector.shape_cast %404 : vector<1x4x1x9xf32> to vector<4x9xf32>
    %406 = vector.shape_cast %403 : vector<4x9xf32> to vector<1x4x1x9xf32>
    tpu.vector_store %arg10[%c0_113, %c0_114, %c6, %c0_115], %406 {strides = array<i32>} : memref<1x4x16x9xf32, #tpu.memory_space<vmem>>, vector<1x4x1x9xf32>,
    %c7_i32 = arith.constant 7 : i32
    %407 = arith.addi %14, %c7_i32 : i32
    %408 = vector.extract_strided_slice %1 {offsets = [7, 0], sizes = [1, 1], strides = [1, 1]} : vector<16x1xf32> to vector<1x1xf32>
    %409 = vector.broadcast %408 : vector<1x1xf32> to vector<1x9xf32>
    %410 = arith.subf %409, %3 : vector<1x9xf32>
    %411 = arith.sitofp %407 : i32 to f32
    %412 = vector.broadcast %411 : f32 to vector<1x9xf32>
    %413 = arith.subf %412, %11 : vector<1x9xf32>
    %cst_116 = arith.constant 0.001953125 : f32
    %414 = vector.broadcast %cst_116 : f32 to vector<1x9xf32>
    %415 = arith.mulf %413, %414 : vector<1x9xf32>
    %416 = math.floor %415 : vector<1x9xf32>
    %417 = arith.subf %415, %416 : vector<1x9xf32>
    %cst_117 = arith.constant 1.000000e+00 : f32
    %418 = vector.broadcast %cst_117 : f32 to vector<1x9xf32>
    %419 = arith.mulf %410, %418 : vector<1x9xf32>
    %420 = math.floor %419 : vector<1x9xf32>
    %421 = arith.subf %419, %420 : vector<1x9xf32>
    %cst_118 = arith.constant 0.0416666679 : f32
    %422 = vector.broadcast %cst_118 : f32 to vector<1x9xf32>
    %423 = arith.mulf %410, %422 : vector<1x9xf32>
    %424 = math.floor %423 : vector<1x9xf32>
    %425 = arith.subf %423, %424 : vector<1x9xf32>
    %cst_119 = arith.constant 0.00595238106 : f32
    %426 = vector.broadcast %cst_119 : f32 to vector<1x9xf32>
    %427 = arith.mulf %410, %426 : vector<1x9xf32>
    %428 = math.floor %427 : vector<1x9xf32>
    %429 = arith.subf %427, %428 : vector<1x9xf32>
    %430 = tpu.concatenate %417, %421, %425, %429 in 0 : vector<1x9xf32>, vector<1x9xf32>, vector<1x9xf32>, vector<1x9xf32> -> vector<4x9xf32>
    %431 = arith.truncf %430 : vector<4x9xf32> to vector<4x9xbf16>
    %cst_120 = arith.constant dense<0.000000e+00> : vector<32x9xf32>
    %432 = tpu.matmul %4, %431, %cst_120 {dimension_numbers = #tpu.dot_dimension_numbers<[1], [0], [0], [1], [0, 0, 1, 1], [], []>} : vector<32x4xbf16>, vector<4x9xbf16>, vector<32x9xf32> -> vector<32x9xf32>
    %433 = vector.broadcast %5 : vector<32x1xf32> to vector<32x9xf32>
    %434 = arith.addf %432, %433 : vector<32x9xf32>
    %435 = arith.truncf %434 : vector<32x9xf32> to vector<32x9xbf16>
    %cst_121 = arith.constant 5.000000e-01 : bf16
    %436 = vector.broadcast %cst_121 : bf16 to vector<32x9xbf16>
    %437 = arith.mulf %436, %435 : vector<32x9xbf16>
    %438 = math.tanh %437 : vector<32x9xbf16>
    %439 = arith.mulf %437, %438 : vector<32x9xbf16>
    %440 = arith.addf %437, %439 : vector<32x9xbf16>
    %cst_122 = arith.constant dense<0.000000e+00> : vector<32x9xf32>
    %441 = tpu.matmul %6, %440, %cst_122 {dimension_numbers = #tpu.dot_dimension_numbers<[1], [0], [0], [1], [0, 0, 1, 1], [], []>} : vector<32x32xbf16>, vector<32x9xbf16>, vector<32x9xf32> -> vector<32x9xf32>
    %442 = vector.broadcast %7 : vector<32x1xf32> to vector<32x9xf32>
    %443 = arith.addf %441, %442 : vector<32x9xf32>
    %444 = arith.truncf %443 : vector<32x9xf32> to vector<32x9xbf16>
    %cst_123 = arith.constant 5.000000e-01 : bf16
    %445 = vector.broadcast %cst_123 : bf16 to vector<32x9xbf16>
    %446 = arith.mulf %445, %444 : vector<32x9xbf16>
    %447 = math.tanh %446 : vector<32x9xbf16>
    %448 = arith.mulf %446, %447 : vector<32x9xbf16>
    %449 = arith.addf %446, %448 : vector<32x9xbf16>
    %cst_124 = arith.constant dense<0.000000e+00> : vector<4x9xf32>
    %450 = tpu.matmul %8, %449, %cst_124 {dimension_numbers = #tpu.dot_dimension_numbers<[1], [0], [0], [1], [0, 0, 1, 1], [], []>} : vector<4x32xbf16>, vector<32x9xbf16>, vector<4x9xf32> -> vector<4x9xf32>
    %451 = vector.broadcast %9 : vector<4x1xf32> to vector<4x9xf32>
    %452 = arith.addf %450, %451 : vector<4x9xf32>
    %c1_i32_125 = arith.constant 1 : i32
    %453 = arith.cmpi sge, %407, %c1_i32_125 : i32
    %454 = vector.broadcast %453 : i1 to vector<1x9xi1>
    %455 = arith.andi %454, %13 : vector<1x9xi1>
    %cst_126 = arith.constant 0.000000e+00 : f32
    %456 = vector.shape_cast %455 : vector<1x9xi1> to vector<1x9xi1>
    %457 = vector.broadcast %456 : vector<1x9xi1> to vector<4x9xi1>
    %458 = vector.broadcast %cst_126 : f32 to vector<4x9xf32>
    %459 = arith.select %457, %452, %458 : vector<4x9xi1>, vector<4x9xf32>
    %c0_127 = arith.constant 0 : index
    %c0_128 = arith.constant 0 : index
    %c7 = arith.constant 7 : index
    %c0_129 = arith.constant 0 : index
    %460 = vector.load %arg10[%c0_127, %c0_128, %c7, %c0_129] : memref<1x4x16x9xf32, #tpu.memory_space<vmem>>, vector<1x4x1x9xf32>
    %461 = vector.shape_cast %460 : vector<1x4x1x9xf32> to vector<4x9xf32>
    %462 = vector.shape_cast %459 : vector<4x9xf32> to vector<1x4x1x9xf32>
    tpu.vector_store %arg10[%c0_127, %c0_128, %c7, %c0_129], %462 {strides = array<i32>} : memref<1x4x16x9xf32, #tpu.memory_space<vmem>>, vector<1x4x1x9xf32>,
    %c8_i32 = arith.constant 8 : i32
    %463 = arith.addi %14, %c8_i32 : i32
    %464 = vector.extract_strided_slice %1 {offsets = [8, 0], sizes = [1, 1], strides = [1, 1]} : vector<16x1xf32> to vector<1x1xf32>
    %465 = vector.broadcast %464 : vector<1x1xf32> to vector<1x9xf32>
    %466 = arith.subf %465, %3 : vector<1x9xf32>
    %467 = arith.sitofp %463 : i32 to f32
    %468 = vector.broadcast %467 : f32 to vector<1x9xf32>
    %469 = arith.subf %468, %11 : vector<1x9xf32>
    %cst_130 = arith.constant 0.001953125 : f32
    %470 = vector.broadcast %cst_130 : f32 to vector<1x9xf32>
    %471 = arith.mulf %469, %470 : vector<1x9xf32>
    %472 = math.floor %471 : vector<1x9xf32>
    %473 = arith.subf %471, %472 : vector<1x9xf32>
    %cst_131 = arith.constant 1.000000e+00 : f32
    %474 = vector.broadcast %cst_131 : f32 to vector<1x9xf32>
    %475 = arith.mulf %466, %474 : vector<1x9xf32>
    %476 = math.floor %475 : vector<1x9xf32>
    %477 = arith.subf %475, %476 : vector<1x9xf32>
    %cst_132 = arith.constant 0.0416666679 : f32
    %478 = vector.broadcast %cst_132 : f32 to vector<1x9xf32>
    %479 = arith.mulf %466, %478 : vector<1x9xf32>
    %480 = math.floor %479 : vector<1x9xf32>
    %481 = arith.subf %479, %480 : vector<1x9xf32>
    %cst_133 = arith.constant 0.00595238106 : f32
    %482 = vector.broadcast %cst_133 : f32 to vector<1x9xf32>
    %483 = arith.mulf %466, %482 : vector<1x9xf32>
    %484 = math.floor %483 : vector<1x9xf32>
    %485 = arith.subf %483, %484 : vector<1x9xf32>
    %486 = tpu.concatenate %473, %477, %481, %485 in 0 : vector<1x9xf32>, vector<1x9xf32>, vector<1x9xf32>, vector<1x9xf32> -> vector<4x9xf32>
    %487 = arith.truncf %486 : vector<4x9xf32> to vector<4x9xbf16>
    %cst_134 = arith.constant dense<0.000000e+00> : vector<32x9xf32>
    %488 = tpu.matmul %4, %487, %cst_134 {dimension_numbers = #tpu.dot_dimension_numbers<[1], [0], [0], [1], [0, 0, 1, 1], [], []>} : vector<32x4xbf16>, vector<4x9xbf16>, vector<32x9xf32> -> vector<32x9xf32>
    %489 = vector.broadcast %5 : vector<32x1xf32> to vector<32x9xf32>
    %490 = arith.addf %488, %489 : vector<32x9xf32>
    %491 = arith.truncf %490 : vector<32x9xf32> to vector<32x9xbf16>
    %cst_135 = arith.constant 5.000000e-01 : bf16
    %492 = vector.broadcast %cst_135 : bf16 to vector<32x9xbf16>
    %493 = arith.mulf %492, %491 : vector<32x9xbf16>
    %494 = math.tanh %493 : vector<32x9xbf16>
    %495 = arith.mulf %493, %494 : vector<32x9xbf16>
    %496 = arith.addf %493, %495 : vector<32x9xbf16>
    %cst_136 = arith.constant dense<0.000000e+00> : vector<32x9xf32>
    %497 = tpu.matmul %6, %496, %cst_136 {dimension_numbers = #tpu.dot_dimension_numbers<[1], [0], [0], [1], [0, 0, 1, 1], [], []>} : vector<32x32xbf16>, vector<32x9xbf16>, vector<32x9xf32> -> vector<32x9xf32>
    %498 = vector.broadcast %7 : vector<32x1xf32> to vector<32x9xf32>
    %499 = arith.addf %497, %498 : vector<32x9xf32>
    %500 = arith.truncf %499 : vector<32x9xf32> to vector<32x9xbf16>
    %cst_137 = arith.constant 5.000000e-01 : bf16
    %501 = vector.broadcast %cst_137 : bf16 to vector<32x9xbf16>
    %502 = arith.mulf %501, %500 : vector<32x9xbf16>
    %503 = math.tanh %502 : vector<32x9xbf16>
    %504 = arith.mulf %502, %503 : vector<32x9xbf16>
    %505 = arith.addf %502, %504 : vector<32x9xbf16>
    %cst_138 = arith.constant dense<0.000000e+00> : vector<4x9xf32>
    %506 = tpu.matmul %8, %505, %cst_138 {dimension_numbers = #tpu.dot_dimension_numbers<[1], [0], [0], [1], [0, 0, 1, 1], [], []>} : vector<4x32xbf16>, vector<32x9xbf16>, vector<4x9xf32> -> vector<4x9xf32>
    %507 = vector.broadcast %9 : vector<4x1xf32> to vector<4x9xf32>
    %508 = arith.addf %506, %507 : vector<4x9xf32>
    %c1_i32_139 = arith.constant 1 : i32
    %509 = arith.cmpi sge, %463, %c1_i32_139 : i32
    %510 = vector.broadcast %509 : i1 to vector<1x9xi1>
    %511 = arith.andi %510, %13 : vector<1x9xi1>
    %cst_140 = arith.constant 0.000000e+00 : f32
    %512 = vector.shape_cast %511 : vector<1x9xi1> to vector<1x9xi1>
    %513 = vector.broadcast %512 : vector<1x9xi1> to vector<4x9xi1>
    %514 = vector.broadcast %cst_140 : f32 to vector<4x9xf32>
    %515 = arith.select %513, %508, %514 : vector<4x9xi1>, vector<4x9xf32>
    %c0_141 = arith.constant 0 : index
    %c0_142 = arith.constant 0 : index
    %c8 = arith.constant 8 : index
    %c0_143 = arith.constant 0 : index
    %516 = vector.load %arg10[%c0_141, %c0_142, %c8, %c0_143] : memref<1x4x16x9xf32, #tpu.memory_space<vmem>>, vector<1x4x1x9xf32>
    %517 = vector.shape_cast %516 : vector<1x4x1x9xf32> to vector<4x9xf32>
    %518 = vector.shape_cast %515 : vector<4x9xf32> to vector<1x4x1x9xf32>
    tpu.vector_store %arg10[%c0_141, %c0_142, %c8, %c0_143], %518 {strides = array<i32>} : memref<1x4x16x9xf32, #tpu.memory_space<vmem>>, vector<1x4x1x9xf32>,
    %c9_i32 = arith.constant 9 : i32
    %519 = arith.addi %14, %c9_i32 : i32
    %520 = vector.extract_strided_slice %1 {offsets = [9, 0], sizes = [1, 1], strides = [1, 1]} : vector<16x1xf32> to vector<1x1xf32>
    %521 = vector.broadcast %520 : vector<1x1xf32> to vector<1x9xf32>
    %522 = arith.subf %521, %3 : vector<1x9xf32>
    %523 = arith.sitofp %519 : i32 to f32
    %524 = vector.broadcast %523 : f32 to vector<1x9xf32>
    %525 = arith.subf %524, %11 : vector<1x9xf32>
    %cst_144 = arith.constant 0.001953125 : f32
    %526 = vector.broadcast %cst_144 : f32 to vector<1x9xf32>
    %527 = arith.mulf %525, %526 : vector<1x9xf32>
    %528 = math.floor %527 : vector<1x9xf32>
    %529 = arith.subf %527, %528 : vector<1x9xf32>
    %cst_145 = arith.constant 1.000000e+00 : f32
    %530 = vector.broadcast %cst_145 : f32 to vector<1x9xf32>
    %531 = arith.mulf %522, %530 : vector<1x9xf32>
    %532 = math.floor %531 : vector<1x9xf32>
    %533 = arith.subf %531, %532 : vector<1x9xf32>
    %cst_146 = arith.constant 0.0416666679 : f32
    %534 = vector.broadcast %cst_146 : f32 to vector<1x9xf32>
    %535 = arith.mulf %522, %534 : vector<1x9xf32>
    %536 = math.floor %535 : vector<1x9xf32>
    %537 = arith.subf %535, %536 : vector<1x9xf32>
    %cst_147 = arith.constant 0.00595238106 : f32
    %538 = vector.broadcast %cst_147 : f32 to vector<1x9xf32>
    %539 = arith.mulf %522, %538 : vector<1x9xf32>
    %540 = math.floor %539 : vector<1x9xf32>
    %541 = arith.subf %539, %540 : vector<1x9xf32>
    %542 = tpu.concatenate %529, %533, %537, %541 in 0 : vector<1x9xf32>, vector<1x9xf32>, vector<1x9xf32>, vector<1x9xf32> -> vector<4x9xf32>
    %543 = arith.truncf %542 : vector<4x9xf32> to vector<4x9xbf16>
    %cst_148 = arith.constant dense<0.000000e+00> : vector<32x9xf32>
    %544 = tpu.matmul %4, %543, %cst_148 {dimension_numbers = #tpu.dot_dimension_numbers<[1], [0], [0], [1], [0, 0, 1, 1], [], []>} : vector<32x4xbf16>, vector<4x9xbf16>, vector<32x9xf32> -> vector<32x9xf32>
    %545 = vector.broadcast %5 : vector<32x1xf32> to vector<32x9xf32>
    %546 = arith.addf %544, %545 : vector<32x9xf32>
    %547 = arith.truncf %546 : vector<32x9xf32> to vector<32x9xbf16>
    %cst_149 = arith.constant 5.000000e-01 : bf16
    %548 = vector.broadcast %cst_149 : bf16 to vector<32x9xbf16>
    %549 = arith.mulf %548, %547 : vector<32x9xbf16>
    %550 = math.tanh %549 : vector<32x9xbf16>
    %551 = arith.mulf %549, %550 : vector<32x9xbf16>
    %552 = arith.addf %549, %551 : vector<32x9xbf16>
    %cst_150 = arith.constant dense<0.000000e+00> : vector<32x9xf32>
    %553 = tpu.matmul %6, %552, %cst_150 {dimension_numbers = #tpu.dot_dimension_numbers<[1], [0], [0], [1], [0, 0, 1, 1], [], []>} : vector<32x32xbf16>, vector<32x9xbf16>, vector<32x9xf32> -> vector<32x9xf32>
    %554 = vector.broadcast %7 : vector<32x1xf32> to vector<32x9xf32>
    %555 = arith.addf %553, %554 : vector<32x9xf32>
    %556 = arith.truncf %555 : vector<32x9xf32> to vector<32x9xbf16>
    %cst_151 = arith.constant 5.000000e-01 : bf16
    %557 = vector.broadcast %cst_151 : bf16 to vector<32x9xbf16>
    %558 = arith.mulf %557, %556 : vector<32x9xbf16>
    %559 = math.tanh %558 : vector<32x9xbf16>
    %560 = arith.mulf %558, %559 : vector<32x9xbf16>
    %561 = arith.addf %558, %560 : vector<32x9xbf16>
    %cst_152 = arith.constant dense<0.000000e+00> : vector<4x9xf32>
    %562 = tpu.matmul %8, %561, %cst_152 {dimension_numbers = #tpu.dot_dimension_numbers<[1], [0], [0], [1], [0, 0, 1, 1], [], []>} : vector<4x32xbf16>, vector<32x9xbf16>, vector<4x9xf32> -> vector<4x9xf32>
    %563 = vector.broadcast %9 : vector<4x1xf32> to vector<4x9xf32>
    %564 = arith.addf %562, %563 : vector<4x9xf32>
    %c1_i32_153 = arith.constant 1 : i32
    %565 = arith.cmpi sge, %519, %c1_i32_153 : i32
    %566 = vector.broadcast %565 : i1 to vector<1x9xi1>
    %567 = arith.andi %566, %13 : vector<1x9xi1>
    %cst_154 = arith.constant 0.000000e+00 : f32
    %568 = vector.shape_cast %567 : vector<1x9xi1> to vector<1x9xi1>
    %569 = vector.broadcast %568 : vector<1x9xi1> to vector<4x9xi1>
    %570 = vector.broadcast %cst_154 : f32 to vector<4x9xf32>
    %571 = arith.select %569, %564, %570 : vector<4x9xi1>, vector<4x9xf32>
    %c0_155 = arith.constant 0 : index
    %c0_156 = arith.constant 0 : index
    %c9 = arith.constant 9 : index
    %c0_157 = arith.constant 0 : index
    %572 = vector.load %arg10[%c0_155, %c0_156, %c9, %c0_157] : memref<1x4x16x9xf32, #tpu.memory_space<vmem>>, vector<1x4x1x9xf32>
    %573 = vector.shape_cast %572 : vector<1x4x1x9xf32> to vector<4x9xf32>
    %574 = vector.shape_cast %571 : vector<4x9xf32> to vector<1x4x1x9xf32>
    tpu.vector_store %arg10[%c0_155, %c0_156, %c9, %c0_157], %574 {strides = array<i32>} : memref<1x4x16x9xf32, #tpu.memory_space<vmem>>, vector<1x4x1x9xf32>,
    %c10_i32 = arith.constant 10 : i32
    %575 = arith.addi %14, %c10_i32 : i32
    %576 = vector.extract_strided_slice %1 {offsets = [10, 0], sizes = [1, 1], strides = [1, 1]} : vector<16x1xf32> to vector<1x1xf32>
    %577 = vector.broadcast %576 : vector<1x1xf32> to vector<1x9xf32>
    %578 = arith.subf %577, %3 : vector<1x9xf32>
    %579 = arith.sitofp %575 : i32 to f32
    %580 = vector.broadcast %579 : f32 to vector<1x9xf32>
    %581 = arith.subf %580, %11 : vector<1x9xf32>
    %cst_158 = arith.constant 0.001953125 : f32
    %582 = vector.broadcast %cst_158 : f32 to vector<1x9xf32>
    %583 = arith.mulf %581, %582 : vector<1x9xf32>
    %584 = math.floor %583 : vector<1x9xf32>
    %585 = arith.subf %583, %584 : vector<1x9xf32>
    %cst_159 = arith.constant 1.000000e+00 : f32
    %586 = vector.broadcast %cst_159 : f32 to vector<1x9xf32>
    %587 = arith.mulf %578, %586 : vector<1x9xf32>
    %588 = math.floor %587 : vector<1x9xf32>
    %589 = arith.subf %587, %588 : vector<1x9xf32>
    %cst_160 = arith.constant 0.0416666679 : f32
    %590 = vector.broadcast %cst_160 : f32 to vector<1x9xf32>
    %591 = arith.mulf %578, %590 : vector<1x9xf32>
    %592 = math.floor %591 : vector<1x9xf32>
    %593 = arith.subf %591, %592 : vector<1x9xf32>
    %cst_161 = arith.constant 0.00595238106 : f32
    %594 = vector.broadcast %cst_161 : f32 to vector<1x9xf32>
    %595 = arith.mulf %578, %594 : vector<1x9xf32>
    %596 = math.floor %595 : vector<1x9xf32>
    %597 = arith.subf %595, %596 : vector<1x9xf32>
    %598 = tpu.concatenate %585, %589, %593, %597 in 0 : vector<1x9xf32>, vector<1x9xf32>, vector<1x9xf32>, vector<1x9xf32> -> vector<4x9xf32>
    %599 = arith.truncf %598 : vector<4x9xf32> to vector<4x9xbf16>
    %cst_162 = arith.constant dense<0.000000e+00> : vector<32x9xf32>
    %600 = tpu.matmul %4, %599, %cst_162 {dimension_numbers = #tpu.dot_dimension_numbers<[1], [0], [0], [1], [0, 0, 1, 1], [], []>} : vector<32x4xbf16>, vector<4x9xbf16>, vector<32x9xf32> -> vector<32x9xf32>
    %601 = vector.broadcast %5 : vector<32x1xf32> to vector<32x9xf32>
    %602 = arith.addf %600, %601 : vector<32x9xf32>
    %603 = arith.truncf %602 : vector<32x9xf32> to vector<32x9xbf16>
    %cst_163 = arith.constant 5.000000e-01 : bf16
    %604 = vector.broadcast %cst_163 : bf16 to vector<32x9xbf16>
    %605 = arith.mulf %604, %603 : vector<32x9xbf16>
    %606 = math.tanh %605 : vector<32x9xbf16>
    %607 = arith.mulf %605, %606 : vector<32x9xbf16>
    %608 = arith.addf %605, %607 : vector<32x9xbf16>
    %cst_164 = arith.constant dense<0.000000e+00> : vector<32x9xf32>
    %609 = tpu.matmul %6, %608, %cst_164 {dimension_numbers = #tpu.dot_dimension_numbers<[1], [0], [0], [1], [0, 0, 1, 1], [], []>} : vector<32x32xbf16>, vector<32x9xbf16>, vector<32x9xf32> -> vector<32x9xf32>
    %610 = vector.broadcast %7 : vector<32x1xf32> to vector<32x9xf32>
    %611 = arith.addf %609, %610 : vector<32x9xf32>
    %612 = arith.truncf %611 : vector<32x9xf32> to vector<32x9xbf16>
    %cst_165 = arith.constant 5.000000e-01 : bf16
    %613 = vector.broadcast %cst_165 : bf16 to vector<32x9xbf16>
    %614 = arith.mulf %613, %612 : vector<32x9xbf16>
    %615 = math.tanh %614 : vector<32x9xbf16>
    %616 = arith.mulf %614, %615 : vector<32x9xbf16>
    %617 = arith.addf %614, %616 : vector<32x9xbf16>
    %cst_166 = arith.constant dense<0.000000e+00> : vector<4x9xf32>
    %618 = tpu.matmul %8, %617, %cst_166 {dimension_numbers = #tpu.dot_dimension_numbers<[1], [0], [0], [1], [0, 0, 1, 1], [], []>} : vector<4x32xbf16>, vector<32x9xbf16>, vector<4x9xf32> -> vector<4x9xf32>
    %619 = vector.broadcast %9 : vector<4x1xf32> to vector<4x9xf32>
    %620 = arith.addf %618, %619 : vector<4x9xf32>
    %c1_i32_167 = arith.constant 1 : i32
    %621 = arith.cmpi sge, %575, %c1_i32_167 : i32
    %622 = vector.broadcast %621 : i1 to vector<1x9xi1>
    %623 = arith.andi %622, %13 : vector<1x9xi1>
    %cst_168 = arith.constant 0.000000e+00 : f32
    %624 = vector.shape_cast %623 : vector<1x9xi1> to vector<1x9xi1>
    %625 = vector.broadcast %624 : vector<1x9xi1> to vector<4x9xi1>
    %626 = vector.broadcast %cst_168 : f32 to vector<4x9xf32>
    %627 = arith.select %625, %620, %626 : vector<4x9xi1>, vector<4x9xf32>
    %c0_169 = arith.constant 0 : index
    %c0_170 = arith.constant 0 : index
    %c10 = arith.constant 10 : index
    %c0_171 = arith.constant 0 : index
    %628 = vector.load %arg10[%c0_169, %c0_170, %c10, %c0_171] : memref<1x4x16x9xf32, #tpu.memory_space<vmem>>, vector<1x4x1x9xf32>
    %629 = vector.shape_cast %628 : vector<1x4x1x9xf32> to vector<4x9xf32>
    %630 = vector.shape_cast %627 : vector<4x9xf32> to vector<1x4x1x9xf32>
    tpu.vector_store %arg10[%c0_169, %c0_170, %c10, %c0_171], %630 {strides = array<i32>} : memref<1x4x16x9xf32, #tpu.memory_space<vmem>>, vector<1x4x1x9xf32>,
    %c11_i32 = arith.constant 11 : i32
    %631 = arith.addi %14, %c11_i32 : i32
    %632 = vector.extract_strided_slice %1 {offsets = [11, 0], sizes = [1, 1], strides = [1, 1]} : vector<16x1xf32> to vector<1x1xf32>
    %633 = vector.broadcast %632 : vector<1x1xf32> to vector<1x9xf32>
    %634 = arith.subf %633, %3 : vector<1x9xf32>
    %635 = arith.sitofp %631 : i32 to f32
    %636 = vector.broadcast %635 : f32 to vector<1x9xf32>
    %637 = arith.subf %636, %11 : vector<1x9xf32>
    %cst_172 = arith.constant 0.001953125 : f32
    %638 = vector.broadcast %cst_172 : f32 to vector<1x9xf32>
    %639 = arith.mulf %637, %638 : vector<1x9xf32>
    %640 = math.floor %639 : vector<1x9xf32>
    %641 = arith.subf %639, %640 : vector<1x9xf32>
    %cst_173 = arith.constant 1.000000e+00 : f32
    %642 = vector.broadcast %cst_173 : f32 to vector<1x9xf32>
    %643 = arith.mulf %634, %642 : vector<1x9xf32>
    %644 = math.floor %643 : vector<1x9xf32>
    %645 = arith.subf %643, %644 : vector<1x9xf32>
    %cst_174 = arith.constant 0.0416666679 : f32
    %646 = vector.broadcast %cst_174 : f32 to vector<1x9xf32>
    %647 = arith.mulf %634, %646 : vector<1x9xf32>
    %648 = math.floor %647 : vector<1x9xf32>
    %649 = arith.subf %647, %648 : vector<1x9xf32>
    %cst_175 = arith.constant 0.00595238106 : f32
    %650 = vector.broadcast %cst_175 : f32 to vector<1x9xf32>
    %651 = arith.mulf %634, %650 : vector<1x9xf32>
    %652 = math.floor %651 : vector<1x9xf32>
    %653 = arith.subf %651, %652 : vector<1x9xf32>
    %654 = tpu.concatenate %641, %645, %649, %653 in 0 : vector<1x9xf32>, vector<1x9xf32>, vector<1x9xf32>, vector<1x9xf32> -> vector<4x9xf32>
    %655 = arith.truncf %654 : vector<4x9xf32> to vector<4x9xbf16>
    %cst_176 = arith.constant dense<0.000000e+00> : vector<32x9xf32>
    %656 = tpu.matmul %4, %655, %cst_176 {dimension_numbers = #tpu.dot_dimension_numbers<[1], [0], [0], [1], [0, 0, 1, 1], [], []>} : vector<32x4xbf16>, vector<4x9xbf16>, vector<32x9xf32> -> vector<32x9xf32>
    %657 = vector.broadcast %5 : vector<32x1xf32> to vector<32x9xf32>
    %658 = arith.addf %656, %657 : vector<32x9xf32>
    %659 = arith.truncf %658 : vector<32x9xf32> to vector<32x9xbf16>
    %cst_177 = arith.constant 5.000000e-01 : bf16
    %660 = vector.broadcast %cst_177 : bf16 to vector<32x9xbf16>
    %661 = arith.mulf %660, %659 : vector<32x9xbf16>
    %662 = math.tanh %661 : vector<32x9xbf16>
    %663 = arith.mulf %661, %662 : vector<32x9xbf16>
    %664 = arith.addf %661, %663 : vector<32x9xbf16>
    %cst_178 = arith.constant dense<0.000000e+00> : vector<32x9xf32>
    %665 = tpu.matmul %6, %664, %cst_178 {dimension_numbers = #tpu.dot_dimension_numbers<[1], [0], [0], [1], [0, 0, 1, 1], [], []>} : vector<32x32xbf16>, vector<32x9xbf16>, vector<32x9xf32> -> vector<32x9xf32>
    %666 = vector.broadcast %7 : vector<32x1xf32> to vector<32x9xf32>
    %667 = arith.addf %665, %666 : vector<32x9xf32>
    %668 = arith.truncf %667 : vector<32x9xf32> to vector<32x9xbf16>
    %cst_179 = arith.constant 5.000000e-01 : bf16
    %669 = vector.broadcast %cst_179 : bf16 to vector<32x9xbf16>
    %670 = arith.mulf %669, %668 : vector<32x9xbf16>
    %671 = math.tanh %670 : vector<32x9xbf16>
    %672 = arith.mulf %670, %671 : vector<32x9xbf16>
    %673 = arith.addf %670, %672 : vector<32x9xbf16>
    %cst_180 = arith.constant dense<0.000000e+00> : vector<4x9xf32>
    %674 = tpu.matmul %8, %673, %cst_180 {dimension_numbers = #tpu.dot_dimension_numbers<[1], [0], [0], [1], [0, 0, 1, 1], [], []>} : vector<4x32xbf16>, vector<32x9xbf16>, vector<4x9xf32> -> vector<4x9xf32>
    %675 = vector.broadcast %9 : vector<4x1xf32> to vector<4x9xf32>
    %676 = arith.addf %674, %675 : vector<4x9xf32>
    %c1_i32_181 = arith.constant 1 : i32
    %677 = arith.cmpi sge, %631, %c1_i32_181 : i32
    %678 = vector.broadcast %677 : i1 to vector<1x9xi1>
    %679 = arith.andi %678, %13 : vector<1x9xi1>
    %cst_182 = arith.constant 0.000000e+00 : f32
    %680 = vector.shape_cast %679 : vector<1x9xi1> to vector<1x9xi1>
    %681 = vector.broadcast %680 : vector<1x9xi1> to vector<4x9xi1>
    %682 = vector.broadcast %cst_182 : f32 to vector<4x9xf32>
    %683 = arith.select %681, %676, %682 : vector<4x9xi1>, vector<4x9xf32>
    %c0_183 = arith.constant 0 : index
    %c0_184 = arith.constant 0 : index
    %c11 = arith.constant 11 : index
    %c0_185 = arith.constant 0 : index
    %684 = vector.load %arg10[%c0_183, %c0_184, %c11, %c0_185] : memref<1x4x16x9xf32, #tpu.memory_space<vmem>>, vector<1x4x1x9xf32>
    %685 = vector.shape_cast %684 : vector<1x4x1x9xf32> to vector<4x9xf32>
    %686 = vector.shape_cast %683 : vector<4x9xf32> to vector<1x4x1x9xf32>
    tpu.vector_store %arg10[%c0_183, %c0_184, %c11, %c0_185], %686 {strides = array<i32>} : memref<1x4x16x9xf32, #tpu.memory_space<vmem>>, vector<1x4x1x9xf32>,
    %c12_i32 = arith.constant 12 : i32
    %687 = arith.addi %14, %c12_i32 : i32
    %688 = vector.extract_strided_slice %1 {offsets = [12, 0], sizes = [1, 1], strides = [1, 1]} : vector<16x1xf32> to vector<1x1xf32>
    %689 = vector.broadcast %688 : vector<1x1xf32> to vector<1x9xf32>
    %690 = arith.subf %689, %3 : vector<1x9xf32>
    %691 = arith.sitofp %687 : i32 to f32
    %692 = vector.broadcast %691 : f32 to vector<1x9xf32>
    %693 = arith.subf %692, %11 : vector<1x9xf32>
    %cst_186 = arith.constant 0.001953125 : f32
    %694 = vector.broadcast %cst_186 : f32 to vector<1x9xf32>
    %695 = arith.mulf %693, %694 : vector<1x9xf32>
    %696 = math.floor %695 : vector<1x9xf32>
    %697 = arith.subf %695, %696 : vector<1x9xf32>
    %cst_187 = arith.constant 1.000000e+00 : f32
    %698 = vector.broadcast %cst_187 : f32 to vector<1x9xf32>
    %699 = arith.mulf %690, %698 : vector<1x9xf32>
    %700 = math.floor %699 : vector<1x9xf32>
    %701 = arith.subf %699, %700 : vector<1x9xf32>
    %cst_188 = arith.constant 0.0416666679 : f32
    %702 = vector.broadcast %cst_188 : f32 to vector<1x9xf32>
    %703 = arith.mulf %690, %702 : vector<1x9xf32>
    %704 = math.floor %703 : vector<1x9xf32>
    %705 = arith.subf %703, %704 : vector<1x9xf32>
    %cst_189 = arith.constant 0.00595238106 : f32
    %706 = vector.broadcast %cst_189 : f32 to vector<1x9xf32>
    %707 = arith.mulf %690, %706 : vector<1x9xf32>
    %708 = math.floor %707 : vector<1x9xf32>
    %709 = arith.subf %707, %708 : vector<1x9xf32>
    %710 = tpu.concatenate %697, %701, %705, %709 in 0 : vector<1x9xf32>, vector<1x9xf32>, vector<1x9xf32>, vector<1x9xf32> -> vector<4x9xf32>
    %711 = arith.truncf %710 : vector<4x9xf32> to vector<4x9xbf16>
    %cst_190 = arith.constant dense<0.000000e+00> : vector<32x9xf32>
    %712 = tpu.matmul %4, %711, %cst_190 {dimension_numbers = #tpu.dot_dimension_numbers<[1], [0], [0], [1], [0, 0, 1, 1], [], []>} : vector<32x4xbf16>, vector<4x9xbf16>, vector<32x9xf32> -> vector<32x9xf32>
    %713 = vector.broadcast %5 : vector<32x1xf32> to vector<32x9xf32>
    %714 = arith.addf %712, %713 : vector<32x9xf32>
    %715 = arith.truncf %714 : vector<32x9xf32> to vector<32x9xbf16>
    %cst_191 = arith.constant 5.000000e-01 : bf16
    %716 = vector.broadcast %cst_191 : bf16 to vector<32x9xbf16>
    %717 = arith.mulf %716, %715 : vector<32x9xbf16>
    %718 = math.tanh %717 : vector<32x9xbf16>
    %719 = arith.mulf %717, %718 : vector<32x9xbf16>
    %720 = arith.addf %717, %719 : vector<32x9xbf16>
    %cst_192 = arith.constant dense<0.000000e+00> : vector<32x9xf32>
    %721 = tpu.matmul %6, %720, %cst_192 {dimension_numbers = #tpu.dot_dimension_numbers<[1], [0], [0], [1], [0, 0, 1, 1], [], []>} : vector<32x32xbf16>, vector<32x9xbf16>, vector<32x9xf32> -> vector<32x9xf32>
    %722 = vector.broadcast %7 : vector<32x1xf32> to vector<32x9xf32>
    %723 = arith.addf %721, %722 : vector<32x9xf32>
    %724 = arith.truncf %723 : vector<32x9xf32> to vector<32x9xbf16>
    %cst_193 = arith.constant 5.000000e-01 : bf16
    %725 = vector.broadcast %cst_193 : bf16 to vector<32x9xbf16>
    %726 = arith.mulf %725, %724 : vector<32x9xbf16>
    %727 = math.tanh %726 : vector<32x9xbf16>
    %728 = arith.mulf %726, %727 : vector<32x9xbf16>
    %729 = arith.addf %726, %728 : vector<32x9xbf16>
    %cst_194 = arith.constant dense<0.000000e+00> : vector<4x9xf32>
    %730 = tpu.matmul %8, %729, %cst_194 {dimension_numbers = #tpu.dot_dimension_numbers<[1], [0], [0], [1], [0, 0, 1, 1], [], []>} : vector<4x32xbf16>, vector<32x9xbf16>, vector<4x9xf32> -> vector<4x9xf32>
    %731 = vector.broadcast %9 : vector<4x1xf32> to vector<4x9xf32>
    %732 = arith.addf %730, %731 : vector<4x9xf32>
    %c1_i32_195 = arith.constant 1 : i32
    %733 = arith.cmpi sge, %687, %c1_i32_195 : i32
    %734 = vector.broadcast %733 : i1 to vector<1x9xi1>
    %735 = arith.andi %734, %13 : vector<1x9xi1>
    %cst_196 = arith.constant 0.000000e+00 : f32
    %736 = vector.shape_cast %735 : vector<1x9xi1> to vector<1x9xi1>
    %737 = vector.broadcast %736 : vector<1x9xi1> to vector<4x9xi1>
    %738 = vector.broadcast %cst_196 : f32 to vector<4x9xf32>
    %739 = arith.select %737, %732, %738 : vector<4x9xi1>, vector<4x9xf32>
    %c0_197 = arith.constant 0 : index
    %c0_198 = arith.constant 0 : index
    %c12 = arith.constant 12 : index
    %c0_199 = arith.constant 0 : index
    %740 = vector.load %arg10[%c0_197, %c0_198, %c12, %c0_199] : memref<1x4x16x9xf32, #tpu.memory_space<vmem>>, vector<1x4x1x9xf32>
    %741 = vector.shape_cast %740 : vector<1x4x1x9xf32> to vector<4x9xf32>
    %742 = vector.shape_cast %739 : vector<4x9xf32> to vector<1x4x1x9xf32>
    tpu.vector_store %arg10[%c0_197, %c0_198, %c12, %c0_199], %742 {strides = array<i32>} : memref<1x4x16x9xf32, #tpu.memory_space<vmem>>, vector<1x4x1x9xf32>,
    %c13_i32 = arith.constant 13 : i32
    %743 = arith.addi %14, %c13_i32 : i32
    %744 = vector.extract_strided_slice %1 {offsets = [13, 0], sizes = [1, 1], strides = [1, 1]} : vector<16x1xf32> to vector<1x1xf32>
    %745 = vector.broadcast %744 : vector<1x1xf32> to vector<1x9xf32>
    %746 = arith.subf %745, %3 : vector<1x9xf32>
    %747 = arith.sitofp %743 : i32 to f32
    %748 = vector.broadcast %747 : f32 to vector<1x9xf32>
    %749 = arith.subf %748, %11 : vector<1x9xf32>
    %cst_200 = arith.constant 0.001953125 : f32
    %750 = vector.broadcast %cst_200 : f32 to vector<1x9xf32>
    %751 = arith.mulf %749, %750 : vector<1x9xf32>
    %752 = math.floor %751 : vector<1x9xf32>
    %753 = arith.subf %751, %752 : vector<1x9xf32>
    %cst_201 = arith.constant 1.000000e+00 : f32
    %754 = vector.broadcast %cst_201 : f32 to vector<1x9xf32>
    %755 = arith.mulf %746, %754 : vector<1x9xf32>
    %756 = math.floor %755 : vector<1x9xf32>
    %757 = arith.subf %755, %756 : vector<1x9xf32>
    %cst_202 = arith.constant 0.0416666679 : f32
    %758 = vector.broadcast %cst_202 : f32 to vector<1x9xf32>
    %759 = arith.mulf %746, %758 : vector<1x9xf32>
    %760 = math.floor %759 : vector<1x9xf32>
    %761 = arith.subf %759, %760 : vector<1x9xf32>
    %cst_203 = arith.constant 0.00595238106 : f32
    %762 = vector.broadcast %cst_203 : f32 to vector<1x9xf32>
    %763 = arith.mulf %746, %762 : vector<1x9xf32>
    %764 = math.floor %763 : vector<1x9xf32>
    %765 = arith.subf %763, %764 : vector<1x9xf32>
    %766 = tpu.concatenate %753, %757, %761, %765 in 0 : vector<1x9xf32>, vector<1x9xf32>, vector<1x9xf32>, vector<1x9xf32> -> vector<4x9xf32>
    %767 = arith.truncf %766 : vector<4x9xf32> to vector<4x9xbf16>
    %cst_204 = arith.constant dense<0.000000e+00> : vector<32x9xf32>
    %768 = tpu.matmul %4, %767, %cst_204 {dimension_numbers = #tpu.dot_dimension_numbers<[1], [0], [0], [1], [0, 0, 1, 1], [], []>} : vector<32x4xbf16>, vector<4x9xbf16>, vector<32x9xf32> -> vector<32x9xf32>
    %769 = vector.broadcast %5 : vector<32x1xf32> to vector<32x9xf32>
    %770 = arith.addf %768, %769 : vector<32x9xf32>
    %771 = arith.truncf %770 : vector<32x9xf32> to vector<32x9xbf16>
    %cst_205 = arith.constant 5.000000e-01 : bf16
    %772 = vector.broadcast %cst_205 : bf16 to vector<32x9xbf16>
    %773 = arith.mulf %772, %771 : vector<32x9xbf16>
    %774 = math.tanh %773 : vector<32x9xbf16>
    %775 = arith.mulf %773, %774 : vector<32x9xbf16>
    %776 = arith.addf %773, %775 : vector<32x9xbf16>
    %cst_206 = arith.constant dense<0.000000e+00> : vector<32x9xf32>
    %777 = tpu.matmul %6, %776, %cst_206 {dimension_numbers = #tpu.dot_dimension_numbers<[1], [0], [0], [1], [0, 0, 1, 1], [], []>} : vector<32x32xbf16>, vector<32x9xbf16>, vector<32x9xf32> -> vector<32x9xf32>
    %778 = vector.broadcast %7 : vector<32x1xf32> to vector<32x9xf32>
    %779 = arith.addf %777, %778 : vector<32x9xf32>
    %780 = arith.truncf %779 : vector<32x9xf32> to vector<32x9xbf16>
    %cst_207 = arith.constant 5.000000e-01 : bf16
    %781 = vector.broadcast %cst_207 : bf16 to vector<32x9xbf16>
    %782 = arith.mulf %781, %780 : vector<32x9xbf16>
    %783 = math.tanh %782 : vector<32x9xbf16>
    %784 = arith.mulf %782, %783 : vector<32x9xbf16>
    %785 = arith.addf %782, %784 : vector<32x9xbf16>
    %cst_208 = arith.constant dense<0.000000e+00> : vector<4x9xf32>
    %786 = tpu.matmul %8, %785, %cst_208 {dimension_numbers = #tpu.dot_dimension_numbers<[1], [0], [0], [1], [0, 0, 1, 1], [], []>} : vector<4x32xbf16>, vector<32x9xbf16>, vector<4x9xf32> -> vector<4x9xf32>
    %787 = vector.broadcast %9 : vector<4x1xf32> to vector<4x9xf32>
    %788 = arith.addf %786, %787 : vector<4x9xf32>
    %c1_i32_209 = arith.constant 1 : i32
    %789 = arith.cmpi sge, %743, %c1_i32_209 : i32
    %790 = vector.broadcast %789 : i1 to vector<1x9xi1>
    %791 = arith.andi %790, %13 : vector<1x9xi1>
    %cst_210 = arith.constant 0.000000e+00 : f32
    %792 = vector.shape_cast %791 : vector<1x9xi1> to vector<1x9xi1>
    %793 = vector.broadcast %792 : vector<1x9xi1> to vector<4x9xi1>
    %794 = vector.broadcast %cst_210 : f32 to vector<4x9xf32>
    %795 = arith.select %793, %788, %794 : vector<4x9xi1>, vector<4x9xf32>
    %c0_211 = arith.constant 0 : index
    %c0_212 = arith.constant 0 : index
    %c13 = arith.constant 13 : index
    %c0_213 = arith.constant 0 : index
    %796 = vector.load %arg10[%c0_211, %c0_212, %c13, %c0_213] : memref<1x4x16x9xf32, #tpu.memory_space<vmem>>, vector<1x4x1x9xf32>
    %797 = vector.shape_cast %796 : vector<1x4x1x9xf32> to vector<4x9xf32>
    %798 = vector.shape_cast %795 : vector<4x9xf32> to vector<1x4x1x9xf32>
    tpu.vector_store %arg10[%c0_211, %c0_212, %c13, %c0_213], %798 {strides = array<i32>} : memref<1x4x16x9xf32, #tpu.memory_space<vmem>>, vector<1x4x1x9xf32>,
    %c14_i32 = arith.constant 14 : i32
    %799 = arith.addi %14, %c14_i32 : i32
    %800 = vector.extract_strided_slice %1 {offsets = [14, 0], sizes = [1, 1], strides = [1, 1]} : vector<16x1xf32> to vector<1x1xf32>
    %801 = vector.broadcast %800 : vector<1x1xf32> to vector<1x9xf32>
    %802 = arith.subf %801, %3 : vector<1x9xf32>
    %803 = arith.sitofp %799 : i32 to f32
    %804 = vector.broadcast %803 : f32 to vector<1x9xf32>
    %805 = arith.subf %804, %11 : vector<1x9xf32>
    %cst_214 = arith.constant 0.001953125 : f32
    %806 = vector.broadcast %cst_214 : f32 to vector<1x9xf32>
    %807 = arith.mulf %805, %806 : vector<1x9xf32>
    %808 = math.floor %807 : vector<1x9xf32>
    %809 = arith.subf %807, %808 : vector<1x9xf32>
    %cst_215 = arith.constant 1.000000e+00 : f32
    %810 = vector.broadcast %cst_215 : f32 to vector<1x9xf32>
    %811 = arith.mulf %802, %810 : vector<1x9xf32>
    %812 = math.floor %811 : vector<1x9xf32>
    %813 = arith.subf %811, %812 : vector<1x9xf32>
    %cst_216 = arith.constant 0.0416666679 : f32
    %814 = vector.broadcast %cst_216 : f32 to vector<1x9xf32>
    %815 = arith.mulf %802, %814 : vector<1x9xf32>
    %816 = math.floor %815 : vector<1x9xf32>
    %817 = arith.subf %815, %816 : vector<1x9xf32>
    %cst_217 = arith.constant 0.00595238106 : f32
    %818 = vector.broadcast %cst_217 : f32 to vector<1x9xf32>
    %819 = arith.mulf %802, %818 : vector<1x9xf32>
    %820 = math.floor %819 : vector<1x9xf32>
    %821 = arith.subf %819, %820 : vector<1x9xf32>
    %822 = tpu.concatenate %809, %813, %817, %821 in 0 : vector<1x9xf32>, vector<1x9xf32>, vector<1x9xf32>, vector<1x9xf32> -> vector<4x9xf32>
    %823 = arith.truncf %822 : vector<4x9xf32> to vector<4x9xbf16>
    %cst_218 = arith.constant dense<0.000000e+00> : vector<32x9xf32>
    %824 = tpu.matmul %4, %823, %cst_218 {dimension_numbers = #tpu.dot_dimension_numbers<[1], [0], [0], [1], [0, 0, 1, 1], [], []>} : vector<32x4xbf16>, vector<4x9xbf16>, vector<32x9xf32> -> vector<32x9xf32>
    %825 = vector.broadcast %5 : vector<32x1xf32> to vector<32x9xf32>
    %826 = arith.addf %824, %825 : vector<32x9xf32>
    %827 = arith.truncf %826 : vector<32x9xf32> to vector<32x9xbf16>
    %cst_219 = arith.constant 5.000000e-01 : bf16
    %828 = vector.broadcast %cst_219 : bf16 to vector<32x9xbf16>
    %829 = arith.mulf %828, %827 : vector<32x9xbf16>
    %830 = math.tanh %829 : vector<32x9xbf16>
    %831 = arith.mulf %829, %830 : vector<32x9xbf16>
    %832 = arith.addf %829, %831 : vector<32x9xbf16>
    %cst_220 = arith.constant dense<0.000000e+00> : vector<32x9xf32>
    %833 = tpu.matmul %6, %832, %cst_220 {dimension_numbers = #tpu.dot_dimension_numbers<[1], [0], [0], [1], [0, 0, 1, 1], [], []>} : vector<32x32xbf16>, vector<32x9xbf16>, vector<32x9xf32> -> vector<32x9xf32>
    %834 = vector.broadcast %7 : vector<32x1xf32> to vector<32x9xf32>
    %835 = arith.addf %833, %834 : vector<32x9xf32>
    %836 = arith.truncf %835 : vector<32x9xf32> to vector<32x9xbf16>
    %cst_221 = arith.constant 5.000000e-01 : bf16
    %837 = vector.broadcast %cst_221 : bf16 to vector<32x9xbf16>
    %838 = arith.mulf %837, %836 : vector<32x9xbf16>
    %839 = math.tanh %838 : vector<32x9xbf16>
    %840 = arith.mulf %838, %839 : vector<32x9xbf16>
    %841 = arith.addf %838, %840 : vector<32x9xbf16>
    %cst_222 = arith.constant dense<0.000000e+00> : vector<4x9xf32>
    %842 = tpu.matmul %8, %841, %cst_222 {dimension_numbers = #tpu.dot_dimension_numbers<[1], [0], [0], [1], [0, 0, 1, 1], [], []>} : vector<4x32xbf16>, vector<32x9xbf16>, vector<4x9xf32> -> vector<4x9xf32>
    %843 = vector.broadcast %9 : vector<4x1xf32> to vector<4x9xf32>
    %844 = arith.addf %842, %843 : vector<4x9xf32>
    %c1_i32_223 = arith.constant 1 : i32
    %845 = arith.cmpi sge, %799, %c1_i32_223 : i32
    %846 = vector.broadcast %845 : i1 to vector<1x9xi1>
    %847 = arith.andi %846, %13 : vector<1x9xi1>
    %cst_224 = arith.constant 0.000000e+00 : f32
    %848 = vector.shape_cast %847 : vector<1x9xi1> to vector<1x9xi1>
    %849 = vector.broadcast %848 : vector<1x9xi1> to vector<4x9xi1>
    %850 = vector.broadcast %cst_224 : f32 to vector<4x9xf32>
    %851 = arith.select %849, %844, %850 : vector<4x9xi1>, vector<4x9xf32>
    %c0_225 = arith.constant 0 : index
    %c0_226 = arith.constant 0 : index
    %c14 = arith.constant 14 : index
    %c0_227 = arith.constant 0 : index
    %852 = vector.load %arg10[%c0_225, %c0_226, %c14, %c0_227] : memref<1x4x16x9xf32, #tpu.memory_space<vmem>>, vector<1x4x1x9xf32>
    %853 = vector.shape_cast %852 : vector<1x4x1x9xf32> to vector<4x9xf32>
    %854 = vector.shape_cast %851 : vector<4x9xf32> to vector<1x4x1x9xf32>
    tpu.vector_store %arg10[%c0_225, %c0_226, %c14, %c0_227], %854 {strides = array<i32>} : memref<1x4x16x9xf32, #tpu.memory_space<vmem>>, vector<1x4x1x9xf32>,
    %c15_i32 = arith.constant 15 : i32
    %855 = arith.addi %14, %c15_i32 : i32
    %856 = vector.extract_strided_slice %1 {offsets = [15, 0], sizes = [1, 1], strides = [1, 1]} : vector<16x1xf32> to vector<1x1xf32>
    %857 = vector.broadcast %856 : vector<1x1xf32> to vector<1x9xf32>
    %858 = arith.subf %857, %3 : vector<1x9xf32>
    %859 = arith.sitofp %855 : i32 to f32
    %860 = vector.broadcast %859 : f32 to vector<1x9xf32>
    %861 = arith.subf %860, %11 : vector<1x9xf32>
    %cst_228 = arith.constant 0.001953125 : f32
    %862 = vector.broadcast %cst_228 : f32 to vector<1x9xf32>
    %863 = arith.mulf %861, %862 : vector<1x9xf32>
    %864 = math.floor %863 : vector<1x9xf32>
    %865 = arith.subf %863, %864 : vector<1x9xf32>
    %cst_229 = arith.constant 1.000000e+00 : f32
    %866 = vector.broadcast %cst_229 : f32 to vector<1x9xf32>
    %867 = arith.mulf %858, %866 : vector<1x9xf32>
    %868 = math.floor %867 : vector<1x9xf32>
    %869 = arith.subf %867, %868 : vector<1x9xf32>
    %cst_230 = arith.constant 0.0416666679 : f32
    %870 = vector.broadcast %cst_230 : f32 to vector<1x9xf32>
    %871 = arith.mulf %858, %870 : vector<1x9xf32>
    %872 = math.floor %871 : vector<1x9xf32>
    %873 = arith.subf %871, %872 : vector<1x9xf32>
    %cst_231 = arith.constant 0.00595238106 : f32
    %874 = vector.broadcast %cst_231 : f32 to vector<1x9xf32>
    %875 = arith.mulf %858, %874 : vector<1x9xf32>
    %876 = math.floor %875 : vector<1x9xf32>
    %877 = arith.subf %875, %876 : vector<1x9xf32>
    %878 = tpu.concatenate %865, %869, %873, %877 in 0 : vector<1x9xf32>, vector<1x9xf32>, vector<1x9xf32>, vector<1x9xf32> -> vector<4x9xf32>
    %879 = arith.truncf %878 : vector<4x9xf32> to vector<4x9xbf16>
    %cst_232 = arith.constant dense<0.000000e+00> : vector<32x9xf32>
    %880 = tpu.matmul %4, %879, %cst_232 {dimension_numbers = #tpu.dot_dimension_numbers<[1], [0], [0], [1], [0, 0, 1, 1], [], []>} : vector<32x4xbf16>, vector<4x9xbf16>, vector<32x9xf32> -> vector<32x9xf32>
    %881 = vector.broadcast %5 : vector<32x1xf32> to vector<32x9xf32>
    %882 = arith.addf %880, %881 : vector<32x9xf32>
    %883 = arith.truncf %882 : vector<32x9xf32> to vector<32x9xbf16>
    %cst_233 = arith.constant 5.000000e-01 : bf16
    %884 = vector.broadcast %cst_233 : bf16 to vector<32x9xbf16>
    %885 = arith.mulf %884, %883 : vector<32x9xbf16>
    %886 = math.tanh %885 : vector<32x9xbf16>
    %887 = arith.mulf %885, %886 : vector<32x9xbf16>
    %888 = arith.addf %885, %887 : vector<32x9xbf16>
    %cst_234 = arith.constant dense<0.000000e+00> : vector<32x9xf32>
    %889 = tpu.matmul %6, %888, %cst_234 {dimension_numbers = #tpu.dot_dimension_numbers<[1], [0], [0], [1], [0, 0, 1, 1], [], []>} : vector<32x32xbf16>, vector<32x9xbf16>, vector<32x9xf32> -> vector<32x9xf32>
    %890 = vector.broadcast %7 : vector<32x1xf32> to vector<32x9xf32>
    %891 = arith.addf %889, %890 : vector<32x9xf32>
    %892 = arith.truncf %891 : vector<32x9xf32> to vector<32x9xbf16>
    %cst_235 = arith.constant 5.000000e-01 : bf16
    %893 = vector.broadcast %cst_235 : bf16 to vector<32x9xbf16>
    %894 = arith.mulf %893, %892 : vector<32x9xbf16>
    %895 = math.tanh %894 : vector<32x9xbf16>
    %896 = arith.mulf %894, %895 : vector<32x9xbf16>
    %897 = arith.addf %894, %896 : vector<32x9xbf16>
    %cst_236 = arith.constant dense<0.000000e+00> : vector<4x9xf32>
    %898 = tpu.matmul %8, %897, %cst_236 {dimension_numbers = #tpu.dot_dimension_numbers<[1], [0], [0], [1], [0, 0, 1, 1], [], []>} : vector<4x32xbf16>, vector<32x9xbf16>, vector<4x9xf32> -> vector<4x9xf32>
    %899 = vector.broadcast %9 : vector<4x1xf32> to vector<4x9xf32>
    %900 = arith.addf %898, %899 : vector<4x9xf32>
    %c1_i32_237 = arith.constant 1 : i32
    %901 = arith.cmpi sge, %855, %c1_i32_237 : i32
    %902 = vector.broadcast %901 : i1 to vector<1x9xi1>
    %903 = arith.andi %902, %13 : vector<1x9xi1>
    %cst_238 = arith.constant 0.000000e+00 : f32
    %904 = vector.shape_cast %903 : vector<1x9xi1> to vector<1x9xi1>
    %905 = vector.broadcast %904 : vector<1x9xi1> to vector<4x9xi1>
    %906 = vector.broadcast %cst_238 : f32 to vector<4x9xf32>
    %907 = arith.select %905, %900, %906 : vector<4x9xi1>, vector<4x9xf32>
    %c0_239 = arith.constant 0 : index
    %c0_240 = arith.constant 0 : index
    %c15 = arith.constant 15 : index
    %c0_241 = arith.constant 0 : index
    %908 = vector.load %arg10[%c0_239, %c0_240, %c15, %c0_241] : memref<1x4x16x9xf32, #tpu.memory_space<vmem>>, vector<1x4x1x9xf32>
    %909 = vector.shape_cast %908 : vector<1x4x1x9xf32> to vector<4x9xf32>
    %910 = vector.shape_cast %907 : vector<4x9xf32> to vector<1x4x1x9xf32>
    tpu.vector_store %arg10[%c0_239, %c0_240, %c15, %c0_241], %910 {strides = array<i32>} : memref<1x4x16x9xf32, #tpu.memory_space<vmem>>, vector<1x4x1x9xf32>,
    return
  }
  func.func @transform_0(%arg0: i32, %arg1: i32) -> (i32, i32, i32) {
    %c0_i32 = arith.constant 0 : i32
    %c0_i32_0 = arith.constant 0 : i32
    return %arg1, %arg0, %c0_i32 : i32, i32, i32
  }
  func.func @transform_1(%arg0: i32, %arg1: i32) -> (i32, i32, i32) {
    %c0_i32 = arith.constant 0 : i32
    %c0_i32_0 = arith.constant 0 : i32
    %c0_i32_1 = arith.constant 0 : i32
    return %arg1, %c0_i32, %c0_i32_0 : i32, i32, i32
  }
  func.func @transform_2(%arg0: i32, %arg1: i32) -> (i32, i32) {
    %c0_i32 = arith.constant 0 : i32
    %c0_i32_0 = arith.constant 0 : i32
    %c0_i32_1 = arith.constant 0 : i32
    return %c0_i32, %c0_i32_0 : i32, i32
  }
  func.func @transform_3(%arg0: i32, %arg1: i32) -> (i32, i32) {
    %c0_i32 = arith.constant 0 : i32
    %c0_i32_0 = arith.constant 0 : i32
    %c0_i32_1 = arith.constant 0 : i32
    return %c0_i32, %c0_i32_0 : i32, i32
  }
  func.func @transform_4(%arg0: i32, %arg1: i32) -> (i32, i32) {
    %c0_i32 = arith.constant 0 : i32
    %c0_i32_0 = arith.constant 0 : i32
    %c0_i32_1 = arith.constant 0 : i32
    return %c0_i32, %c0_i32_0 : i32, i32
  }
  func.func @transform_5(%arg0: i32, %arg1: i32) -> (i32, i32) {
    %c0_i32 = arith.constant 0 : i32
    %c0_i32_0 = arith.constant 0 : i32
    %c0_i32_1 = arith.constant 0 : i32
    return %c0_i32, %c0_i32_0 : i32, i32
  }
  func.func @transform_6(%arg0: i32, %arg1: i32) -> (i32, i32) {
    %c0_i32 = arith.constant 0 : i32
    %c0_i32_0 = arith.constant 0 : i32
    %c0_i32_1 = arith.constant 0 : i32
    return %c0_i32, %c0_i32_0 : i32, i32
  }
  func.func @transform_7(%arg0: i32, %arg1: i32) -> (i32, i32) {
    %c0_i32 = arith.constant 0 : i32
    %c0_i32_0 = arith.constant 0 : i32
    %c0_i32_1 = arith.constant 0 : i32
    return %c0_i32, %c0_i32_0 : i32, i32
  }
  func.func @transform_8(%arg0: i32, %arg1: i32) -> (i32, i32, i32, i32) {
    %c0_i32 = arith.constant 0 : i32
    %c0_i32_0 = arith.constant 0 : i32
    %c0_i32_1 = arith.constant 0 : i32
    return %arg1, %c0_i32, %arg0, %c0_i32_0 : i32, i32, i32, i32
  }
}

</mosaic_0001>

<llo_original>
// kernel: tpu_custom_call.1
$region0: #{tpu_custom_call.1}
  #allocation0 [shape = 'u32[]', space=smem, size = 0x4, offset = 0x4, fixed_abs, tag = 'smem constant byte address 0x4 - core index']
  #allocation1 [shape = 'u32[72,128]{1,0:T(1,128)}', space=vmem, size = 0x9000, scoped, tag = 'internal scratch']
  %s0 = inlined_call_operand.vmem [shape: f32[2,16,1], index: 0, kind: input, shape index: {}]
  %s1 = inlined_call_operand.vmem [shape: f32[2,1,9], index: 1, kind: input, shape index: {}]
  %s2 = inlined_call_operand.vmem [shape: bf16[32,4], index: 2, kind: input, shape index: {}]
  %s3 = inlined_call_operand.vmem [shape: f32[32,1], index: 3, kind: input, shape index: {}]
  %s4 = inlined_call_operand.vmem [shape: bf16[32,32], index: 4, kind: input, shape index: {}]
  %s5 = inlined_call_operand.vmem [shape: f32[32,1], index: 5, kind: input, shape index: {}]
  %s6 = inlined_call_operand.vmem [shape: bf16[4,32], index: 6, kind: input, shape index: {}]
  %s7 = inlined_call_operand.vmem [shape: f32[4,1], index: 7, kind: input, shape index: {}]
  %s8 = inlined_call_operand.vmem [shape: f32[2,4,9,9], index: 8, kind: output, shape index: {}]
  %s9 = sld [smem:[#allocation0]]
  $region65: #{tpu_custom_call.1} parent=0
    _
  %s11 = ssub.s32 1, %s9
  %s12 = scalar_select 0, %s11, %s9
  loop: start=0, step=1, limit=4
  $region2: #{tpu_custom_call.1} parent=0 // loop_pre_header
    _
  $region3: #{tpu_custom_call.1} parent=0 // loop_header
    %s14 = sphi 0, %s18
    %p15 = scmp.ge.s32.totalorder %s14, 4
    %s21 = sphi 0, %s33
    %s22 = sphi 0, %s29
    %s23 = sphi 0, %s21
    %s24 = sphi 0, %s22
    %s25 = sphi 0, %s23
    %s26 = sphi 0, %s24
    %s38 = sphi 0, %s40
    %s41 = sphi 0, %s38
    %s42 = sphi 0, %s41
    %s58 = sphi 0, %s42
    %s64 = sphi 0, %s66
    %s67 = sphi 0, %s64
    %s68 = sphi 0, %s67
    %s84 = sphi 0, %s68
    %s88 = sphi 0, %s88
    %s90 = sphi 0, %s88
    %s91 = sphi 0, %s90
    %s105 = sphi 0, %s91
    %s109 = sphi 0, %s109
    %s111 = sphi 0, %s109
    %s112 = sphi 0, %s111
    %s126 = sphi 0, %s112
    %s130 = sphi 0, %s130
    %s132 = sphi 0, %s130
    %s133 = sphi 0, %s132
    %s147 = sphi 0, %s133
    %s151 = sphi 0, %s151
    %s153 = sphi 0, %s151
    %s154 = sphi 0, %s153
    %s168 = sphi 0, %s154
    %s172 = sphi 0, %s172
    %s174 = sphi 0, %s172
    %s175 = sphi 0, %s174
    %s189 = sphi 0, %s175
    %s193 = sphi 0, %s193
    %s195 = sphi 0, %s193
    %s196 = sphi 0, %s195
    %s210 = sphi 0, %s196
    %s218 = sphi 0, %s220
    %s221 = sphi 0, %s218
    %s222 = sphi 0, %s221
    %s238 = sphi 0, %s222
  $region4: #{tpu_custom_call.1} parent=0 // loop_header_branch
    %17 = sbr.rel (%p15) target = $region8
  $region5: #{tpu_custom_call.1} parent=0 // loop_body
    %s19 = ssub.s32 %s14, 1
    %s20 = ssub.s32 %s14, 2
    %s27 = sadd.s32 1, %s22
    %p28 = scmp.ge.s32.totalorder %s27, 2
    %s29 = scalar_select %p28, 0, %s27
    %s30 = sadd.s32 1, %s21
    %s31 = scalar_select %p28, %s30, %s21
    %p32 = scmp.ge.s32.totalorder %s31, 1
    %s33 = scalar_select %p32, 0, %s31
    %s34 = ssub.s32 %s22, %s29
    %s35 = ssub.s32 %s21, %s33
    %s36 = sor.u32 %s34, %s35
    %p37 = scmp.eq.s32.totalorder %s36, 0
    %s39 = sadd.s32 %s38, 1
    %s40 = scalar_select %p37, %s38, %s39
    %p43 = pneg %p37
    %p44 = scmp.eq.s32.totalorder %s14, 1
    %p45 = por %p43, %p44
    %p46 = scmp.ne.s32.totalorder %s38, %s41
    %p47 = scmp.eq.s32.totalorder %s14, 0
    %p48 = por %p46, %p47
    %p49 = scmp.ne.s32.totalorder %s38, %s41
    %p50 = scmp.eq.s32.totalorder %s19, 1
    %p51 = por %p49, %p50
    %p52 = scmp.ne.s32.totalorder %s41, %s42
    %p53 = scmp.eq.s32.totalorder %s19, 0
    %p54 = por %p52, %p53
    %p55 = scmp.ne.s32.totalorder %s41, %s42
    %p56 = scmp.eq.s32.totalorder %s20, 1
    %p57 = por %p55, %p56
    %p59 = scmp.ne.s32.totalorder %s42, %s58
    %p60 = scmp.eq.s32.totalorder %s20, 0
    %p61 = por %p59, %p60
    %s62 = ssub.s32 %s22, %s29
    %p63 = scmp.eq.s32.totalorder %s62, 0
    %s65 = sadd.s32 %s64, 1
    %s66 = scalar_select %p63, %s64, %s65
    %p69 = pneg %p63
    %p70 = scmp.eq.s32.totalorder %s14, 1
    %p71 = por %p69, %p70
    %p72 = scmp.ne.s32.totalorder %s64, %s67
    %p73 = scmp.eq.s32.totalorder %s14, 0
    %p74 = por %p72, %p73
    %p75 = scmp.ne.s32.totalorder %s64, %s67
    %p76 = scmp.eq.s32.totalorder %s19, 1
    %p77 = por %p75, %p76
    %p78 = scmp.ne.s32.totalorder %s67, %s68
    %p79 = scmp.eq.s32.totalorder %s19, 0
    %p80 = por %p78, %p79
    %p81 = scmp.ne.s32.totalorder %s67, %s68
    %p82 = scmp.eq.s32.totalorder %s20, 1
    %p83 = por %p81, %p82
    %p85 = scmp.ne.s32.totalorder %s68, %s84
    %p86 = scmp.eq.s32.totalorder %s20, 0
    %p87 = por %p85, %p86
    %s89 = sadd.s32 %s88, 1
    %p92 = scmp.eq.s32.totalorder %s14, 1
    %p93 = scmp.ne.s32.totalorder %s88, %s90
    %p94 = scmp.eq.s32.totalorder %s14, 0
    %p95 = por %p93, %p94
    %p96 = scmp.ne.s32.totalorder %s88, %s90
    %p97 = scmp.eq.s32.totalorder %s19, 1
    %p98 = por %p96, %p97
    %p99 = scmp.ne.s32.totalorder %s90, %s91
    %p100 = scmp.eq.s32.totalorder %s19, 0
    %p101 = por %p99, %p100
    %p102 = scmp.ne.s32.totalorder %s90, %s91
    %p103 = scmp.eq.s32.totalorder %s20, 1
    %p104 = por %p102, %p103
    %p106 = scmp.ne.s32.totalorder %s91, %s105
    %p107 = scmp.eq.s32.totalorder %s20, 0
    %p108 = por %p106, %p107
    %s110 = sadd.s32 %s109, 1
    %p113 = scmp.eq.s32.totalorder %s14, 1
    %p114 = scmp.ne.s32.totalorder %s109, %s111
    %p115 = scmp.eq.s32.totalorder %s14, 0
    %p116 = por %p114, %p115
    %p117 = scmp.ne.s32.totalorder %s109, %s111
    %p118 = scmp.eq.s32.totalorder %s19, 1
    %p119 = por %p117, %p118
    %p120 = scmp.ne.s32.totalorder %s111, %s112
    %p121 = scmp.eq.s32.totalorder %s19, 0
    %p122 = por %p120, %p121
    %p123 = scmp.ne.s32.totalorder %s111, %s112
    %p124 = scmp.eq.s32.totalorder %s20, 1
    %p125 = por %p123, %p124
    %p127 = scmp.ne.s32.totalorder %s112, %s126
    %p128 = scmp.eq.s32.totalorder %s20, 0
    %p129 = por %p127, %p128
    %s131 = sadd.s32 %s130, 1
    %p134 = scmp.eq.s32.totalorder %s14, 1
    %p135 = scmp.ne.s32.totalorder %s130, %s132
    %p136 = scmp.eq.s32.totalorder %s14, 0
    %p137 = por %p135, %p136
    %p138 = scmp.ne.s32.totalorder %s130, %s132
    %p139 = scmp.eq.s32.totalorder %s19, 1
    %p140 = por %p138, %p139
    %p141 = scmp.ne.s32.totalorder %s132, %s133
    %p142 = scmp.eq.s32.totalorder %s19, 0
    %p143 = por %p141, %p142
    %p144 = scmp.ne.s32.totalorder %s132, %s133
    %p145 = scmp.eq.s32.totalorder %s20, 1
    %p146 = por %p144, %p145
    %p148 = scmp.ne.s32.totalorder %s133, %s147
    %p149 = scmp.eq.s32.totalorder %s20, 0
    %p150 = por %p148, %p149
    %s152 = sadd.s32 %s151, 1
    %p155 = scmp.eq.s32.totalorder %s14, 1
    %p156 = scmp.ne.s32.totalorder %s151, %s153
    %p157 = scmp.eq.s32.totalorder %s14, 0
    %p158 = por %p156, %p157
    %p159 = scmp.ne.s32.totalorder %s151, %s153
    %p160 = scmp.eq.s32.totalorder %s19, 1
    %p161 = por %p159, %p160
    %p162 = scmp.ne.s32.totalorder %s153, %s154
    %p163 = scmp.eq.s32.totalorder %s19, 0
    %p164 = por %p162, %p163
    %p165 = scmp.ne.s32.totalorder %s153, %s154
    %p166 = scmp.eq.s32.totalorder %s20, 1
    %p167 = por %p165, %p166
    %p169 = scmp.ne.s32.totalorder %s154, %s168
    %p170 = scmp.eq.s32.totalorder %s20, 0
    %p171 = por %p169, %p170
    %s173 = sadd.s32 %s172, 1
    %p176 = scmp.eq.s32.totalorder %s14, 1
    %p177 = scmp.ne.s32.totalorder %s172, %s174
    %p178 = scmp.eq.s32.totalorder %s14, 0
    %p179 = por %p177, %p178
    %p180 = scmp.ne.s32.totalorder %s172, %s174
    %p181 = scmp.eq.s32.totalorder %s19, 1
    %p182 = por %p180, %p181
    %p183 = scmp.ne.s32.totalorder %s174, %s175
    %p184 = scmp.eq.s32.totalorder %s19, 0
    %p185 = por %p183, %p184
    %p186 = scmp.ne.s32.totalorder %s174, %s175
    %p187 = scmp.eq.s32.totalorder %s20, 1
    %p188 = por %p186, %p187
    %p190 = scmp.ne.s32.totalorder %s175, %s189
    %p191 = scmp.eq.s32.totalorder %s20, 0
    %p192 = por %p190, %p191
    %s194 = sadd.s32 %s193, 1
    %p197 = scmp.eq.s32.totalorder %s14, 1
    %p198 = scmp.ne.s32.totalorder %s193, %s195
    %p199 = scmp.eq.s32.totalorder %s14, 0
    %p200 = por %p198, %p199
    %p201 = scmp.ne.s32.totalorder %s193, %s195
    %p202 = scmp.eq.s32.totalorder %s19, 1
    %p203 = por %p201, %p202
    %p204 = scmp.ne.s32.totalorder %s195, %s196
    %p205 = scmp.eq.s32.totalorder %s19, 0
    %p206 = por %p204, %p205
    %p207 = scmp.ne.s32.totalorder %s195, %s196
    %p208 = scmp.eq.s32.totalorder %s20, 1
    %p209 = por %p207, %p208
    %p211 = scmp.ne.s32.totalorder %s196, %s210
    %p212 = scmp.eq.s32.totalorder %s20, 0
    %p213 = por %p211, %p212
    %s214 = ssub.s32 %s22, %s29
    %s215 = ssub.s32 %s21, %s33
    %s216 = sor.u32 %s214, %s215
    %p217 = scmp.eq.s32.totalorder %s216, 0
    %s219 = sadd.s32 %s218, 1
    %s220 = scalar_select %p217, %s218, %s219
    %p223 = pneg %p217
    %p224 = scmp.eq.s32.totalorder %s14, 1
    %p225 = por %p223, %p224
    %p226 = scmp.ne.s32.totalorder %s218, %s221
    %p227 = scmp.eq.s32.totalorder %s14, 0
    %p228 = por %p226, %p227
    %p229 = scmp.ne.s32.totalorder %s218, %s221
    %p230 = scmp.eq.s32.totalorder %s19, 1
    %p231 = por %p229, %p230
    %p232 = scmp.ne.s32.totalorder %s221, %s222
    %p233 = scmp.eq.s32.totalorder %s19, 0
    %p234 = por %p232, %p233
    %p235 = scmp.ne.s32.totalorder %s221, %s222
    %p236 = scmp.eq.s32.totalorder %s20, 1
    %p237 = por %p235, %p236
    %p239 = scmp.ne.s32.totalorder %s222, %s238
    %p240 = scmp.eq.s32.totalorder %s20, 0
    %p241 = por %p239, %p240
    %p242 = scmp.le.s32.totalorder 1, %s14
    %p243 = scmp.lt.s32.totalorder %s14, 3
    %p244 = pnand %p242, %p243
    %p245 = pneg %p244
    // Predicated region
    $region9: #{tpu_custom_call.1} parent=5 // pred_check
      _
    $region10: #{tpu_custom_call.1} parent=5 // pred_check_branch
      %247 = sbr.rel (%p244) target = $region12
    $region11: #{tpu_custom_call.1} parent=5 // pred_region
      %s248 = ssub.s32 %s14, 1
      // Predicated region
      $region13: #{tpu_custom_call.1} parent=11 // pred_check
        %p249 = pneg %p101
      $region14: #{tpu_custom_call.1} parent=11 // pred_check_branch
        %251 = sbr.rel (%p249) target = $region16
      $region15: #{tpu_custom_call.1} parent=11 // pred_region
        _
      $region16: #{tpu_custom_call.1} parent=11 // pred_fallthru
        _
      // Predicated region
      $region17: #{tpu_custom_call.1} parent=11 // pred_check
        %p252 = pneg %p122
      $region18: #{tpu_custom_call.1} parent=11 // pred_check_branch
        %254 = sbr.rel (%p252) target = $region20
      $region19: #{tpu_custom_call.1} parent=11 // pred_region
        _
      $region20: #{tpu_custom_call.1} parent=11 // pred_fallthru
        _
      // Predicated region
      $region21: #{tpu_custom_call.1} parent=11 // pred_check
        %p255 = pneg %p143
      $region22: #{tpu_custom_call.1} parent=11 // pred_check_branch
        %257 = sbr.rel (%p255) target = $region24
      $region23: #{tpu_custom_call.1} parent=11 // pred_region
        _
      $region24: #{tpu_custom_call.1} parent=11 // pred_fallthru
        _
      // Predicated region
      $region25: #{tpu_custom_call.1} parent=11 // pred_check
        %p258 = pneg %p164
      $region26: #{tpu_custom_call.1} parent=11 // pred_check_branch
        %260 = sbr.rel (%p258) target = $region28
      $region27: #{tpu_custom_call.1} parent=11 // pred_region
        _
      $region28: #{tpu_custom_call.1} parent=11 // pred_fallthru
        _
      // Predicated region
      $region29: #{tpu_custom_call.1} parent=11 // pred_check
        %p261 = pneg %p185
      $region30: #{tpu_custom_call.1} parent=11 // pred_check_branch
        %263 = sbr.rel (%p261) target = $region32
      $region31: #{tpu_custom_call.1} parent=11 // pred_region
        _
      $region32: #{tpu_custom_call.1} parent=11 // pred_fallthru
        _
      // Predicated region
      $region33: #{tpu_custom_call.1} parent=11 // pred_check
        %p264 = pneg %p206
      $region34: #{tpu_custom_call.1} parent=11 // pred_check_branch
        %266 = sbr.rel (%p264) target = $region36
      $region35: #{tpu_custom_call.1} parent=11 // pred_region
        _
      $region36: #{tpu_custom_call.1} parent=11 // pred_fallthru
        _
    $region12: #{tpu_custom_call.1} parent=5 // pred_fallthru
      _
    %p267 = scmp.lt.s32.totalorder %s14, 2
    // Predicated region
    $region37: #{tpu_custom_call.1} parent=5 // pred_check
      %p268 = pneg %p267
    $region38: #{tpu_custom_call.1} parent=5 // pred_check_branch
      %270 = sbr.rel (%p268) target = $region40
    $region39: #{tpu_custom_call.1} parent=5 // pred_region
      // Predicated region
      $region41: #{tpu_custom_call.1} parent=39 // pred_check
        %p271 = pneg %p48
      $region42: #{tpu_custom_call.1} parent=39 // pred_check_branch
        %273 = sbr.rel (%p271) target = $region44
      $region43: #{tpu_custom_call.1} parent=39 // pred_region
        %s274 = smul.u32 2, %s21
        %p275 = scmp.lt.s32.totalorder %s22, 1
        %s276 = scalar_select %p275, %s22, 1
        %p277 = scmp.lt.s32.totalorder %s274, 1
        %s278 = scalar_select %p277, %s274, 1
        %s279 = smul.addr %s276, 2
        %s280 = sadd.s32 %s278, %s279
        %s281 = smul.addr %s280, 8
        %s282 = scalar_lea.vmem %s0, %s281
        %s283 = smul.u32 2, %s21
      $region44: #{tpu_custom_call.1} parent=39 // pred_fallthru
        _
      // Predicated region
      $region45: #{tpu_custom_call.1} parent=39 // pred_check
        %p284 = pneg %p74
      $region46: #{tpu_custom_call.1} parent=39 // pred_check_branch
        %286 = sbr.rel (%p284) target = $region48
      $region47: #{tpu_custom_call.1} parent=39 // pred_region
        %p287 = scmp.lt.s32.totalorder %s22, 1
        %s288 = scalar_select %p287, %s22, 1
        %s289 = scalar_lea.vmem %s1, %s288
      $region48: #{tpu_custom_call.1} parent=39 // pred_fallthru
        _
    $region40: #{tpu_custom_call.1} parent=5 // pred_fallthru
      _
    %p290 = scmp.le.s32.totalorder 1, %s14
    %p291 = scmp.lt.s32.totalorder %s14, 3
    %p292 = pnand %p290, %p291
    %p293 = pneg %p292
    // Predicated region
    $region49: #{tpu_custom_call.1} parent=5 // pred_check
      _
    $region50: #{tpu_custom_call.1} parent=5 // pred_check_branch
      %295 = sbr.rel (%p292) target = $region52
    $region51: #{tpu_custom_call.1} parent=5 // pred_region
      %s296 = ssub.s32 %s14, 1
      %s297 = smul.u32 2, %s23
      %p298 = scmp.lt.s32.totalorder %s24, 1
      %s299 = scalar_select %p298, %s24, 1
      %p300 = scmp.lt.s32.totalorder %s297, 1
      %s301 = scalar_select %p300, %s297, 1
      %s302 = smul.addr %s299, 2
      %s303 = sadd.s32 %s301, %s302
      %s304 = smul.addr %s303, 8
      %s305 = scalar_lea.vmem %s0, %s304
      %p306 = pneg %p54
      %p307 = pneg %p51
      %p308 = scmp.lt.s32.totalorder %s24, 1
      %s309 = scalar_select %p308, %s24, 1
      %s310 = scalar_lea.vmem %s1, %s309
      %p311 = pneg %p80
      %p312 = pneg %p77
      %p313 = pneg %p101
      %p314 = pneg %p98
      %p315 = pneg %p122
      %p316 = pneg %p119
      %p317 = pneg %p143
      %p318 = pneg %p140
      %p319 = pneg %p164
      %p320 = pneg %p161
      %p321 = pneg %p185
      %p322 = pneg %p182
      %p323 = pneg %p206
      %p324 = pneg %p203
      %p325 = pneg %p234
      %p326 = pneg %p231
      %s327 = smul.u32 2, %s23
      %p328 = scmp.lt.s32.totalorder %s24, 1
      %s329 = scalar_select %p328, %s24, 1
      %p330 = scmp.lt.s32.totalorder %s327, 1
      %s331 = scalar_select %p330, %s327, 1
      %s332 = smul.addr %s329, 8
      %s333 = sadd.s32 %s331, %s332
      %s334 = smul.addr %s333, 8
      %s335 = scalar_lea.vmem %s8, %s334
      %s336 = smul.u32 2, %s23
      %p337 = scmp.lt.s32.totalorder %s24, 1
      %s338 = scalar_select %p337, %s24, 1
      %p339 = scmp.lt.s32.totalorder %s336, 1
      %s340 = scalar_select %p339, %s336, 1
      %s341 = smul.addr %s338, 2
      %s342 = sadd.s32 %s340, %s341
      %s343 = smul.addr %s342, 8
      %s344 = scalar_lea.vmem %s0, %s343
      %s345 = smul.u32 2, %s23
      %p346 = scmp.lt.s32.totalorder %s24, 1
      %s347 = scalar_select %p346, %s24, 1
      %s348 = scalar_lea.vmem %s1, %s347
      %s349 = smul.u32 2, %s23
      %p350 = scmp.lt.s32.totalorder %s24, 1
      %s351 = scalar_select %p350, %s24, 1
      %p352 = scmp.lt.s32.totalorder %s349, 1
      %s353 = scalar_select %p352, %s349, 1
      %s354 = smul.addr %s351, 8
      %s355 = sadd.s32 %s353, %s354
      %s356 = smul.addr %s355, 8
      %s357 = scalar_lea.vmem %s8, %s356
      %s358 = smul.u32 2, %s23
      %v360 = vld [vmem:[%s344] sm:$0xff]
      %v361 = vld [vmem:[%s344 + $0x8] sm:$0xff]
      %v362 = vld [vmem:[%s348] sm:$0x1]
      %v363 = vld [vmem:[%s2] sm:$0xf]
      %v364 = vld [vmem:[%s2 + $0x4] sm:$0xf]
      %v365 = vld [vmem:[%s2 + $0x8] sm:$0xf]
      %v366 = vld [vmem:[%s2 + $0xc] sm:$0xf]
      %v367 = vld [vmem:[%s3] sm:$0xff]
      %v368 = vld [vmem:[%s3 + $0x8] sm:$0xff]
      %v369 = vld [vmem:[%s3 + $0x10] sm:$0xff]
      %v370 = vld [vmem:[%s3 + $0x18] sm:$0xff]
      %v371 = vld [vmem:[%s4] sm:$0xf]
      %v372 = vld [vmem:[%s4 + $0x4] sm:$0xf]
      %v373 = vld [vmem:[%s4 + $0x8] sm:$0xf]
      %v374 = vld [vmem:[%s4 + $0xc] sm:$0xf]
      %v375 = vld [vmem:[%s5] sm:$0xff]
      %v376 = vld [vmem:[%s5 + $0x8] sm:$0xff]
      %v377 = vld [vmem:[%s5 + $0x10] sm:$0xff]
      %v378 = vld [vmem:[%s5 + $0x18] sm:$0xff]
      %v379 = vld [vmem:[%s6] sm:$0x3]
      %v380 = vld [vmem:[%s7] sm:$0xf]
      %v381 = vlaneseq
      %v382 = vand.u32 %v381, 127
      %v383 = vcvt.s32.f32 %v382
      %vm384 = vcmp.ge.s32.totalorder %v382, 1
      %s385 = smul.u32 %s23, 16
      %387 = vset.pattern.permute.xlu0 0
      %388 = vperm.xlu0 %387, %v360
      %v389 = vpop.permute.xlu0 %388
      %v391 = vsub.f32 %v389, %v362
      %s392 = scvt.s32.f32 %s385
      %v393 = vstv %s392
      %v394 = vsub.f32 %v393, %v383
      %v395 = vmul.f32 %v394, 0.001953125
      %v396 = vfloor.f32 %v395
      %v397 = vsub.f32 %v395, %v396
      %v398 = vfloor.f32 %v391
      %v399 = vsub.f32 %v391, %v398
      %v400 = vmul.f32 %v391, 0.041666668
      %v401 = vfloor.f32 %v400
      %v402 = vsub.f32 %v400, %v401
      %v403 = vmul.f32 %v391, 0.005952381
      %v404 = vfloor.f32 %v403
      %v405 = vsub.f32 %v403, %v404
      %v407 = vrot.slane %v399, 7
      %v410 = vrot.slane %v402, 6
      %v413 = vrot.slane %v405, 5
      %vm415 = vcmask 1040384
      %v416 = vsel %vm415, %v397, %v407
      %vm417 = vcmask 1041408
      %v418 = vsel %vm417, %v416, %v410
      %vm419 = vcmask 1042432
      %v420 = vsel %vm419, %v418, %v413
      %v421 = vpack.c.bf16 %v420, %v420
      %423 = vset.pattern.permute.xlu0 0
      %424 = vperm.xlu0 %423, %v367
      %v425 = vpop.permute.xlu0 %424
      %428 = vset.pattern.permute.xlu0 0
      %429 = vperm.xlu0 %428, %v368
      %v430 = vpop.permute.xlu0 %429
      %433 = vset.pattern.permute.xlu0 0
      %434 = vperm.xlu0 %433, %v369
      %v435 = vpop.permute.xlu0 %434
      %438 = vset.pattern.permute.xlu0 0
      %439 = vperm.xlu0 %438, %v370
      %v440 = vpop.permute.xlu0 %439
      %v446 = vunpack.c.l.b16 %v363
      %v447 = vunpack.c.l.b16 %v364
      %v448 = vunpack.c.l.b16 %v365
      %v449 = vunpack.c.l.b16 %v366
      %v450 = vpack.c.b16 %v447, %v446
      %v451 = vpack.c.b16 %v449, %v448
      %vm452 = vcmask 31744
      %v454 = vsel %vm452, %v450, 0
      %v457 = vsel %vm452, %v451, 0
      %v460 = vsel %vm417, %v421, 0
      %462 = vmatpush.bf16.msra.mxu0 0
      %463 = vmatpush.bf16.msra.mxu0 0
      %464 = vmatpush.bf16.msra.mxu0 0
      %465 = vmatpush.bf16.msra.mxu0 0
      %466 = vmatpush.bf16.msra.mxu0 0
      %467 = vmatpush.bf16.msra.mxu0 0
      %468 = vmatpush.bf16.msra.mxu0 0
      %469 = vmatpush.bf16.msra.mxu0 %v460
      %470 = vmatmul.bf16.gmra.mxu0 %v454
      %v471 = vpop.f32.mrf.mxu0
      %v472 = vadd.f32 %v425, %v471
      %v473 = vpop.f32.mrf.mxu0
      %v474 = vadd.f32 %v430, %v473
      %475 = vmatmul.bf16.gmra.mxu0 %v457
      %v476 = vpop.f32.mrf.mxu0
      %v477 = vadd.f32 %v435, %v476
      %v478 = vpop.f32.mrf.mxu0
      %v479 = vadd.f32 %v440, %v478
      %480 = vdwg.mxu0
      %v481 = vpack.c.bf16 %v472, %v472
      %v482 = vpack.c.bf16 %v474, %v474
      %v483 = vpack.c.bf16 %v477, %v477
      %v484 = vpack.c.bf16 %v479, %v479
      %v485 = vunpack.c.l.bf16 %v481
      %v486 = vunpack.c.l.bf16 %v482
      %v487 = vunpack.c.l.bf16 %v483
      %v488 = vunpack.c.l.bf16 %v484
      %v489 = vmul.f32 %v485, 0.5
      %v490 = vmul.f32 %v486, 0.5
      %v491 = vmul.f32 %v487, 0.5
      %v492 = vmul.f32 %v488, 0.5
      %v493 = vpack.c.bf16 %v489, %v489
      %v494 = vpack.c.bf16 %v490, %v490
      %v495 = vpack.c.bf16 %v491, %v491
      %v496 = vpack.c.bf16 %v492, %v492
      %v497 = vunpack.c.l.bf16 %v493
      %v498 = vunpack.c.l.bf16 %v494
      %v499 = vunpack.c.l.bf16 %v495
      %v500 = vunpack.c.l.bf16 %v496
      %v501 = vtanh.pop %v497
      %v502 = vtanh.pop %v498
      %v503 = vtanh.pop %v499
      %v504 = vtanh.pop %v500
      %v505 = vpack.c.bf16 %v501, %v501
      %v506 = vpack.c.bf16 %v502, %v502
      %v507 = vpack.c.bf16 %v503, %v503
      %v508 = vpack.c.bf16 %v504, %v504
      %v509 = vunpack.c.l.bf16 %v505
      %v510 = vunpack.c.l.bf16 %v506
      %v511 = vunpack.c.l.bf16 %v507
      %v512 = vunpack.c.l.bf16 %v508
      %v513 = vmul.f32 %v497, %v509
      %v514 = vmul.f32 %v498, %v510
      %v515 = vmul.f32 %v499, %v511
      %v516 = vmul.f32 %v500, %v512
      %v517 = vpack.c.bf16 %v513, %v513
      %v518 = vpack.c.bf16 %v514, %v514
      %v519 = vpack.c.bf16 %v515, %v515
      %v520 = vpack.c.bf16 %v516, %v516
      %v521 = vunpack.c.l.bf16 %v517
      %v522 = vunpack.c.l.bf16 %v518
      %v523 = vunpack.c.l.bf16 %v519
      %v524 = vunpack.c.l.bf16 %v520
      %v525 = vadd.f32 %v497, %v521
      %v526 = vadd.f32 %v498, %v522
      %v527 = vadd.f32 %v499, %v523
      %v528 = vadd.f32 %v500, %v524
      %v529 = vpack.c.bf16 %v526, %v525
      %v530 = vpack.c.bf16 %v528, %v527
      %532 = vset.pattern.permute.xlu0 0
      %533 = vperm.xlu0 %532, %v375
      %v534 = vpop.permute.xlu0 %533
      %537 = vset.pattern.permute.xlu0 0
      %538 = vperm.xlu0 %537, %v376
      %v539 = vpop.permute.xlu0 %538
      %542 = vset.pattern.permute.xlu0 0
      %543 = vperm.xlu0 %542, %v377
      %v544 = vpop.permute.xlu0 %543
      %547 = vset.pattern.permute.xlu0 0
      %548 = vperm.xlu0 %547, %v378
      %v549 = vpop.permute.xlu0 %548
      %v555 = vunpack.c.l.b16 %v371
      %v556 = vunpack.c.l.b16 %v372
      %v557 = vunpack.c.l.b16 %v373
      %v558 = vunpack.c.l.b16 %v374
      %v559 = vpack.c.b16 %v556, %v555
      %v560 = vpack.c.b16 %v558, %v557
      %vm561 = vcmask 261120
      %v563 = vsel %vm561, %v559, 0
      %v566 = vsel %vm561, %v560, 0
      %568 = vmatpush.bf16.msra.mxu0 0
      %569 = vmatpush.bf16.msra.mxu0 0
      %570 = vmatpush.bf16.msra.mxu0 0
      %571 = vmatpush.bf16.msra.mxu0 0
      %572 = vmatpush.bf16.msra.mxu0 0
      %573 = vmatpush.bf16.msra.mxu0 0
      %574 = vmatpush.bf16.msra.mxu0 %v530
      %575 = vmatpush.bf16.msra.mxu0 %v529
      %576 = vmatmul.bf16.gmra.mxu0 %v563
      %v577 = vpop.f32.mrf.mxu0
      %v578 = vadd.f32 %v534, %v577
      %v579 = vpop.f32.mrf.mxu0
      %v580 = vadd.f32 %v539, %v579
      %581 = vmatmul.bf16.gmra.mxu0 %v566
      %v582 = vpop.f32.mrf.mxu0
      %v583 = vadd.f32 %v544, %v582
      %v584 = vpop.f32.mrf.mxu0
      %v585 = vadd.f32 %v549, %v584
      %586 = vdwg.mxu0
      %v587 = vpack.c.bf16 %v578, %v578
      %v588 = vpack.c.bf16 %v580, %v580
      %v589 = vpack.c.bf16 %v583, %v583
      %v590 = vpack.c.bf16 %v585, %v585
      %v591 = vunpack.c.l.bf16 %v587
      %v592 = vunpack.c.l.bf16 %v588
      %v593 = vunpack.c.l.bf16 %v589
      %v594 = vunpack.c.l.bf16 %v590
      %v595 = vmul.f32 %v591, 0.5
      %v596 = vmul.f32 %v592, 0.5
      %v597 = vmul.f32 %v593, 0.5
      %v598 = vmul.f32 %v594, 0.5
      %v599 = vpack.c.bf16 %v595, %v595
      %v600 = vpack.c.bf16 %v596, %v596
      %v601 = vpack.c.bf16 %v597, %v597
      %v602 = vpack.c.bf16 %v598, %v598
      %v603 = vunpack.c.l.bf16 %v599
      %v604 = vunpack.c.l.bf16 %v600
      %v605 = vunpack.c.l.bf16 %v601
      %v606 = vunpack.c.l.bf16 %v602
      %v607 = vtanh.pop %v603
      %v608 = vtanh.pop %v604
      %v609 = vtanh.pop %v605
      %v610 = vtanh.pop %v606
      %v611 = vpack.c.bf16 %v607, %v607
      %v612 = vpack.c.bf16 %v608, %v608
      %v613 = vpack.c.bf16 %v609, %v609
      %v614 = vpack.c.bf16 %v610, %v610
      %v615 = vunpack.c.l.bf16 %v611
      %v616 = vunpack.c.l.bf16 %v612
      %v617 = vunpack.c.l.bf16 %v613
      %v618 = vunpack.c.l.bf16 %v614
      %v619 = vmul.f32 %v603, %v615
      %v620 = vmul.f32 %v604, %v616
      %v621 = vmul.f32 %v605, %v617
      %v622 = vmul.f32 %v606, %v618
      %v623 = vpack.c.bf16 %v619, %v619
      %v624 = vpack.c.bf16 %v620, %v620
      %v625 = vpack.c.bf16 %v621, %v621
      %v626 = vpack.c.bf16 %v622, %v622
      %v627 = vunpack.c.l.bf16 %v623
      %v628 = vunpack.c.l.bf16 %v624
      %v629 = vunpack.c.l.bf16 %v625
      %v630 = vunpack.c.l.bf16 %v626
      %v631 = vadd.f32 %v603, %v627
      %v632 = vadd.f32 %v604, %v628
      %v633 = vadd.f32 %v605, %v629
      %v634 = vadd.f32 %v606, %v630
      %v635 = vpack.c.bf16 %v632, %v631
      %v636 = vpack.c.bf16 %v634, %v633
      %638 = vset.pattern.permute.xlu0 0
      %639 = vperm.xlu0 %638, %v380
      %v640 = vpop.permute.xlu0 %639
      %v643 = vsel %vm561, %v379, 0
      %645 = vmatpush.bf16.msra.mxu0 0
      %646 = vmatpush.bf16.msra.mxu0 0
      %647 = vmatpush.bf16.msra.mxu0 0
      %648 = vmatpush.bf16.msra.mxu0 0
      %649 = vmatpush.bf16.msra.mxu0 0
      %650 = vmatpush.bf16.msra.mxu0 0
      %651 = vmatpush.bf16.msra.mxu0 %v636
      %652 = vmatpush.bf16.msra.mxu0 %v635
      %653 = vmatmul.bf16.gmra.mxu0 %v643
      %v654 = vpop.f32.mrf.mxu0
      %v655 = vadd.f32 %v640, %v654
      %v656 = vpop.f32.mrf.mxu0
      %657 = vdwg.mxu0
      %p658 = scmp.ge.s32.totalorder %s385, 1
      %s659 = scalar_select %p658, 1, 0
      %v660 = vstv %s659
      %vm661 = vcmp.eq.s32.totalorder %v660, 1
      %vm662 = vmand %vm661, %vm384
      %v663 = vsel %vm662, 1, 0
      %vm664 = vcmp.eq.s32.totalorder %v663, 1
      %v665 = vsel %vm664, %v655, 0.0
      %v667 = vrot.slane %v665, 1
      %v668 = vrot.slane %v665, 2
      %v669 = vrot.slane %v665, 3
      %vm673 = vcmask 65536
      %674 = vst.msk [vmem:[%s357] sm:$0x1] %vm673, %v665
      %675 = vst.msk [vmem:[%s357 + $0x10] sm:$0x1] %vm673, %v667
      %676 = vst.msk [vmem:[%s357 + $0x20] sm:$0x1] %vm673, %v668
      %677 = vst.msk [vmem:[%s357 + $0x30] sm:$0x1] %vm673, %v669
      %s678 = sadd.s32 %s385, 1
      %v680 = vperm.slane %v362, 0
      %v682 = vsub.f32 %v389, %v680
      %s683 = scvt.s32.f32 %s678
      %v684 = vstv %s683
      %v685 = vsub.f32 %v684, %v383
      %v686 = vmul.f32 %v685, 0.001953125
      %v687 = vfloor.f32 %v686
      %v688 = vsub.f32 %v686, %v687
      %v689 = vfloor.f32 %v682
      %v690 = vsub.f32 %v682, %v689
      %v691 = vmul.f32 %v682, 0.041666668
      %v692 = vfloor.f32 %v691
      %v693 = vsub.f32 %v691, %v692
      %v694 = vmul.f32 %v682, 0.005952381
      %v695 = vfloor.f32 %v694
      %v696 = vsub.f32 %v694, %v695
      %v698 = vrot.slane %v693, 7
      %v701 = vrot.slane %v696, 6
      %v703 = vsel %vm415, %v688, %v690
      %v704 = vsel %vm417, %v703, %v698
      %v705 = vsel %vm419, %v704, %v701
      %v706 = vpack.c.bf16 %v705, %v705
      %v708 = vsel %vm417, %v706, 0
      %710 = vmatpush.bf16.msra.mxu0 0
      %711 = vmatpush.bf16.msra.mxu0 0
      %712 = vmatpush.bf16.msra.mxu0 0
      %713 = vmatpush.bf16.msra.mxu0 0
      %714 = vmatpush.bf16.msra.mxu0 0
      %715 = vmatpush.bf16.msra.mxu0 0
      %716 = vmatpush.bf16.msra.mxu0 0
      %717 = vmatpush.bf16.msra.mxu0 %v708
      %718 = vmatmul.bf16.gmra.mxu0 %v454
      %v719 = vpop.f32.mrf.mxu0
      %v720 = vadd.f32 %v425, %v719
      %v721 = vpop.f32.mrf.mxu0
      %v722 = vadd.f32 %v430, %v721
      %723 = vmatmul.bf16.gmra.mxu0 %v457
      %v724 = vpop.f32.mrf.mxu0
      %v725 = vadd.f32 %v435, %v724
      %v726 = vpop.f32.mrf.mxu0
      %v727 = vadd.f32 %v440, %v726
      %728 = vdwg.mxu0
      %v729 = vpack.c.bf16 %v720, %v720
      %v730 = vpack.c.bf16 %v722, %v722
      %v731 = vpack.c.bf16 %v725, %v725
      %v732 = vpack.c.bf16 %v727, %v727
      %v733 = vunpack.c.l.bf16 %v729
      %v734 = vunpack.c.l.bf16 %v730
      %v735 = vunpack.c.l.bf16 %v731
      %v736 = vunpack.c.l.bf16 %v732
      %v737 = vmul.f32 %v733, 0.5
      %v738 = vmul.f32 %v734, 0.5
      %v739 = vmul.f32 %v735, 0.5
      %v740 = vmul.f32 %v736, 0.5
      %v741 = vpack.c.bf16 %v737, %v737
      %v742 = vpack.c.bf16 %v738, %v738
      %v743 = vpack.c.bf16 %v739, %v739
      %v744 = vpack.c.bf16 %v740, %v740
      %v745 = vunpack.c.l.bf16 %v741
      %v746 = vunpack.c.l.bf16 %v742
      %v747 = vunpack.c.l.bf16 %v743
      %v748 = vunpack.c.l.bf16 %v744
      %v749 = vtanh.pop %v745
      %v750 = vtanh.pop %v746
      %v751 = vtanh.pop %v747
      %v752 = vtanh.pop %v748
      %v753 = vpack.c.bf16 %v749, %v749
      %v754 = vpack.c.bf16 %v750, %v750
      %v755 = vpack.c.bf16 %v751, %v751
      %v756 = vpack.c.bf16 %v752, %v752
      %v757 = vunpack.c.l.bf16 %v753
      %v758 = vunpack.c.l.bf16 %v754
      %v759 = vunpack.c.l.bf16 %v755
      %v760 = vunpack.c.l.bf16 %v756
      %v761 = vmul.f32 %v745, %v757
      %v762 = vmul.f32 %v746, %v758
      %v763 = vmul.f32 %v747, %v759
      %v764 = vmul.f32 %v748, %v760
      %v765 = vpack.c.bf16 %v761, %v761
      %v766 = vpack.c.bf16 %v762, %v762
      %v767 = vpack.c.bf16 %v763, %v763
      %v768 = vpack.c.bf16 %v764, %v764
      %v769 = vunpack.c.l.bf16 %v765
      %v770 = vunpack.c.l.bf16 %v766
      %v771 = vunpack.c.l.bf16 %v767
      %v772 = vunpack.c.l.bf16 %v768
      %v773 = vadd.f32 %v745, %v769
      %v774 = vadd.f32 %v746, %v770
      %v775 = vadd.f32 %v747, %v771
      %v776 = vadd.f32 %v748, %v772
      %v777 = vpack.c.bf16 %v774, %v773
      %v778 = vpack.c.bf16 %v776, %v775
      %779 = vmatpush.bf16.msra.mxu0 0
      %780 = vmatpush.bf16.msra.mxu0 0
      %781 = vmatpush.bf16.msra.mxu0 0
      %782 = vmatpush.bf16.msra.mxu0 0
      %783 = vmatpush.bf16.msra.mxu0 0
      %784 = vmatpush.bf16.msra.mxu0 0
      %785 = vmatpush.bf16.msra.mxu0 %v778
      %786 = vmatpush.bf16.msra.mxu0 %v777
      %787 = vmatmul.bf16.gmra.mxu0 %v563
      %v788 = vpop.f32.mrf.mxu0
      %v789 = vadd.f32 %v534, %v788
      %v790 = vpop.f32.mrf.mxu0
      %v791 = vadd.f32 %v539, %v790
      %792 = vmatmul.bf16.gmra.mxu0 %v566
      %v793 = vpop.f32.mrf.mxu0
      %v794 = vadd.f32 %v544, %v793
      %v795 = vpop.f32.mrf.mxu0
      %v796 = vadd.f32 %v549, %v795
      %797 = vdwg.mxu0
      %v798 = vpack.c.bf16 %v789, %v789
      %v799 = vpack.c.bf16 %v791, %v791
      %v800 = vpack.c.bf16 %v794, %v794
      %v801 = vpack.c.bf16 %v796, %v796
      %v802 = vunpack.c.l.bf16 %v798
      %v803 = vunpack.c.l.bf16 %v799
      %v804 = vunpack.c.l.bf16 %v800
      %v805 = vunpack.c.l.bf16 %v801
      %v806 = vmul.f32 %v802, 0.5
      %v807 = vmul.f32 %v803, 0.5
      %v808 = vmul.f32 %v804, 0.5
      %v809 = vmul.f32 %v805, 0.5
      %v810 = vpack.c.bf16 %v806, %v806
      %v811 = vpack.c.bf16 %v807, %v807
      %v812 = vpack.c.bf16 %v808, %v808
      %v813 = vpack.c.bf16 %v809, %v809
      %v814 = vunpack.c.l.bf16 %v810
      %v815 = vunpack.c.l.bf16 %v811
      %v816 = vunpack.c.l.bf16 %v812
      %v817 = vunpack.c.l.bf16 %v813
      %v818 = vtanh.pop %v814
      %v819 = vtanh.pop %v815
      %v820 = vtanh.pop %v816
      %v821 = vtanh.pop %v817
      %v822 = vpack.c.bf16 %v818, %v818
      %v823 = vpack.c.bf16 %v819, %v819
      %v824 = vpack.c.bf16 %v820, %v820
      %v825 = vpack.c.bf16 %v821, %v821
      %v826 = vunpack.c.l.bf16 %v822
      %v827 = vunpack.c.l.bf16 %v823
      %v828 = vunpack.c.l.bf16 %v824
      %v829 = vunpack.c.l.bf16 %v825
      %v830 = vmul.f32 %v814, %v826
      %v831 = vmul.f32 %v815, %v827
      %v832 = vmul.f32 %v816, %v828
      %v833 = vmul.f32 %v817, %v829
      %v834 = vpack.c.bf16 %v830, %v830
      %v835 = vpack.c.bf16 %v831, %v831
      %v836 = vpack.c.bf16 %v832, %v832
      %v837 = vpack.c.bf16 %v833, %v833
      %v838 = vunpack.c.l.bf16 %v834
      %v839 = vunpack.c.l.bf16 %v835
      %v840 = vunpack.c.l.bf16 %v836
      %v841 = vunpack.c.l.bf16 %v837
      %v842 = vadd.f32 %v814, %v838
      %v843 = vadd.f32 %v815, %v839
      %v844 = vadd.f32 %v816, %v840
      %v845 = vadd.f32 %v817, %v841
      %v846 = vpack.c.bf16 %v843, %v842
      %v847 = vpack.c.bf16 %v845, %v844
      %848 = vmatpush.bf16.msra.mxu0 0
      %849 = vmatpush.bf16.msra.mxu0 0
      %850 = vmatpush.bf16.msra.mxu0 0
      %851 = vmatpush.bf16.msra.mxu0 0
      %852 = vmatpush.bf16.msra.mxu0 0
      %853 = vmatpush.bf16.msra.mxu0 0
      %854 = vmatpush.bf16.msra.mxu0 %v847
      %855 = vmatpush.bf16.msra.mxu0 %v846
      %856 = vmatmul.bf16.gmra.mxu0 %v643
      %v857 = vpop.f32.mrf.mxu0
      %v858 = vadd.f32 %v640, %v857
      %v859 = vpop.f32.mrf.mxu0
      %860 = vdwg.mxu0
      %p861 = scmp.ge.s32.totalorder %s678, 1
      %s862 = scalar_select %p861, 1, 0
      %v863 = vstv %s862
      %vm864 = vcmp.eq.s32.totalorder %v863, 1
      %vm865 = vmand %vm864, %vm384
      %v866 = vsel %vm865, 1, 0
      %vm867 = vcmp.eq.s32.totalorder %v866, 1
      %v868 = vsel %vm867, %v858, 0.0
      %v870 = vrot.slane %v868, 1
      %v871 = vrot.slane %v868, 2
      %v872 = vrot.slane %v868, 3
      %876 = vst.msk [vmem:[%s357 + $0x1] sm:$0x1] %vm673, %v868
      %877 = vst.msk [vmem:[%s357 + $0x11] sm:$0x1] %vm673, %v870
      %878 = vst.msk [vmem:[%s357 + $0x21] sm:$0x1] %vm673, %v871
      %879 = vst.msk [vmem:[%s357 + $0x31] sm:$0x1] %vm673, %v872
      %s880 = sadd.s32 %s385, 2
      %s881 = scvt.s32.f32 %s880
      %v882 = vstv %s881
      %v883 = vsub.f32 %v882, %v383
      %v884 = vmul.f32 %v883, 0.001953125
      %v885 = vfloor.f32 %v884
      %v886 = vsub.f32 %v884, %v885
      %v888 = vrot.slane %v690, 1
      %v890 = vrot.slane %v696, 7
      %v892 = vsel %vm415, %v886, %v888
      %v893 = vsel %vm417, %v892, %v693
      %v894 = vsel %vm419, %v893, %v890
      %v895 = vpack.c.bf16 %v894, %v894
      %v897 = vsel %vm417, %v895, 0
      %899 = vmatpush.bf16.msra.mxu0 0
      %900 = vmatpush.bf16.msra.mxu0 0
      %901 = vmatpush.bf16.msra.mxu0 0
      %902 = vmatpush.bf16.msra.mxu0 0
      %903 = vmatpush.bf16.msra.mxu0 0
      %904 = vmatpush.bf16.msra.mxu0 0
      %905 = vmatpush.bf16.msra.mxu0 0
      %906 = vmatpush.bf16.msra.mxu0 %v897
      %907 = vmatmul.bf16.gmra.mxu0 %v454
      %v908 = vpop.f32.mrf.mxu0
      %v909 = vadd.f32 %v425, %v908
      %v910 = vpop.f32.mrf.mxu0
      %v911 = vadd.f32 %v430, %v910
      %912 = vmatmul.bf16.gmra.mxu0 %v457
      %v913 = vpop.f32.mrf.mxu0
      %v914 = vadd.f32 %v435, %v913
      %v915 = vpop.f32.mrf.mxu0
      %v916 = vadd.f32 %v440, %v915
      %917 = vdwg.mxu0
      %v918 = vpack.c.bf16 %v909, %v909
      %v919 = vpack.c.bf16 %v911, %v911
      %v920 = vpack.c.bf16 %v914, %v914
      %v921 = vpack.c.bf16 %v916, %v916
      %v922 = vunpack.c.l.bf16 %v918
      %v923 = vunpack.c.l.bf16 %v919
      %v924 = vunpack.c.l.bf16 %v920
      %v925 = vunpack.c.l.bf16 %v921
      %v926 = vmul.f32 %v922, 0.5
      %v927 = vmul.f32 %v923, 0.5
      %v928 = vmul.f32 %v924, 0.5
      %v929 = vmul.f32 %v925, 0.5
      %v930 = vpack.c.bf16 %v926, %v926
      %v931 = vpack.c.bf16 %v927, %v927
      %v932 = vpack.c.bf16 %v928, %v928
      %v933 = vpack.c.bf16 %v929, %v929
      %v934 = vunpack.c.l.bf16 %v930
      %v935 = vunpack.c.l.bf16 %v931
      %v936 = vunpack.c.l.bf16 %v932
      %v937 = vunpack.c.l.bf16 %v933
      %v938 = vtanh.pop %v934
      %v939 = vtanh.pop %v935
      %v940 = vtanh.pop %v936
      %v941 = vtanh.pop %v937
      %v942 = vpack.c.bf16 %v938, %v938
      %v943 = vpack.c.bf16 %v939, %v939
      %v944 = vpack.c.bf16 %v940, %v940
      %v945 = vpack.c.bf16 %v941, %v941
      %v946 = vunpack.c.l.bf16 %v942
      %v947 = vunpack.c.l.bf16 %v943
      %v948 = vunpack.c.l.bf16 %v944
      %v949 = vunpack.c.l.bf16 %v945
      %v950 = vmul.f32 %v934, %v946
      %v951 = vmul.f32 %v935, %v947
      %v952 = vmul.f32 %v936, %v948
      %v953 = vmul.f32 %v937, %v949
      %v954 = vpack.c.bf16 %v950, %v950
      %v955 = vpack.c.bf16 %v951, %v951
      %v956 = vpack.c.bf16 %v952, %v952
      %v957 = vpack.c.bf16 %v953, %v953
      %v958 = vunpack.c.l.bf16 %v954
      %v959 = vunpack.c.l.bf16 %v955
      %v960 = vunpack.c.l.bf16 %v956
      %v961 = vunpack.c.l.bf16 %v957
      %v962 = vadd.f32 %v934, %v958
      %v963 = vadd.f32 %v935, %v959
      %v964 = vadd.f32 %v936, %v960
      %v965 = vadd.f32 %v937, %v961
      %v966 = vpack.c.bf16 %v963, %v962
      %v967 = vpack.c.bf16 %v965, %v964
      %968 = vmatpush.bf16.msra.mxu0 0
      %969 = vmatpush.bf16.msra.mxu0 0
      %970 = vmatpush.bf16.msra.mxu0 0
      %971 = vmatpush.bf16.msra.mxu0 0
      %972 = vmatpush.bf16.msra.mxu0 0
      %973 = vmatpush.bf16.msra.mxu0 0
      %974 = vmatpush.bf16.msra.mxu0 %v967
      %975 = vmatpush.bf16.msra.mxu0 %v966
      %976 = vmatmul.bf16.gmra.mxu0 %v563
      %v977 = vpop.f32.mrf.mxu0
      %v978 = vadd.f32 %v534, %v977
      %v979 = vpop.f32.mrf.mxu0
      %v980 = vadd.f32 %v539, %v979
      %981 = vmatmul.bf16.gmra.mxu0 %v566
      %v982 = vpop.f32.mrf.mxu0
      %v983 = vadd.f32 %v544, %v982
      %v984 = vpop.f32.mrf.mxu0
      %v985 = vadd.f32 %v549, %v984
      %986 = vdwg.mxu0
      %v987 = vpack.c.bf16 %v978, %v978
      %v988 = vpack.c.bf16 %v980, %v980
      %v989 = vpack.c.bf16 %v983, %v983
      %v990 = vpack.c.bf16 %v985, %v985
      %v991 = vunpack.c.l.bf16 %v987
      %v992 = vunpack.c.l.bf16 %v988
      %v993 = vunpack.c.l.bf16 %v989
      %v994 = vunpack.c.l.bf16 %v990
      %v995 = vmul.f32 %v991, 0.5
      %v996 = vmul.f32 %v992, 0.5
      %v997 = vmul.f32 %v993, 0.5
      %v998 = vmul.f32 %v994, 0.5
      %v999 = vpack.c.bf16 %v995, %v995
      %v1000 = vpack.c.bf16 %v996, %v996
      %v1001 = vpack.c.bf16 %v997, %v997
      %v1002 = vpack.c.bf16 %v998, %v998
      %v1003 = vunpack.c.l.bf16 %v999
      %v1004 = vunpack.c.l.bf16 %v1000
      %v1005 = vunpack.c.l.bf16 %v1001
      %v1006 = vunpack.c.l.bf16 %v1002
      %v1007 = vtanh.pop %v1003
      %v1008 = vtanh.pop %v1004
      %v1009 = vtanh.pop %v1005
      %v1010 = vtanh.pop %v1006
      %v1011 = vpack.c.bf16 %v1007, %v1007
      %v1012 = vpack.c.bf16 %v1008, %v1008
      %v1013 = vpack.c.bf16 %v1009, %v1009
      %v1014 = vpack.c.bf16 %v1010, %v1010
      %v1015 = vunpack.c.l.bf16 %v1011
      %v1016 = vunpack.c.l.bf16 %v1012
      %v1017 = vunpack.c.l.bf16 %v1013
      %v1018 = vunpack.c.l.bf16 %v1014
      %v1019 = vmul.f32 %v1003, %v1015
      %v1020 = vmul.f32 %v1004, %v1016
      %v1021 = vmul.f32 %v1005, %v1017
      %v1022 = vmul.f32 %v1006, %v1018
      %v1023 = vpack.c.bf16 %v1019, %v1019
      %v1024 = vpack.c.bf16 %v1020, %v1020
      %v1025 = vpack.c.bf16 %v1021, %v1021
      %v1026 = vpack.c.bf16 %v1022, %v1022
      %v1027 = vunpack.c.l.bf16 %v1023
      %v1028 = vunpack.c.l.bf16 %v1024
      %v1029 = vunpack.c.l.bf16 %v1025
      %v1030 = vunpack.c.l.bf16 %v1026
      %v1031 = vadd.f32 %v1003, %v1027
      %v1032 = vadd.f32 %v1004, %v1028
      %v1033 = vadd.f32 %v1005, %v1029
      %v1034 = vadd.f32 %v1006, %v1030
      %v1035 = vpack.c.bf16 %v1032, %v1031
      %v1036 = vpack.c.bf16 %v1034, %v1033
      %1037 = vmatpush.bf16.msra.mxu0 0
      %1038 = vmatpush.bf16.msra.mxu0 0
      %1039 = vmatpush.bf16.msra.mxu0 0
      %1040 = vmatpush.bf16.msra.mxu0 0
      %1041 = vmatpush.bf16.msra.mxu0 0
      %1042 = vmatpush.bf16.msra.mxu0 0
      %1043 = vmatpush.bf16.msra.mxu0 %v1036
      %1044 = vmatpush.bf16.msra.mxu0 %v1035
      %1045 = vmatmul.bf16.gmra.mxu0 %v643
      %v1046 = vpop.f32.mrf.mxu0
      %v1047 = vadd.f32 %v640, %v1046
      %v1048 = vpop.f32.mrf.mxu0
      %1049 = vdwg.mxu0
      %p1050 = scmp.ge.s32.totalorder %s880, 1
      %s1051 = scalar_select %p1050, 1, 0
      %v1052 = vstv %s1051
      %vm1053 = vcmp.eq.s32.totalorder %v1052, 1
      %vm1054 = vmand %vm1053, %vm384
      %v1055 = vsel %vm1054, 1, 0
      %vm1056 = vcmp.eq.s32.totalorder %v1055, 1
      %v1057 = vsel %vm1056, %v1047, 0.0
      %v1059 = vrot.slane %v1057, 1
      %v1060 = vrot.slane %v1057, 2
      %v1061 = vrot.slane %v1057, 3
      %1065 = vst.msk [vmem:[%s357 + $0x2] sm:$0x1] %vm673, %v1057
      %1066 = vst.msk [vmem:[%s357 + $0x12] sm:$0x1] %vm673, %v1059
      %1067 = vst.msk [vmem:[%s357 + $0x22] sm:$0x1] %vm673, %v1060
      %1068 = vst.msk [vmem:[%s357 + $0x32] sm:$0x1] %vm673, %v1061
      %s1069 = sadd.s32 %s385, 3
      %s1070 = scvt.s32.f32 %s1069
      %v1071 = vstv %s1070
      %v1072 = vsub.f32 %v1071, %v383
      %v1073 = vmul.f32 %v1072, 0.001953125
      %v1074 = vfloor.f32 %v1073
      %v1075 = vsub.f32 %v1073, %v1074
      %v1076 = vrot.slane %v690, 2
      %v1078 = vrot.slane %v693, 1
      %v1080 = vsel %vm415, %v1075, %v1076
      %v1081 = vsel %vm417, %v1080, %v1078
      %v1082 = vsel %vm419, %v1081, %v696
      %v1083 = vpack.c.bf16 %v1082, %v1082
      %v1085 = vsel %vm417, %v1083, 0
      %1087 = vmatpush.bf16.msra.mxu0 0
      %1088 = vmatpush.bf16.msra.mxu0 0
      %1089 = vmatpush.bf16.msra.mxu0 0
      %1090 = vmatpush.bf16.msra.mxu0 0
      %1091 = vmatpush.bf16.msra.mxu0 0
      %1092 = vmatpush.bf16.msra.mxu0 0
      %1093 = vmatpush.bf16.msra.mxu0 0
      %1094 = vmatpush.bf16.msra.mxu0 %v1085
      %1095 = vmatmul.bf16.gmra.mxu0 %v454
      %v1096 = vpop.f32.mrf.mxu0
      %v1097 = vadd.f32 %v425, %v1096
      %v1098 = vpop.f32.mrf.mxu0
      %v1099 = vadd.f32 %v430, %v1098
      %1100 = vmatmul.bf16.gmra.mxu0 %v457
      %v1101 = vpop.f32.mrf.mxu0
      %v1102 = vadd.f32 %v435, %v1101
      %v1103 = vpop.f32.mrf.mxu0
      %v1104 = vadd.f32 %v440, %v1103
      %1105 = vdwg.mxu0
      %v1106 = vpack.c.bf16 %v1097, %v1097
      %v1107 = vpack.c.bf16 %v1099, %v1099
      %v1108 = vpack.c.bf16 %v1102, %v1102
      %v1109 = vpack.c.bf16 %v1104, %v1104
      %v1110 = vunpack.c.l.bf16 %v1106
      %v1111 = vunpack.c.l.bf16 %v1107
      %v1112 = vunpack.c.l.bf16 %v1108
      %v1113 = vunpack.c.l.bf16 %v1109
      %v1114 = vmul.f32 %v1110, 0.5
      %v1115 = vmul.f32 %v1111, 0.5
      %v1116 = vmul.f32 %v1112, 0.5
      %v1117 = vmul.f32 %v1113, 0.5
      %v1118 = vpack.c.bf16 %v1114, %v1114
      %v1119 = vpack.c.bf16 %v1115, %v1115
      %v1120 = vpack.c.bf16 %v1116, %v1116
      %v1121 = vpack.c.bf16 %v1117, %v1117
      %v1122 = vunpack.c.l.bf16 %v1118
      %v1123 = vunpack.c.l.bf16 %v1119
      %v1124 = vunpack.c.l.bf16 %v1120
      %v1125 = vunpack.c.l.bf16 %v1121
      %v1126 = vtanh.pop %v1122
      %v1127 = vtanh.pop %v1123
      %v1128 = vtanh.pop %v1124
      %v1129 = vtanh.pop %v1125
      %v1130 = vpack.c.bf16 %v1126, %v1126
      %v1131 = vpack.c.bf16 %v1127, %v1127
      %v1132 = vpack.c.bf16 %v1128, %v1128
      %v1133 = vpack.c.bf16 %v1129, %v1129
      %v1134 = vunpack.c.l.bf16 %v1130
      %v1135 = vunpack.c.l.bf16 %v1131
      %v1136 = vunpack.c.l.bf16 %v1132
      %v1137 = vunpack.c.l.bf16 %v1133
      %v1138 = vmul.f32 %v1122, %v1134
      %v1139 = vmul.f32 %v1123, %v1135
      %v1140 = vmul.f32 %v1124, %v1136
      %v1141 = vmul.f32 %v1125, %v1137
      %v1142 = vpack.c.bf16 %v1138, %v1138
      %v1143 = vpack.c.bf16 %v1139, %v1139
      %v1144 = vpack.c.bf16 %v1140, %v1140
      %v1145 = vpack.c.bf16 %v1141, %v1141
      %v1146 = vunpack.c.l.bf16 %v1142
      %v1147 = vunpack.c.l.bf16 %v1143
      %v1148 = vunpack.c.l.bf16 %v1144
      %v1149 = vunpack.c.l.bf16 %v1145
      %v1150 = vadd.f32 %v1122, %v1146
      %v1151 = vadd.f32 %v1123, %v1147
      %v1152 = vadd.f32 %v1124, %v1148
      %v1153 = vadd.f32 %v1125, %v1149
      %v1154 = vpack.c.bf16 %v1151, %v1150
      %v1155 = vpack.c.bf16 %v1153, %v1152
      %1156 = vmatpush.bf16.msra.mxu0 0
      %1157 = vmatpush.bf16.msra.mxu0 0
      %1158 = vmatpush.bf16.msra.mxu0 0
      %1159 = vmatpush.bf16.msra.mxu0 0
      %1160 = vmatpush.bf16.msra.mxu0 0
      %1161 = vmatpush.bf16.msra.mxu0 0
      %1162 = vmatpush.bf16.msra.mxu0 %v1155
      %1163 = vmatpush.bf16.msra.mxu0 %v1154
      %1164 = vmatmul.bf16.gmra.mxu0 %v563
      %v1165 = vpop.f32.mrf.mxu0
      %v1166 = vadd.f32 %v534, %v1165
      %v1167 = vpop.f32.mrf.mxu0
      %v1168 = vadd.f32 %v539, %v1167
      %1169 = vmatmul.bf16.gmra.mxu0 %v566
      %v1170 = vpop.f32.mrf.mxu0
      %v1171 = vadd.f32 %v544, %v1170
      %v1172 = vpop.f32.mrf.mxu0
      %v1173 = vadd.f32 %v549, %v1172
      %1174 = vdwg.mxu0
      %v1175 = vpack.c.bf16 %v1166, %v1166
      %v1176 = vpack.c.bf16 %v1168, %v1168
      %v1177 = vpack.c.bf16 %v1171, %v1171
      %v1178 = vpack.c.bf16 %v1173, %v1173
      %v1179 = vunpack.c.l.bf16 %v1175
      %v1180 = vunpack.c.l.bf16 %v1176
      %v1181 = vunpack.c.l.bf16 %v1177
      %v1182 = vunpack.c.l.bf16 %v1178
      %v1183 = vmul.f32 %v1179, 0.5
      %v1184 = vmul.f32 %v1180, 0.5
      %v1185 = vmul.f32 %v1181, 0.5
      %v1186 = vmul.f32 %v1182, 0.5
      %v1187 = vpack.c.bf16 %v1183, %v1183
      %v1188 = vpack.c.bf16 %v1184, %v1184
      %v1189 = vpack.c.bf16 %v1185, %v1185
      %v1190 = vpack.c.bf16 %v1186, %v1186
      %v1191 = vunpack.c.l.bf16 %v1187
      %v1192 = vunpack.c.l.bf16 %v1188
      %v1193 = vunpack.c.l.bf16 %v1189
      %v1194 = vunpack.c.l.bf16 %v1190
      %v1195 = vtanh.pop %v1191
      %v1196 = vtanh.pop %v1192
      %v1197 = vtanh.pop %v1193
      %v1198 = vtanh.pop %v1194
      %v1199 = vpack.c.bf16 %v1195, %v1195
      %v1200 = vpack.c.bf16 %v1196, %v1196
      %v1201 = vpack.c.bf16 %v1197, %v1197
      %v1202 = vpack.c.bf16 %v1198, %v1198
      %v1203 = vunpack.c.l.bf16 %v1199
      %v1204 = vunpack.c.l.bf16 %v1200
      %v1205 = vunpack.c.l.bf16 %v1201
      %v1206 = vunpack.c.l.bf16 %v1202
      %v1207 = vmul.f32 %v1191, %v1203
      %v1208 = vmul.f32 %v1192, %v1204
      %v1209 = vmul.f32 %v1193, %v1205
      %v1210 = vmul.f32 %v1194, %v1206
      %v1211 = vpack.c.bf16 %v1207, %v1207
      %v1212 = vpack.c.bf16 %v1208, %v1208
      %v1213 = vpack.c.bf16 %v1209, %v1209
      %v1214 = vpack.c.bf16 %v1210, %v1210
      %v1215 = vunpack.c.l.bf16 %v1211
      %v1216 = vunpack.c.l.bf16 %v1212
      %v1217 = vunpack.c.l.bf16 %v1213
      %v1218 = vunpack.c.l.bf16 %v1214
      %v1219 = vadd.f32 %v1191, %v1215
      %v1220 = vadd.f32 %v1192, %v1216
      %v1221 = vadd.f32 %v1193, %v1217
      %v1222 = vadd.f32 %v1194, %v1218
      %v1223 = vpack.c.bf16 %v1220, %v1219
      %v1224 = vpack.c.bf16 %v1222, %v1221
      %1225 = vmatpush.bf16.msra.mxu0 0
      %1226 = vmatpush.bf16.msra.mxu0 0
      %1227 = vmatpush.bf16.msra.mxu0 0
      %1228 = vmatpush.bf16.msra.mxu0 0
      %1229 = vmatpush.bf16.msra.mxu0 0
      %1230 = vmatpush.bf16.msra.mxu0 0
      %1231 = vmatpush.bf16.msra.mxu0 %v1224
      %1232 = vmatpush.bf16.msra.mxu0 %v1223
      %1233 = vmatmul.bf16.gmra.mxu0 %v643
      %v1234 = vpop.f32.mrf.mxu0
      %v1235 = vadd.f32 %v640, %v1234
      %v1236 = vpop.f32.mrf.mxu0
      %1237 = vdwg.mxu0
      %p1238 = scmp.ge.s32.totalorder %s1069, 1
      %s1239 = scalar_select %p1238, 1, 0
      %v1240 = vstv %s1239
      %vm1241 = vcmp.eq.s32.totalorder %v1240, 1
      %vm1242 = vmand %vm1241, %vm384
      %v1243 = vsel %vm1242, 1, 0
      %vm1244 = vcmp.eq.s32.totalorder %v1243, 1
      %v1245 = vsel %vm1244, %v1235, 0.0
      %v1247 = vrot.slane %v1245, 1
      %v1248 = vrot.slane %v1245, 2
      %v1249 = vrot.slane %v1245, 3
      %1253 = vst.msk [vmem:[%s357 + $0x3] sm:$0x1] %vm673, %v1245
      %1254 = vst.msk [vmem:[%s357 + $0x13] sm:$0x1] %vm673, %v1247
      %1255 = vst.msk [vmem:[%s357 + $0x23] sm:$0x1] %vm673, %v1248
      %1256 = vst.msk [vmem:[%s357 + $0x33] sm:$0x1] %vm673, %v1249
      %s1257 = sadd.s32 %s385, 4
      %s1258 = scvt.s32.f32 %s1257
      %v1259 = vstv %s1258
      %v1260 = vsub.f32 %v1259, %v383
      %v1261 = vmul.f32 %v1260, 0.001953125
      %v1262 = vfloor.f32 %v1261
      %v1263 = vsub.f32 %v1261, %v1262
      %v1264 = vrot.slane %v690, 3
      %v1266 = vrot.slane %v693, 2
      %v1268 = vrot.slane %v696, 1
      %v1270 = vsel %vm415, %v1263, %v1264
      %v1271 = vsel %vm417, %v1270, %v1266
      %v1272 = vsel %vm419, %v1271, %v1268
      %v1273 = vpack.c.bf16 %v1272, %v1272
      %v1275 = vsel %vm417, %v1273, 0
      %1277 = vmatpush.bf16.msra.mxu0 0
      %1278 = vmatpush.bf16.msra.mxu0 0
      %1279 = vmatpush.bf16.msra.mxu0 0
      %1280 = vmatpush.bf16.msra.mxu0 0
      %1281 = vmatpush.bf16.msra.mxu0 0
      %1282 = vmatpush.bf16.msra.mxu0 0
      %1283 = vmatpush.bf16.msra.mxu0 0
      %1284 = vmatpush.bf16.msra.mxu0 %v1275
      %1285 = vmatmul.bf16.gmra.mxu0 %v454
      %v1286 = vpop.f32.mrf.mxu0
      %v1287 = vadd.f32 %v425, %v1286
      %v1288 = vpop.f32.mrf.mxu0
      %v1289 = vadd.f32 %v430, %v1288
      %1290 = vmatmul.bf16.gmra.mxu0 %v457
      %v1291 = vpop.f32.mrf.mxu0
      %v1292 = vadd.f32 %v435, %v1291
      %v1293 = vpop.f32.mrf.mxu0
      %v1294 = vadd.f32 %v440, %v1293
      %1295 = vdwg.mxu0
      %v1296 = vpack.c.bf16 %v1287, %v1287
      %v1297 = vpack.c.bf16 %v1289, %v1289
      %v1298 = vpack.c.bf16 %v1292, %v1292
      %v1299 = vpack.c.bf16 %v1294, %v1294
      %v1300 = vunpack.c.l.bf16 %v1296
      %v1301 = vunpack.c.l.bf16 %v1297
      %v1302 = vunpack.c.l.bf16 %v1298
      %v1303 = vunpack.c.l.bf16 %v1299
      %v1304 = vmul.f32 %v1300, 0.5
      %v1305 = vmul.f32 %v1301, 0.5
      %v1306 = vmul.f32 %v1302, 0.5
      %v1307 = vmul.f32 %v1303, 0.5
      %v1308 = vpack.c.bf16 %v1304, %v1304
      %v1309 = vpack.c.bf16 %v1305, %v1305
      %v1310 = vpack.c.bf16 %v1306, %v1306
      %v1311 = vpack.c.bf16 %v1307, %v1307
      %v1312 = vunpack.c.l.bf16 %v1308
      %v1313 = vunpack.c.l.bf16 %v1309
      %v1314 = vunpack.c.l.bf16 %v1310
      %v1315 = vunpack.c.l.bf16 %v1311
      %v1316 = vtanh.pop %v1312
      %v1317 = vtanh.pop %v1313
      %v1318 = vtanh.pop %v1314
      %v1319 = vtanh.pop %v1315
      %v1320 = vpack.c.bf16 %v1316, %v1316
      %v1321 = vpack.c.bf16 %v1317, %v1317
      %v1322 = vpack.c.bf16 %v1318, %v1318
      %v1323 = vpack.c.bf16 %v1319, %v1319
      %v1324 = vunpack.c.l.bf16 %v1320
      %v1325 = vunpack.c.l.bf16 %v1321
      %v1326 = vunpack.c.l.bf16 %v1322
      %v1327 = vunpack.c.l.bf16 %v1323
      %v1328 = vmul.f32 %v1312, %v1324
      %v1329 = vmul.f32 %v1313, %v1325
      %v1330 = vmul.f32 %v1314, %v1326
      %v1331 = vmul.f32 %v1315, %v1327
      %v1332 = vpack.c.bf16 %v1328, %v1328
      %v1333 = vpack.c.bf16 %v1329, %v1329
      %v1334 = vpack.c.bf16 %v1330, %v1330
      %v1335 = vpack.c.bf16 %v1331, %v1331
      %v1336 = vunpack.c.l.bf16 %v1332
      %v1337 = vunpack.c.l.bf16 %v1333
      %v1338 = vunpack.c.l.bf16 %v1334
      %v1339 = vunpack.c.l.bf16 %v1335
      %v1340 = vadd.f32 %v1312, %v1336
      %v1341 = vadd.f32 %v1313, %v1337
      %v1342 = vadd.f32 %v1314, %v1338
      %v1343 = vadd.f32 %v1315, %v1339
      %v1344 = vpack.c.bf16 %v1341, %v1340
      %v1345 = vpack.c.bf16 %v1343, %v1342
      %1346 = vmatpush.bf16.msra.mxu0 0
      %1347 = vmatpush.bf16.msra.mxu0 0
      %1348 = vmatpush.bf16.msra.mxu0 0
      %1349 = vmatpush.bf16.msra.mxu0 0
      %1350 = vmatpush.bf16.msra.mxu0 0
      %1351 = vmatpush.bf16.msra.mxu0 0
      %1352 = vmatpush.bf16.msra.mxu0 %v1345
      %1353 = vmatpush.bf16.msra.mxu0 %v1344
      %1354 = vmatmul.bf16.gmra.mxu0 %v563
      %v1355 = vpop.f32.mrf.mxu0
      %v1356 = vadd.f32 %v534, %v1355
      %v1357 = vpop.f32.mrf.mxu0
      %v1358 = vadd.f32 %v539, %v1357
      %1359 = vmatmul.bf16.gmra.mxu0 %v566
      %v1360 = vpop.f32.mrf.mxu0
      %v1361 = vadd.f32 %v544, %v1360
      %v1362 = vpop.f32.mrf.mxu0
      %v1363 = vadd.f32 %v549, %v1362
      %1364 = vdwg.mxu0
      %v1365 = vpack.c.bf16 %v1356, %v1356
      %v1366 = vpack.c.bf16 %v1358, %v1358
      %v1367 = vpack.c.bf16 %v1361, %v1361
      %v1368 = vpack.c.bf16 %v1363, %v1363
      %v1369 = vunpack.c.l.bf16 %v1365
      %v1370 = vunpack.c.l.bf16 %v1366
      %v1371 = vunpack.c.l.bf16 %v1367
      %v1372 = vunpack.c.l.bf16 %v1368
      %v1373 = vmul.f32 %v1369, 0.5
      %v1374 = vmul.f32 %v1370, 0.5
      %v1375 = vmul.f32 %v1371, 0.5
      %v1376 = vmul.f32 %v1372, 0.5
      %v1377 = vpack.c.bf16 %v1373, %v1373
      %v1378 = vpack.c.bf16 %v1374, %v1374
      %v1379 = vpack.c.bf16 %v1375, %v1375
      %v1380 = vpack.c.bf16 %v1376, %v1376
      %v1381 = vunpack.c.l.bf16 %v1377
      %v1382 = vunpack.c.l.bf16 %v1378
      %v1383 = vunpack.c.l.bf16 %v1379
      %v1384 = vunpack.c.l.bf16 %v1380
      %v1385 = vtanh.pop %v1381
      %v1386 = vtanh.pop %v1382
      %v1387 = vtanh.pop %v1383
      %v1388 = vtanh.pop %v1384
      %v1389 = vpack.c.bf16 %v1385, %v1385
      %v1390 = vpack.c.bf16 %v1386, %v1386
      %v1391 = vpack.c.bf16 %v1387, %v1387
      %v1392 = vpack.c.bf16 %v1388, %v1388
      %v1393 = vunpack.c.l.bf16 %v1389
      %v1394 = vunpack.c.l.bf16 %v1390
      %v1395 = vunpack.c.l.bf16 %v1391
      %v1396 = vunpack.c.l.bf16 %v1392
      %v1397 = vmul.f32 %v1381, %v1393
      %v1398 = vmul.f32 %v1382, %v1394
      %v1399 = vmul.f32 %v1383, %v1395
      %v1400 = vmul.f32 %v1384, %v1396
      %v1401 = vpack.c.bf16 %v1397, %v1397
      %v1402 = vpack.c.bf16 %v1398, %v1398
      %v1403 = vpack.c.bf16 %v1399, %v1399
      %v1404 = vpack.c.bf16 %v1400, %v1400
      %v1405 = vunpack.c.l.bf16 %v1401
      %v1406 = vunpack.c.l.bf16 %v1402
      %v1407 = vunpack.c.l.bf16 %v1403
      %v1408 = vunpack.c.l.bf16 %v1404
      %v1409 = vadd.f32 %v1381, %v1405
      %v1410 = vadd.f32 %v1382, %v1406
      %v1411 = vadd.f32 %v1383, %v1407
      %v1412 = vadd.f32 %v1384, %v1408
      %v1413 = vpack.c.bf16 %v1410, %v1409
      %v1414 = vpack.c.bf16 %v1412, %v1411
      %1415 = vmatpush.bf16.msra.mxu0 0
      %1416 = vmatpush.bf16.msra.mxu0 0
      %1417 = vmatpush.bf16.msra.mxu0 0
      %1418 = vmatpush.bf16.msra.mxu0 0
      %1419 = vmatpush.bf16.msra.mxu0 0
      %1420 = vmatpush.bf16.msra.mxu0 0
      %1421 = vmatpush.bf16.msra.mxu0 %v1414
      %1422 = vmatpush.bf16.msra.mxu0 %v1413
      %1423 = vmatmul.bf16.gmra.mxu0 %v643
      %v1424 = vpop.f32.mrf.mxu0
      %v1425 = vadd.f32 %v640, %v1424
      %v1426 = vpop.f32.mrf.mxu0
      %1427 = vdwg.mxu0
      %p1428 = scmp.ge.s32.totalorder %s1257, 1
      %s1429 = scalar_select %p1428, 1, 0
      %v1430 = vstv %s1429
      %vm1431 = vcmp.eq.s32.totalorder %v1430, 1
      %vm1432 = vmand %vm1431, %vm384
      %v1433 = vsel %vm1432, 1, 0
      %vm1434 = vcmp.eq.s32.totalorder %v1433, 1
      %v1435 = vsel %vm1434, %v1425, 0.0
      %v1437 = vrot.slane %v1435, 1
      %v1438 = vrot.slane %v1435, 2
      %v1439 = vrot.slane %v1435, 3
      %1443 = vst.msk [vmem:[%s357 + $0x4] sm:$0x1] %vm673, %v1435
      %1444 = vst.msk [vmem:[%s357 + $0x14] sm:$0x1] %vm673, %v1437
      %1445 = vst.msk [vmem:[%s357 + $0x24] sm:$0x1] %vm673, %v1438
      %1446 = vst.msk [vmem:[%s357 + $0x34] sm:$0x1] %vm673, %v1439
      %s1447 = sadd.s32 %s385, 5
      %s1448 = scvt.s32.f32 %s1447
      %v1449 = vstv %s1448
      %v1450 = vsub.f32 %v1449, %v383
      %v1451 = vmul.f32 %v1450, 0.001953125
      %v1452 = vfloor.f32 %v1451
      %v1453 = vsub.f32 %v1451, %v1452
      %v1454 = vrot.slane %v690, 4
      %v1456 = vrot.slane %v693, 3
      %v1458 = vrot.slane %v696, 2
      %v1460 = vsel %vm415, %v1453, %v1454
      %v1461 = vsel %vm417, %v1460, %v1456
      %v1462 = vsel %vm419, %v1461, %v1458
      %v1463 = vpack.c.bf16 %v1462, %v1462
      %v1465 = vsel %vm417, %v1463, 0
      %1467 = vmatpush.bf16.msra.mxu0 0
      %1468 = vmatpush.bf16.msra.mxu0 0
      %1469 = vmatpush.bf16.msra.mxu0 0
      %1470 = vmatpush.bf16.msra.mxu0 0
      %1471 = vmatpush.bf16.msra.mxu0 0
      %1472 = vmatpush.bf16.msra.mxu0 0
      %1473 = vmatpush.bf16.msra.mxu0 0
      %1474 = vmatpush.bf16.msra.mxu0 %v1465
      %1475 = vmatmul.bf16.gmra.mxu0 %v454
      %v1476 = vpop.f32.mrf.mxu0
      %v1477 = vadd.f32 %v425, %v1476
      %v1478 = vpop.f32.mrf.mxu0
      %v1479 = vadd.f32 %v430, %v1478
      %1480 = vmatmul.bf16.gmra.mxu0 %v457
      %v1481 = vpop.f32.mrf.mxu0
      %v1482 = vadd.f32 %v435, %v1481
      %v1483 = vpop.f32.mrf.mxu0
      %v1484 = vadd.f32 %v440, %v1483
      %1485 = vdwg.mxu0
      %v1486 = vpack.c.bf16 %v1477, %v1477
      %v1487 = vpack.c.bf16 %v1479, %v1479
      %v1488 = vpack.c.bf16 %v1482, %v1482
      %v1489 = vpack.c.bf16 %v1484, %v1484
      %v1490 = vunpack.c.l.bf16 %v1486
      %v1491 = vunpack.c.l.bf16 %v1487
      %v1492 = vunpack.c.l.bf16 %v1488
      %v1493 = vunpack.c.l.bf16 %v1489
      %v1494 = vmul.f32 %v1490, 0.5
      %v1495 = vmul.f32 %v1491, 0.5
      %v1496 = vmul.f32 %v1492, 0.5
      %v1497 = vmul.f32 %v1493, 0.5
      %v1498 = vpack.c.bf16 %v1494, %v1494
      %v1499 = vpack.c.bf16 %v1495, %v1495
      %v1500 = vpack.c.bf16 %v1496, %v1496
      %v1501 = vpack.c.bf16 %v1497, %v1497
      %v1502 = vunpack.c.l.bf16 %v1498
      %v1503 = vunpack.c.l.bf16 %v1499
      %v1504 = vunpack.c.l.bf16 %v1500
      %v1505 = vunpack.c.l.bf16 %v1501
      %v1506 = vtanh.pop %v1502
      %v1507 = vtanh.pop %v1503
      %v1508 = vtanh.pop %v1504
      %v1509 = vtanh.pop %v1505
      %v1510 = vpack.c.bf16 %v1506, %v1506
      %v1511 = vpack.c.bf16 %v1507, %v1507
      %v1512 = vpack.c.bf16 %v1508, %v1508
      %v1513 = vpack.c.bf16 %v1509, %v1509
      %v1514 = vunpack.c.l.bf16 %v1510
      %v1515 = vunpack.c.l.bf16 %v1511
      %v1516 = vunpack.c.l.bf16 %v1512
      %v1517 = vunpack.c.l.bf16 %v1513
      %v1518 = vmul.f32 %v1502, %v1514
      %v1519 = vmul.f32 %v1503, %v1515
      %v1520 = vmul.f32 %v1504, %v1516
      %v1521 = vmul.f32 %v1505, %v1517
      %v1522 = vpack.c.bf16 %v1518, %v1518
      %v1523 = vpack.c.bf16 %v1519, %v1519
      %v1524 = vpack.c.bf16 %v1520, %v1520
      %v1525 = vpack.c.bf16 %v1521, %v1521
      %v1526 = vunpack.c.l.bf16 %v1522
      %v1527 = vunpack.c.l.bf16 %v1523
      %v1528 = vunpack.c.l.bf16 %v1524
      %v1529 = vunpack.c.l.bf16 %v1525
      %v1530 = vadd.f32 %v1502, %v1526
      %v1531 = vadd.f32 %v1503, %v1527
      %v1532 = vadd.f32 %v1504, %v1528
      %v1533 = vadd.f32 %v1505, %v1529
      %v1534 = vpack.c.bf16 %v1531, %v1530
      %v1535 = vpack.c.bf16 %v1533, %v1532
      %1536 = vmatpush.bf16.msra.mxu0 0
      %1537 = vmatpush.bf16.msra.mxu0 0
      %1538 = vmatpush.bf16.msra.mxu0 0
      %1539 = vmatpush.bf16.msra.mxu0 0
      %1540 = vmatpush.bf16.msra.mxu0 0
      %1541 = vmatpush.bf16.msra.mxu0 0
      %1542 = vmatpush.bf16.msra.mxu0 %v1535
      %1543 = vmatpush.bf16.msra.mxu0 %v1534
      %1544 = vmatmul.bf16.gmra.mxu0 %v563
      %v1545 = vpop.f32.mrf.mxu0
      %v1546 = vadd.f32 %v534, %v1545
      %v1547 = vpop.f32.mrf.mxu0
      %v1548 = vadd.f32 %v539, %v1547
      %1549 = vmatmul.bf16.gmra.mxu0 %v566
      %v1550 = vpop.f32.mrf.mxu0
      %v1551 = vadd.f32 %v544, %v1550
      %v1552 = vpop.f32.mrf.mxu0
      %v1553 = vadd.f32 %v549, %v1552
      %1554 = vdwg.mxu0
      %v1555 = vpack.c.bf16 %v1546, %v1546
      %v1556 = vpack.c.bf16 %v1548, %v1548
      %v1557 = vpack.c.bf16 %v1551, %v1551
      %v1558 = vpack.c.bf16 %v1553, %v1553
      %v1559 = vunpack.c.l.bf16 %v1555
      %v1560 = vunpack.c.l.bf16 %v1556
      %v1561 = vunpack.c.l.bf16 %v1557
      %v1562 = vunpack.c.l.bf16 %v1558
      %v1563 = vmul.f32 %v1559, 0.5
      %v1564 = vmul.f32 %v1560, 0.5
      %v1565 = vmul.f32 %v1561, 0.5
      %v1566 = vmul.f32 %v1562, 0.5
      %v1567 = vpack.c.bf16 %v1563, %v1563
      %v1568 = vpack.c.bf16 %v1564, %v1564
      %v1569 = vpack.c.bf16 %v1565, %v1565
      %v1570 = vpack.c.bf16 %v1566, %v1566
      %v1571 = vunpack.c.l.bf16 %v1567
      %v1572 = vunpack.c.l.bf16 %v1568
      %v1573 = vunpack.c.l.bf16 %v1569
      %v1574 = vunpack.c.l.bf16 %v1570
      %v1575 = vtanh.pop %v1571
      %v1576 = vtanh.pop %v1572
      %v1577 = vtanh.pop %v1573
      %v1578 = vtanh.pop %v1574
      %v1579 = vpack.c.bf16 %v1575, %v1575
      %v1580 = vpack.c.bf16 %v1576, %v1576
      %v1581 = vpack.c.bf16 %v1577, %v1577
      %v1582 = vpack.c.bf16 %v1578, %v1578
      %v1583 = vunpack.c.l.bf16 %v1579
      %v1584 = vunpack.c.l.bf16 %v1580
      %v1585 = vunpack.c.l.bf16 %v1581
      %v1586 = vunpack.c.l.bf16 %v1582
      %v1587 = vmul.f32 %v1571, %v1583
      %v1588 = vmul.f32 %v1572, %v1584
      %v1589 = vmul.f32 %v1573, %v1585
      %v1590 = vmul.f32 %v1574, %v1586
      %v1591 = vpack.c.bf16 %v1587, %v1587
      %v1592 = vpack.c.bf16 %v1588, %v1588
      %v1593 = vpack.c.bf16 %v1589, %v1589
      %v1594 = vpack.c.bf16 %v1590, %v1590
      %v1595 = vunpack.c.l.bf16 %v1591
      %v1596 = vunpack.c.l.bf16 %v1592
      %v1597 = vunpack.c.l.bf16 %v1593
      %v1598 = vunpack.c.l.bf16 %v1594
      %v1599 = vadd.f32 %v1571, %v1595
      %v1600 = vadd.f32 %v1572, %v1596
      %v1601 = vadd.f32 %v1573, %v1597
      %v1602 = vadd.f32 %v1574, %v1598
      %v1603 = vpack.c.bf16 %v1600, %v1599
      %v1604 = vpack.c.bf16 %v1602, %v1601
      %1605 = vmatpush.bf16.msra.mxu0 0
      %1606 = vmatpush.bf16.msra.mxu0 0
      %1607 = vmatpush.bf16.msra.mxu0 0
      %1608 = vmatpush.bf16.msra.mxu0 0
      %1609 = vmatpush.bf16.msra.mxu0 0
      %1610 = vmatpush.bf16.msra.mxu0 0
      %1611 = vmatpush.bf16.msra.mxu0 %v1604
      %1612 = vmatpush.bf16.msra.mxu0 %v1603
      %1613 = vmatmul.bf16.gmra.mxu0 %v643
      %v1614 = vpop.f32.mrf.mxu0
      %v1615 = vadd.f32 %v640, %v1614
      %v1616 = vpop.f32.mrf.mxu0
      %1617 = vdwg.mxu0
      %p1618 = scmp.ge.s32.totalorder %s1447, 1
      %s1619 = scalar_select %p1618, 1, 0
      %v1620 = vstv %s1619
      %vm1621 = vcmp.eq.s32.totalorder %v1620, 1
      %vm1622 = vmand %vm1621, %vm384
      %v1623 = vsel %vm1622, 1, 0
      %vm1624 = vcmp.eq.s32.totalorder %v1623, 1
      %v1625 = vsel %vm1624, %v1615, 0.0
      %v1627 = vrot.slane %v1625, 1
      %v1628 = vrot.slane %v1625, 2
      %v1629 = vrot.slane %v1625, 3
      %1633 = vst.msk [vmem:[%s357 + $0x5] sm:$0x1] %vm673, %v1625
      %1634 = vst.msk [vmem:[%s357 + $0x15] sm:$0x1] %vm673, %v1627
      %1635 = vst.msk [vmem:[%s357 + $0x25] sm:$0x1] %vm673, %v1628
      %1636 = vst.msk [vmem:[%s357 + $0x35] sm:$0x1] %vm673, %v1629
      %s1637 = sadd.s32 %s385, 6
      %s1638 = scvt.s32.f32 %s1637
      %v1639 = vstv %s1638
      %v1640 = vsub.f32 %v1639, %v383
      %v1641 = vmul.f32 %v1640, 0.001953125
      %v1642 = vfloor.f32 %v1641
      %v1643 = vsub.f32 %v1641, %v1642
      %v1644 = vrot.slane %v690, 5
      %v1646 = vrot.slane %v693, 4
      %v1648 = vrot.slane %v696, 3
      %v1650 = vsel %vm415, %v1643, %v1644
      %v1651 = vsel %vm417, %v1650, %v1646
      %v1652 = vsel %vm419, %v1651, %v1648
      %v1653 = vpack.c.bf16 %v1652, %v1652
      %v1655 = vsel %vm417, %v1653, 0
      %1657 = vmatpush.bf16.msra.mxu0 0
      %1658 = vmatpush.bf16.msra.mxu0 0
      %1659 = vmatpush.bf16.msra.mxu0 0
      %1660 = vmatpush.bf16.msra.mxu0 0
      %1661 = vmatpush.bf16.msra.mxu0 0
      %1662 = vmatpush.bf16.msra.mxu0 0
      %1663 = vmatpush.bf16.msra.mxu0 0
      %1664 = vmatpush.bf16.msra.mxu0 %v1655
      %1665 = vmatmul.bf16.gmra.mxu0 %v454
      %v1666 = vpop.f32.mrf.mxu0
      %v1667 = vadd.f32 %v425, %v1666
      %v1668 = vpop.f32.mrf.mxu0
      %v1669 = vadd.f32 %v430, %v1668
      %1670 = vmatmul.bf16.gmra.mxu0 %v457
      %v1671 = vpop.f32.mrf.mxu0
      %v1672 = vadd.f32 %v435, %v1671
      %v1673 = vpop.f32.mrf.mxu0
      %v1674 = vadd.f32 %v440, %v1673
      %1675 = vdwg.mxu0
      %v1676 = vpack.c.bf16 %v1667, %v1667
      %v1677 = vpack.c.bf16 %v1669, %v1669
      %v1678 = vpack.c.bf16 %v1672, %v1672
      %v1679 = vpack.c.bf16 %v1674, %v1674
      %v1680 = vunpack.c.l.bf16 %v1676
      %v1681 = vunpack.c.l.bf16 %v1677
      %v1682 = vunpack.c.l.bf16 %v1678
      %v1683 = vunpack.c.l.bf16 %v1679
      %v1684 = vmul.f32 %v1680, 0.5
      %v1685 = vmul.f32 %v1681, 0.5
      %v1686 = vmul.f32 %v1682, 0.5
      %v1687 = vmul.f32 %v1683, 0.5
      %v1688 = vpack.c.bf16 %v1684, %v1684
      %v1689 = vpack.c.bf16 %v1685, %v1685
      %v1690 = vpack.c.bf16 %v1686, %v1686
      %v1691 = vpack.c.bf16 %v1687, %v1687
      %v1692 = vunpack.c.l.bf16 %v1688
      %v1693 = vunpack.c.l.bf16 %v1689
      %v1694 = vunpack.c.l.bf16 %v1690
      %v1695 = vunpack.c.l.bf16 %v1691
      %v1696 = vtanh.pop %v1692
      %v1697 = vtanh.pop %v1693
      %v1698 = vtanh.pop %v1694
      %v1699 = vtanh.pop %v1695
      %v1700 = vpack.c.bf16 %v1696, %v1696
      %v1701 = vpack.c.bf16 %v1697, %v1697
      %v1702 = vpack.c.bf16 %v1698, %v1698
      %v1703 = vpack.c.bf16 %v1699, %v1699
      %v1704 = vunpack.c.l.bf16 %v1700
      %v1705 = vunpack.c.l.bf16 %v1701
      %v1706 = vunpack.c.l.bf16 %v1702
      %v1707 = vunpack.c.l.bf16 %v1703
      %v1708 = vmul.f32 %v1692, %v1704
      %v1709 = vmul.f32 %v1693, %v1705
      %v1710 = vmul.f32 %v1694, %v1706
      %v1711 = vmul.f32 %v1695, %v1707
      %v1712 = vpack.c.bf16 %v1708, %v1708
      %v1713 = vpack.c.bf16 %v1709, %v1709
      %v1714 = vpack.c.bf16 %v1710, %v1710
      %v1715 = vpack.c.bf16 %v1711, %v1711
      %v1716 = vunpack.c.l.bf16 %v1712
      %v1717 = vunpack.c.l.bf16 %v1713
      %v1718 = vunpack.c.l.bf16 %v1714
      %v1719 = vunpack.c.l.bf16 %v1715
      %v1720 = vadd.f32 %v1692, %v1716
      %v1721 = vadd.f32 %v1693, %v1717
      %v1722 = vadd.f32 %v1694, %v1718
      %v1723 = vadd.f32 %v1695, %v1719
      %v1724 = vpack.c.bf16 %v1721, %v1720
      %v1725 = vpack.c.bf16 %v1723, %v1722
      %1726 = vmatpush.bf16.msra.mxu0 0
      %1727 = vmatpush.bf16.msra.mxu0 0
      %1728 = vmatpush.bf16.msra.mxu0 0
      %1729 = vmatpush.bf16.msra.mxu0 0
      %1730 = vmatpush.bf16.msra.mxu0 0
      %1731 = vmatpush.bf16.msra.mxu0 0
      %1732 = vmatpush.bf16.msra.mxu0 %v1725
      %1733 = vmatpush.bf16.msra.mxu0 %v1724
      %1734 = vmatmul.bf16.gmra.mxu0 %v563
      %v1735 = vpop.f32.mrf.mxu0
      %v1736 = vadd.f32 %v534, %v1735
      %v1737 = vpop.f32.mrf.mxu0
      %v1738 = vadd.f32 %v539, %v1737
      %1739 = vmatmul.bf16.gmra.mxu0 %v566
      %v1740 = vpop.f32.mrf.mxu0
      %v1741 = vadd.f32 %v544, %v1740
      %v1742 = vpop.f32.mrf.mxu0
      %v1743 = vadd.f32 %v549, %v1742
      %1744 = vdwg.mxu0
      %v1745 = vpack.c.bf16 %v1736, %v1736
      %v1746 = vpack.c.bf16 %v1738, %v1738
      %v1747 = vpack.c.bf16 %v1741, %v1741
      %v1748 = vpack.c.bf16 %v1743, %v1743
      %v1749 = vunpack.c.l.bf16 %v1745
      %v1750 = vunpack.c.l.bf16 %v1746
      %v1751 = vunpack.c.l.bf16 %v1747
      %v1752 = vunpack.c.l.bf16 %v1748
      %v1753 = vmul.f32 %v1749, 0.5
      %v1754 = vmul.f32 %v1750, 0.5
      %v1755 = vmul.f32 %v1751, 0.5
      %v1756 = vmul.f32 %v1752, 0.5
      %v1757 = vpack.c.bf16 %v1753, %v1753
      %v1758 = vpack.c.bf16 %v1754, %v1754
      %v1759 = vpack.c.bf16 %v1755, %v1755
      %v1760 = vpack.c.bf16 %v1756, %v1756
      %v1761 = vunpack.c.l.bf16 %v1757
      %v1762 = vunpack.c.l.bf16 %v1758
      %v1763 = vunpack.c.l.bf16 %v1759
      %v1764 = vunpack.c.l.bf16 %v1760
      %v1765 = vtanh.pop %v1761
      %v1766 = vtanh.pop %v1762
      %v1767 = vtanh.pop %v1763
      %v1768 = vtanh.pop %v1764
      %v1769 = vpack.c.bf16 %v1765, %v1765
      %v1770 = vpack.c.bf16 %v1766, %v1766
      %v1771 = vpack.c.bf16 %v1767, %v1767
      %v1772 = vpack.c.bf16 %v1768, %v1768
      %v1773 = vunpack.c.l.bf16 %v1769
      %v1774 = vunpack.c.l.bf16 %v1770
      %v1775 = vunpack.c.l.bf16 %v1771
      %v1776 = vunpack.c.l.bf16 %v1772
      %v1777 = vmul.f32 %v1761, %v1773
      %v1778 = vmul.f32 %v1762, %v1774
      %v1779 = vmul.f32 %v1763, %v1775
      %v1780 = vmul.f32 %v1764, %v1776
      %v1781 = vpack.c.bf16 %v1777, %v1777
      %v1782 = vpack.c.bf16 %v1778, %v1778
      %v1783 = vpack.c.bf16 %v1779, %v1779
      %v1784 = vpack.c.bf16 %v1780, %v1780
      %v1785 = vunpack.c.l.bf16 %v1781
      %v1786 = vunpack.c.l.bf16 %v1782
      %v1787 = vunpack.c.l.bf16 %v1783
      %v1788 = vunpack.c.l.bf16 %v1784
      %v1789 = vadd.f32 %v1761, %v1785
      %v1790 = vadd.f32 %v1762, %v1786
      %v1791 = vadd.f32 %v1763, %v1787
      %v1792 = vadd.f32 %v1764, %v1788
      %v1793 = vpack.c.bf16 %v1790, %v1789
      %v1794 = vpack.c.bf16 %v1792, %v1791
      %1795 = vmatpush.bf16.msra.mxu0 0
      %1796 = vmatpush.bf16.msra.mxu0 0
      %1797 = vmatpush.bf16.msra.mxu0 0
      %1798 = vmatpush.bf16.msra.mxu0 0
      %1799 = vmatpush.bf16.msra.mxu0 0
      %1800 = vmatpush.bf16.msra.mxu0 0
      %1801 = vmatpush.bf16.msra.mxu0 %v1794
      %1802 = vmatpush.bf16.msra.mxu0 %v1793
      %1803 = vmatmul.bf16.gmra.mxu0 %v643
      %v1804 = vpop.f32.mrf.mxu0
      %v1805 = vadd.f32 %v640, %v1804
      %v1806 = vpop.f32.mrf.mxu0
      %1807 = vdwg.mxu0
      %p1808 = scmp.ge.s32.totalorder %s1637, 1
      %s1809 = scalar_select %p1808, 1, 0
      %v1810 = vstv %s1809
      %vm1811 = vcmp.eq.s32.totalorder %v1810, 1
      %vm1812 = vmand %vm1811, %vm384
      %v1813 = vsel %vm1812, 1, 0
      %vm1814 = vcmp.eq.s32.totalorder %v1813, 1
      %v1815 = vsel %vm1814, %v1805, 0.0
      %v1817 = vrot.slane %v1815, 1
      %v1818 = vrot.slane %v1815, 2
      %v1819 = vrot.slane %v1815, 3
      %1823 = vst.msk [vmem:[%s357 + $0x6] sm:$0x1] %vm673, %v1815
      %1824 = vst.msk [vmem:[%s357 + $0x16] sm:$0x1] %vm673, %v1817
      %1825 = vst.msk [vmem:[%s357 + $0x26] sm:$0x1] %vm673, %v1818
      %1826 = vst.msk [vmem:[%s357 + $0x36] sm:$0x1] %vm673, %v1819
      %s1827 = sadd.s32 %s385, 7
      %s1828 = scvt.s32.f32 %s1827
      %v1829 = vstv %s1828
      %v1830 = vsub.f32 %v1829, %v383
      %v1831 = vmul.f32 %v1830, 0.001953125
      %v1832 = vfloor.f32 %v1831
      %v1833 = vsub.f32 %v1831, %v1832
      %v1834 = vrot.slane %v690, 6
      %v1836 = vrot.slane %v693, 5
      %v1838 = vrot.slane %v696, 4
      %v1840 = vsel %vm415, %v1833, %v1834
      %v1841 = vsel %vm417, %v1840, %v1836
      %v1842 = vsel %vm419, %v1841, %v1838
      %v1843 = vpack.c.bf16 %v1842, %v1842
      %v1845 = vsel %vm417, %v1843, 0
      %1847 = vmatpush.bf16.msra.mxu0 0
      %1848 = vmatpush.bf16.msra.mxu0 0
      %1849 = vmatpush.bf16.msra.mxu0 0
      %1850 = vmatpush.bf16.msra.mxu0 0
      %1851 = vmatpush.bf16.msra.mxu0 0
      %1852 = vmatpush.bf16.msra.mxu0 0
      %1853 = vmatpush.bf16.msra.mxu0 0
      %1854 = vmatpush.bf16.msra.mxu0 %v1845
      %1855 = vmatmul.bf16.gmra.mxu0 %v454
      %v1856 = vpop.f32.mrf.mxu0
      %v1857 = vadd.f32 %v425, %v1856
      %v1858 = vpop.f32.mrf.mxu0
      %v1859 = vadd.f32 %v430, %v1858
      %1860 = vmatmul.bf16.gmra.mxu0 %v457
      %v1861 = vpop.f32.mrf.mxu0
      %v1862 = vadd.f32 %v435, %v1861
      %v1863 = vpop.f32.mrf.mxu0
      %v1864 = vadd.f32 %v440, %v1863
      %1865 = vdwg.mxu0
      %v1866 = vpack.c.bf16 %v1857, %v1857
      %v1867 = vpack.c.bf16 %v1859, %v1859
      %v1868 = vpack.c.bf16 %v1862, %v1862
      %v1869 = vpack.c.bf16 %v1864, %v1864
      %v1870 = vunpack.c.l.bf16 %v1866
      %v1871 = vunpack.c.l.bf16 %v1867
      %v1872 = vunpack.c.l.bf16 %v1868
      %v1873 = vunpack.c.l.bf16 %v1869
      %v1874 = vmul.f32 %v1870, 0.5
      %v1875 = vmul.f32 %v1871, 0.5
      %v1876 = vmul.f32 %v1872, 0.5
      %v1877 = vmul.f32 %v1873, 0.5
      %v1878 = vpack.c.bf16 %v1874, %v1874
      %v1879 = vpack.c.bf16 %v1875, %v1875
      %v1880 = vpack.c.bf16 %v1876, %v1876
      %v1881 = vpack.c.bf16 %v1877, %v1877
      %v1882 = vunpack.c.l.bf16 %v1878
      %v1883 = vunpack.c.l.bf16 %v1879
      %v1884 = vunpack.c.l.bf16 %v1880
      %v1885 = vunpack.c.l.bf16 %v1881
      %v1886 = vtanh.pop %v1882
      %v1887 = vtanh.pop %v1883
      %v1888 = vtanh.pop %v1884
      %v1889 = vtanh.pop %v1885
      %v1890 = vpack.c.bf16 %v1886, %v1886
      %v1891 = vpack.c.bf16 %v1887, %v1887
      %v1892 = vpack.c.bf16 %v1888, %v1888
      %v1893 = vpack.c.bf16 %v1889, %v1889
      %v1894 = vunpack.c.l.bf16 %v1890
      %v1895 = vunpack.c.l.bf16 %v1891
      %v1896 = vunpack.c.l.bf16 %v1892
      %v1897 = vunpack.c.l.bf16 %v1893
      %v1898 = vmul.f32 %v1882, %v1894
      %v1899 = vmul.f32 %v1883, %v1895
      %v1900 = vmul.f32 %v1884, %v1896
      %v1901 = vmul.f32 %v1885, %v1897
      %v1902 = vpack.c.bf16 %v1898, %v1898
      %v1903 = vpack.c.bf16 %v1899, %v1899
      %v1904 = vpack.c.bf16 %v1900, %v1900
      %v1905 = vpack.c.bf16 %v1901, %v1901
      %v1906 = vunpack.c.l.bf16 %v1902
      %v1907 = vunpack.c.l.bf16 %v1903
      %v1908 = vunpack.c.l.bf16 %v1904
      %v1909 = vunpack.c.l.bf16 %v1905
      %v1910 = vadd.f32 %v1882, %v1906
      %v1911 = vadd.f32 %v1883, %v1907
      %v1912 = vadd.f32 %v1884, %v1908
      %v1913 = vadd.f32 %v1885, %v1909
      %v1914 = vpack.c.bf16 %v1911, %v1910
      %v1915 = vpack.c.bf16 %v1913, %v1912
      %1916 = vmatpush.bf16.msra.mxu0 0
      %1917 = vmatpush.bf16.msra.mxu0 0
      %1918 = vmatpush.bf16.msra.mxu0 0
      %1919 = vmatpush.bf16.msra.mxu0 0
      %1920 = vmatpush.bf16.msra.mxu0 0
      %1921 = vmatpush.bf16.msra.mxu0 0
      %1922 = vmatpush.bf16.msra.mxu0 %v1915
      %1923 = vmatpush.bf16.msra.mxu0 %v1914
      %1924 = vmatmul.bf16.gmra.mxu0 %v563
      %v1925 = vpop.f32.mrf.mxu0
      %v1926 = vadd.f32 %v534, %v1925
      %v1927 = vpop.f32.mrf.mxu0
      %v1928 = vadd.f32 %v539, %v1927
      %1929 = vmatmul.bf16.gmra.mxu0 %v566
      %v1930 = vpop.f32.mrf.mxu0
      %v1931 = vadd.f32 %v544, %v1930
      %v1932 = vpop.f32.mrf.mxu0
      %v1933 = vadd.f32 %v549, %v1932
      %1934 = vdwg.mxu0
      %v1935 = vpack.c.bf16 %v1926, %v1926
      %v1936 = vpack.c.bf16 %v1928, %v1928
      %v1937 = vpack.c.bf16 %v1931, %v1931
      %v1938 = vpack.c.bf16 %v1933, %v1933
      %v1939 = vunpack.c.l.bf16 %v1935
      %v1940 = vunpack.c.l.bf16 %v1936
      %v1941 = vunpack.c.l.bf16 %v1937
      %v1942 = vunpack.c.l.bf16 %v1938
      %v1943 = vmul.f32 %v1939, 0.5
      %v1944 = vmul.f32 %v1940, 0.5
      %v1945 = vmul.f32 %v1941, 0.5
      %v1946 = vmul.f32 %v1942, 0.5
      %v1947 = vpack.c.bf16 %v1943, %v1943
      %v1948 = vpack.c.bf16 %v1944, %v1944
      %v1949 = vpack.c.bf16 %v1945, %v1945
      %v1950 = vpack.c.bf16 %v1946, %v1946
      %v1951 = vunpack.c.l.bf16 %v1947
      %v1952 = vunpack.c.l.bf16 %v1948
      %v1953 = vunpack.c.l.bf16 %v1949
      %v1954 = vunpack.c.l.bf16 %v1950
      %v1955 = vtanh.pop %v1951
      %v1956 = vtanh.pop %v1952
      %v1957 = vtanh.pop %v1953
      %v1958 = vtanh.pop %v1954
      %v1959 = vpack.c.bf16 %v1955, %v1955
      %v1960 = vpack.c.bf16 %v1956, %v1956
      %v1961 = vpack.c.bf16 %v1957, %v1957
      %v1962 = vpack.c.bf16 %v1958, %v1958
      %v1963 = vunpack.c.l.bf16 %v1959
      %v1964 = vunpack.c.l.bf16 %v1960
      %v1965 = vunpack.c.l.bf16 %v1961
      %v1966 = vunpack.c.l.bf16 %v1962
      %v1967 = vmul.f32 %v1951, %v1963
      %v1968 = vmul.f32 %v1952, %v1964
      %v1969 = vmul.f32 %v1953, %v1965
      %v1970 = vmul.f32 %v1954, %v1966
      %v1971 = vpack.c.bf16 %v1967, %v1967
      %v1972 = vpack.c.bf16 %v1968, %v1968
      %v1973 = vpack.c.bf16 %v1969, %v1969
      %v1974 = vpack.c.bf16 %v1970, %v1970
      %v1975 = vunpack.c.l.bf16 %v1971
      %v1976 = vunpack.c.l.bf16 %v1972
      %v1977 = vunpack.c.l.bf16 %v1973
      %v1978 = vunpack.c.l.bf16 %v1974
      %v1979 = vadd.f32 %v1951, %v1975
      %v1980 = vadd.f32 %v1952, %v1976
      %v1981 = vadd.f32 %v1953, %v1977
      %v1982 = vadd.f32 %v1954, %v1978
      %v1983 = vpack.c.bf16 %v1980, %v1979
      %v1984 = vpack.c.bf16 %v1982, %v1981
      %1985 = vmatpush.bf16.msra.mxu0 0
      %1986 = vmatpush.bf16.msra.mxu0 0
      %1987 = vmatpush.bf16.msra.mxu0 0
      %1988 = vmatpush.bf16.msra.mxu0 0
      %1989 = vmatpush.bf16.msra.mxu0 0
      %1990 = vmatpush.bf16.msra.mxu0 0
      %1991 = vmatpush.bf16.msra.mxu0 %v1984
      %1992 = vmatpush.bf16.msra.mxu0 %v1983
      %1993 = vmatmul.bf16.gmra.mxu0 %v643
      %v1994 = vpop.f32.mrf.mxu0
      %v1995 = vadd.f32 %v640, %v1994
      %v1996 = vpop.f32.mrf.mxu0
      %1997 = vdwg.mxu0
      %p1998 = scmp.ge.s32.totalorder %s1827, 1
      %s1999 = scalar_select %p1998, 1, 0
      %v2000 = vstv %s1999
      %vm2001 = vcmp.eq.s32.totalorder %v2000, 1
      %vm2002 = vmand %vm2001, %vm384
      %v2003 = vsel %vm2002, 1, 0
      %vm2004 = vcmp.eq.s32.totalorder %v2003, 1
      %v2005 = vsel %vm2004, %v1995, 0.0
      %v2007 = vrot.slane %v2005, 1
      %v2008 = vrot.slane %v2005, 2
      %v2009 = vrot.slane %v2005, 3
      %2013 = vst.msk [vmem:[%s357 + $0x7] sm:$0x1] %vm673, %v2005
      %2014 = vst.msk [vmem:[%s357 + $0x17] sm:$0x1] %vm673, %v2007
      %2015 = vst.msk [vmem:[%s357 + $0x27] sm:$0x1] %vm673, %v2008
      %2016 = vst.msk [vmem:[%s357 + $0x37] sm:$0x1] %vm673, %v2009
      %s2017 = sadd.s32 %s385, 8
      %2019 = vset.pattern.permute.xlu0 0
      %2020 = vperm.xlu0 %2019, %v361
      %v2021 = vpop.permute.xlu0 %2020
      %v2023 = vsub.f32 %v2021, %v362
      %s2024 = scvt.s32.f32 %s2017
      %v2025 = vstv %s2024
      %v2026 = vsub.f32 %v2025, %v383
      %v2027 = vmul.f32 %v2026, 0.001953125
      %v2028 = vfloor.f32 %v2027
      %v2029 = vsub.f32 %v2027, %v2028
      %v2030 = vfloor.f32 %v2023
      %v2031 = vsub.f32 %v2023, %v2030
      %v2032 = vmul.f32 %v2023, 0.041666668
      %v2033 = vfloor.f32 %v2032
      %v2034 = vsub.f32 %v2032, %v2033
      %v2035 = vmul.f32 %v2023, 0.005952381
      %v2036 = vfloor.f32 %v2035
      %v2037 = vsub.f32 %v2035, %v2036
      %v2039 = vrot.slane %v2031, 7
      %v2042 = vrot.slane %v2034, 6
      %v2045 = vrot.slane %v2037, 5
      %v2047 = vsel %vm415, %v2029, %v2039
      %v2048 = vsel %vm417, %v2047, %v2042
      %v2049 = vsel %vm419, %v2048, %v2045
      %v2050 = vpack.c.bf16 %v2049, %v2049
      %v2052 = vsel %vm417, %v2050, 0
      %2054 = vmatpush.bf16.msra.mxu0 0
      %2055 = vmatpush.bf16.msra.mxu0 0
      %2056 = vmatpush.bf16.msra.mxu0 0
      %2057 = vmatpush.bf16.msra.mxu0 0
      %2058 = vmatpush.bf16.msra.mxu0 0
      %2059 = vmatpush.bf16.msra.mxu0 0
      %2060 = vmatpush.bf16.msra.mxu0 0
      %2061 = vmatpush.bf16.msra.mxu0 %v2052
      %2062 = vmatmul.bf16.gmra.mxu0 %v454
      %v2063 = vpop.f32.mrf.mxu0
      %v2064 = vadd.f32 %v425, %v2063
      %v2065 = vpop.f32.mrf.mxu0
      %v2066 = vadd.f32 %v430, %v2065
      %2067 = vmatmul.bf16.gmra.mxu0 %v457
      %v2068 = vpop.f32.mrf.mxu0
      %v2069 = vadd.f32 %v435, %v2068
      %v2070 = vpop.f32.mrf.mxu0
      %v2071 = vadd.f32 %v440, %v2070
      %2072 = vdwg.mxu0
      %v2073 = vpack.c.bf16 %v2064, %v2064
      %v2074 = vpack.c.bf16 %v2066, %v2066
      %v2075 = vpack.c.bf16 %v2069, %v2069
      %v2076 = vpack.c.bf16 %v2071, %v2071
      %v2077 = vunpack.c.l.bf16 %v2073
      %v2078 = vunpack.c.l.bf16 %v2074
      %v2079 = vunpack.c.l.bf16 %v2075
      %v2080 = vunpack.c.l.bf16 %v2076
      %v2081 = vmul.f32 %v2077, 0.5
      %v2082 = vmul.f32 %v2078, 0.5
      %v2083 = vmul.f32 %v2079, 0.5
      %v2084 = vmul.f32 %v2080, 0.5
      %v2085 = vpack.c.bf16 %v2081, %v2081
      %v2086 = vpack.c.bf16 %v2082, %v2082
      %v2087 = vpack.c.bf16 %v2083, %v2083
      %v2088 = vpack.c.bf16 %v2084, %v2084
      %v2089 = vunpack.c.l.bf16 %v2085
      %v2090 = vunpack.c.l.bf16 %v2086
      %v2091 = vunpack.c.l.bf16 %v2087
      %v2092 = vunpack.c.l.bf16 %v2088
      %v2093 = vtanh.pop %v2089
      %v2094 = vtanh.pop %v2090
      %v2095 = vtanh.pop %v2091
      %v2096 = vtanh.pop %v2092
      %v2097 = vpack.c.bf16 %v2093, %v2093
      %v2098 = vpack.c.bf16 %v2094, %v2094
      %v2099 = vpack.c.bf16 %v2095, %v2095
      %v2100 = vpack.c.bf16 %v2096, %v2096
      %v2101 = vunpack.c.l.bf16 %v2097
      %v2102 = vunpack.c.l.bf16 %v2098
      %v2103 = vunpack.c.l.bf16 %v2099
      %v2104 = vunpack.c.l.bf16 %v2100
      %v2105 = vmul.f32 %v2089, %v2101
      %v2106 = vmul.f32 %v2090, %v2102
      %v2107 = vmul.f32 %v2091, %v2103
      %v2108 = vmul.f32 %v2092, %v2104
      %v2109 = vpack.c.bf16 %v2105, %v2105
      %v2110 = vpack.c.bf16 %v2106, %v2106
      %v2111 = vpack.c.bf16 %v2107, %v2107
      %v2112 = vpack.c.bf16 %v2108, %v2108
      %v2113 = vunpack.c.l.bf16 %v2109
      %v2114 = vunpack.c.l.bf16 %v2110
      %v2115 = vunpack.c.l.bf16 %v2111
      %v2116 = vunpack.c.l.bf16 %v2112
      %v2117 = vadd.f32 %v2089, %v2113
      %v2118 = vadd.f32 %v2090, %v2114
      %v2119 = vadd.f32 %v2091, %v2115
      %v2120 = vadd.f32 %v2092, %v2116
      %v2121 = vpack.c.bf16 %v2118, %v2117
      %v2122 = vpack.c.bf16 %v2120, %v2119
      %2123 = vmatpush.bf16.msra.mxu0 0
      %2124 = vmatpush.bf16.msra.mxu0 0
      %2125 = vmatpush.bf16.msra.mxu0 0
      %2126 = vmatpush.bf16.msra.mxu0 0
      %2127 = vmatpush.bf16.msra.mxu0 0
      %2128 = vmatpush.bf16.msra.mxu0 0
      %2129 = vmatpush.bf16.msra.mxu0 %v2122
      %2130 = vmatpush.bf16.msra.mxu0 %v2121
      %2131 = vmatmul.bf16.gmra.mxu0 %v563
      %v2132 = vpop.f32.mrf.mxu0
      %v2133 = vadd.f32 %v534, %v2132
      %v2134 = vpop.f32.mrf.mxu0
      %v2135 = vadd.f32 %v539, %v2134
      %2136 = vmatmul.bf16.gmra.mxu0 %v566
      %v2137 = vpop.f32.mrf.mxu0
      %v2138 = vadd.f32 %v544, %v2137
      %v2139 = vpop.f32.mrf.mxu0
      %v2140 = vadd.f32 %v549, %v2139
      %2141 = vdwg.mxu0
      %v2142 = vpack.c.bf16 %v2133, %v2133
      %v2143 = vpack.c.bf16 %v2135, %v2135
      %v2144 = vpack.c.bf16 %v2138, %v2138
      %v2145 = vpack.c.bf16 %v2140, %v2140
      %v2146 = vunpack.c.l.bf16 %v2142
      %v2147 = vunpack.c.l.bf16 %v2143
      %v2148 = vunpack.c.l.bf16 %v2144
      %v2149 = vunpack.c.l.bf16 %v2145
      %v2150 = vmul.f32 %v2146, 0.5
      %v2151 = vmul.f32 %v2147, 0.5
      %v2152 = vmul.f32 %v2148, 0.5
      %v2153 = vmul.f32 %v2149, 0.5
      %v2154 = vpack.c.bf16 %v2150, %v2150
      %v2155 = vpack.c.bf16 %v2151, %v2151
      %v2156 = vpack.c.bf16 %v2152, %v2152
      %v2157 = vpack.c.bf16 %v2153, %v2153
      %v2158 = vunpack.c.l.bf16 %v2154
      %v2159 = vunpack.c.l.bf16 %v2155
      %v2160 = vunpack.c.l.bf16 %v2156
      %v2161 = vunpack.c.l.bf16 %v2157
      %v2162 = vtanh.pop %v2158
      %v2163 = vtanh.pop %v2159
      %v2164 = vtanh.pop %v2160
      %v2165 = vtanh.pop %v2161
      %v2166 = vpack.c.bf16 %v2162, %v2162
      %v2167 = vpack.c.bf16 %v2163, %v2163
      %v2168 = vpack.c.bf16 %v2164, %v2164
      %v2169 = vpack.c.bf16 %v2165, %v2165
      %v2170 = vunpack.c.l.bf16 %v2166
      %v2171 = vunpack.c.l.bf16 %v2167
      %v2172 = vunpack.c.l.bf16 %v2168
      %v2173 = vunpack.c.l.bf16 %v2169
      %v2174 = vmul.f32 %v2158, %v2170
      %v2175 = vmul.f32 %v2159, %v2171
      %v2176 = vmul.f32 %v2160, %v2172
      %v2177 = vmul.f32 %v2161, %v2173
      %v2178 = vpack.c.bf16 %v2174, %v2174
      %v2179 = vpack.c.bf16 %v2175, %v2175
      %v2180 = vpack.c.bf16 %v2176, %v2176
      %v2181 = vpack.c.bf16 %v2177, %v2177
      %v2182 = vunpack.c.l.bf16 %v2178
      %v2183 = vunpack.c.l.bf16 %v2179
      %v2184 = vunpack.c.l.bf16 %v2180
      %v2185 = vunpack.c.l.bf16 %v2181
      %v2186 = vadd.f32 %v2158, %v2182
      %v2187 = vadd.f32 %v2159, %v2183
      %v2188 = vadd.f32 %v2160, %v2184
      %v2189 = vadd.f32 %v2161, %v2185
      %v2190 = vpack.c.bf16 %v2187, %v2186
      %v2191 = vpack.c.bf16 %v2189, %v2188
      %2192 = vmatpush.bf16.msra.mxu0 0
      %2193 = vmatpush.bf16.msra.mxu0 0
      %2194 = vmatpush.bf16.msra.mxu0 0
      %2195 = vmatpush.bf16.msra.mxu0 0
      %2196 = vmatpush.bf16.msra.mxu0 0
      %2197 = vmatpush.bf16.msra.mxu0 0
      %2198 = vmatpush.bf16.msra.mxu0 %v2191
      %2199 = vmatpush.bf16.msra.mxu0 %v2190
      %2200 = vmatmul.bf16.gmra.mxu0 %v643
      %v2201 = vpop.f32.mrf.mxu0
      %v2202 = vadd.f32 %v640, %v2201
      %v2203 = vpop.f32.mrf.mxu0
      %2204 = vdwg.mxu0
      %p2205 = scmp.ge.s32.totalorder %s2017, 1
      %s2206 = scalar_select %p2205, 1, 0
      %v2207 = vstv %s2206
      %vm2208 = vcmp.eq.s32.totalorder %v2207, 1
      %vm2209 = vmand %vm2208, %vm384
      %v2210 = vsel %vm2209, 1, 0
      %vm2211 = vcmp.eq.s32.totalorder %v2210, 1
      %v2212 = vsel %vm2211, %v2202, 0.0
      %v2214 = vrot.slane %v2212, 1
      %v2215 = vrot.slane %v2212, 2
      %v2216 = vrot.slane %v2212, 3
      %2220 = vst.msk [vmem:[%s357 + $0x8] sm:$0x1] %vm673, %v2212
      %2221 = vst.msk [vmem:[%s357 + $0x18] sm:$0x1] %vm673, %v2214
      %2222 = vst.msk [vmem:[%s357 + $0x28] sm:$0x1] %vm673, %v2215
      %2223 = vst.msk [vmem:[%s357 + $0x38] sm:$0x1] %vm673, %v2216
      %s2224 = sadd.s32 %s385, 9
      %v2225 = vsub.f32 %v2021, %v680
      %s2226 = scvt.s32.f32 %s2224
      %v2227 = vstv %s2226
      %v2228 = vsub.f32 %v2227, %v383
      %v2229 = vmul.f32 %v2228, 0.001953125
      %v2230 = vfloor.f32 %v2229
      %v2231 = vsub.f32 %v2229, %v2230
      %v2232 = vfloor.f32 %v2225
      %v2233 = vsub.f32 %v2225, %v2232
      %v2234 = vmul.f32 %v2225, 0.041666668
      %v2235 = vfloor.f32 %v2234
      %v2236 = vsub.f32 %v2234, %v2235
      %v2237 = vmul.f32 %v2225, 0.005952381
      %v2238 = vfloor.f32 %v2237
      %v2239 = vsub.f32 %v2237, %v2238
      %v2241 = vrot.slane %v2236, 7
      %v2244 = vrot.slane %v2239, 6
      %v2246 = vsel %vm415, %v2231, %v2233
      %v2247 = vsel %vm417, %v2246, %v2241
      %v2248 = vsel %vm419, %v2247, %v2244
      %v2249 = vpack.c.bf16 %v2248, %v2248
      %v2251 = vsel %vm417, %v2249, 0
      %2253 = vmatpush.bf16.msra.mxu0 0
      %2254 = vmatpush.bf16.msra.mxu0 0
      %2255 = vmatpush.bf16.msra.mxu0 0
      %2256 = vmatpush.bf16.msra.mxu0 0
      %2257 = vmatpush.bf16.msra.mxu0 0
      %2258 = vmatpush.bf16.msra.mxu0 0
      %2259 = vmatpush.bf16.msra.mxu0 0
      %2260 = vmatpush.bf16.msra.mxu0 %v2251
      %2261 = vmatmul.bf16.gmra.mxu0 %v454
      %v2262 = vpop.f32.mrf.mxu0
      %v2263 = vadd.f32 %v425, %v2262
      %v2264 = vpop.f32.mrf.mxu0
      %v2265 = vadd.f32 %v430, %v2264
      %2266 = vmatmul.bf16.gmra.mxu0 %v457
      %v2267 = vpop.f32.mrf.mxu0
      %v2268 = vadd.f32 %v435, %v2267
      %v2269 = vpop.f32.mrf.mxu0
      %v2270 = vadd.f32 %v440, %v2269
      %2271 = vdwg.mxu0
      %v2272 = vpack.c.bf16 %v2263, %v2263
      %v2273 = vpack.c.bf16 %v2265, %v2265
      %v2274 = vpack.c.bf16 %v2268, %v2268
      %v2275 = vpack.c.bf16 %v2270, %v2270
      %v2276 = vunpack.c.l.bf16 %v2272
      %v2277 = vunpack.c.l.bf16 %v2273
      %v2278 = vunpack.c.l.bf16 %v2274
      %v2279 = vunpack.c.l.bf16 %v2275
      %v2280 = vmul.f32 %v2276, 0.5
      %v2281 = vmul.f32 %v2277, 0.5
      %v2282 = vmul.f32 %v2278, 0.5
      %v2283 = vmul.f32 %v2279, 0.5
      %v2284 = vpack.c.bf16 %v2280, %v2280
      %v2285 = vpack.c.bf16 %v2281, %v2281
      %v2286 = vpack.c.bf16 %v2282, %v2282
      %v2287 = vpack.c.bf16 %v2283, %v2283
      %v2288 = vunpack.c.l.bf16 %v2284
      %v2289 = vunpack.c.l.bf16 %v2285
      %v2290 = vunpack.c.l.bf16 %v2286
      %v2291 = vunpack.c.l.bf16 %v2287
      %v2292 = vtanh.pop %v2288
      %v2293 = vtanh.pop %v2289
      %v2294 = vtanh.pop %v2290
      %v2295 = vtanh.pop %v2291
      %v2296 = vpack.c.bf16 %v2292, %v2292
      %v2297 = vpack.c.bf16 %v2293, %v2293
      %v2298 = vpack.c.bf16 %v2294, %v2294
      %v2299 = vpack.c.bf16 %v2295, %v2295
      %v2300 = vunpack.c.l.bf16 %v2296
      %v2301 = vunpack.c.l.bf16 %v2297
      %v2302 = vunpack.c.l.bf16 %v2298
      %v2303 = vunpack.c.l.bf16 %v2299
      %v2304 = vmul.f32 %v2288, %v2300
      %v2305 = vmul.f32 %v2289, %v2301
      %v2306 = vmul.f32 %v2290, %v2302
      %v2307 = vmul.f32 %v2291, %v2303
      %v2308 = vpack.c.bf16 %v2304, %v2304
      %v2309 = vpack.c.bf16 %v2305, %v2305
      %v2310 = vpack.c.bf16 %v2306, %v2306
      %v2311 = vpack.c.bf16 %v2307, %v2307
      %v2312 = vunpack.c.l.bf16 %v2308
      %v2313 = vunpack.c.l.bf16 %v2309
      %v2314 = vunpack.c.l.bf16 %v2310
      %v2315 = vunpack.c.l.bf16 %v2311
      %v2316 = vadd.f32 %v2288, %v2312
      %v2317 = vadd.f32 %v2289, %v2313
      %v2318 = vadd.f32 %v2290, %v2314
      %v2319 = vadd.f32 %v2291, %v2315
      %v2320 = vpack.c.bf16 %v2317, %v2316
      %v2321 = vpack.c.bf16 %v2319, %v2318
      %2322 = vmatpush.bf16.msra.mxu0 0
      %2323 = vmatpush.bf16.msra.mxu0 0
      %2324 = vmatpush.bf16.msra.mxu0 0
      %2325 = vmatpush.bf16.msra.mxu0 0
      %2326 = vmatpush.bf16.msra.mxu0 0
      %2327 = vmatpush.bf16.msra.mxu0 0
      %2328 = vmatpush.bf16.msra.mxu0 %v2321
      %2329 = vmatpush.bf16.msra.mxu0 %v2320
      %2330 = vmatmul.bf16.gmra.mxu0 %v563
      %v2331 = vpop.f32.mrf.mxu0
      %v2332 = vadd.f32 %v534, %v2331
      %v2333 = vpop.f32.mrf.mxu0
      %v2334 = vadd.f32 %v539, %v2333
      %2335 = vmatmul.bf16.gmra.mxu0 %v566
      %v2336 = vpop.f32.mrf.mxu0
      %v2337 = vadd.f32 %v544, %v2336
      %v2338 = vpop.f32.mrf.mxu0
      %v2339 = vadd.f32 %v549, %v2338
      %2340 = vdwg.mxu0
      %v2341 = vpack.c.bf16 %v2332, %v2332
      %v2342 = vpack.c.bf16 %v2334, %v2334
      %v2343 = vpack.c.bf16 %v2337, %v2337
      %v2344 = vpack.c.bf16 %v2339, %v2339
      %v2345 = vunpack.c.l.bf16 %v2341
      %v2346 = vunpack.c.l.bf16 %v2342
      %v2347 = vunpack.c.l.bf16 %v2343
      %v2348 = vunpack.c.l.bf16 %v2344
      %v2349 = vmul.f32 %v2345, 0.5
      %v2350 = vmul.f32 %v2346, 0.5
      %v2351 = vmul.f32 %v2347, 0.5
      %v2352 = vmul.f32 %v2348, 0.5
      %v2353 = vpack.c.bf16 %v2349, %v2349
      %v2354 = vpack.c.bf16 %v2350, %v2350
      %v2355 = vpack.c.bf16 %v2351, %v2351
      %v2356 = vpack.c.bf16 %v2352, %v2352
      %v2357 = vunpack.c.l.bf16 %v2353
      %v2358 = vunpack.c.l.bf16 %v2354
      %v2359 = vunpack.c.l.bf16 %v2355
      %v2360 = vunpack.c.l.bf16 %v2356
      %v2361 = vtanh.pop %v2357
      %v2362 = vtanh.pop %v2358
      %v2363 = vtanh.pop %v2359
      %v2364 = vtanh.pop %v2360
      %v2365 = vpack.c.bf16 %v2361, %v2361
      %v2366 = vpack.c.bf16 %v2362, %v2362
      %v2367 = vpack.c.bf16 %v2363, %v2363
      %v2368 = vpack.c.bf16 %v2364, %v2364
      %v2369 = vunpack.c.l.bf16 %v2365
      %v2370 = vunpack.c.l.bf16 %v2366
      %v2371 = vunpack.c.l.bf16 %v2367
      %v2372 = vunpack.c.l.bf16 %v2368
      %v2373 = vmul.f32 %v2357, %v2369
      %v2374 = vmul.f32 %v2358, %v2370
      %v2375 = vmul.f32 %v2359, %v2371
      %v2376 = vmul.f32 %v2360, %v2372
      %v2377 = vpack.c.bf16 %v2373, %v2373
      %v2378 = vpack.c.bf16 %v2374, %v2374
      %v2379 = vpack.c.bf16 %v2375, %v2375
      %v2380 = vpack.c.bf16 %v2376, %v2376
      %v2381 = vunpack.c.l.bf16 %v2377
      %v2382 = vunpack.c.l.bf16 %v2378
      %v2383 = vunpack.c.l.bf16 %v2379
      %v2384 = vunpack.c.l.bf16 %v2380
      %v2385 = vadd.f32 %v2357, %v2381
      %v2386 = vadd.f32 %v2358, %v2382
      %v2387 = vadd.f32 %v2359, %v2383
      %v2388 = vadd.f32 %v2360, %v2384
      %v2389 = vpack.c.bf16 %v2386, %v2385
      %v2390 = vpack.c.bf16 %v2388, %v2387
      %2391 = vmatpush.bf16.msra.mxu0 0
      %2392 = vmatpush.bf16.msra.mxu0 0
      %2393 = vmatpush.bf16.msra.mxu0 0
      %2394 = vmatpush.bf16.msra.mxu0 0
      %2395 = vmatpush.bf16.msra.mxu0 0
      %2396 = vmatpush.bf16.msra.mxu0 0
      %2397 = vmatpush.bf16.msra.mxu0 %v2390
      %2398 = vmatpush.bf16.msra.mxu0 %v2389
      %2399 = vmatmul.bf16.gmra.mxu0 %v643
      %v2400 = vpop.f32.mrf.mxu0
      %v2401 = vadd.f32 %v640, %v2400
      %v2402 = vpop.f32.mrf.mxu0
      %2403 = vdwg.mxu0
      %p2404 = scmp.ge.s32.totalorder %s2224, 1
      %s2405 = scalar_select %p2404, 1, 0
      %v2406 = vstv %s2405
      %vm2407 = vcmp.eq.s32.totalorder %v2406, 1
      %vm2408 = vmand %vm2407, %vm384
      %v2409 = vsel %vm2408, 1, 0
      %vm2410 = vcmp.eq.s32.totalorder %v2409, 1
      %v2411 = vsel %vm2410, %v2401, 0.0
      %v2413 = vrot.slane %v2411, 1
      %v2414 = vrot.slane %v2411, 2
      %v2415 = vrot.slane %v2411, 3
      %2419 = vst.msk [vmem:[%s357 + $0x9] sm:$0x1] %vm673, %v2411
      %2420 = vst.msk [vmem:[%s357 + $0x19] sm:$0x1] %vm673, %v2413
      %2421 = vst.msk [vmem:[%s357 + $0x29] sm:$0x1] %vm673, %v2414
      %2422 = vst.msk [vmem:[%s357 + $0x39] sm:$0x1] %vm673, %v2415
      %s2423 = sadd.s32 %s385, 10
      %s2424 = scvt.s32.f32 %s2423
      %v2425 = vstv %s2424
      %v2426 = vsub.f32 %v2425, %v383
      %v2427 = vmul.f32 %v2426, 0.001953125
      %v2428 = vfloor.f32 %v2427
      %v2429 = vsub.f32 %v2427, %v2428
      %v2431 = vrot.slane %v2233, 1
      %v2433 = vrot.slane %v2239, 7
      %v2435 = vsel %vm415, %v2429, %v2431
      %v2436 = vsel %vm417, %v2435, %v2236
      %v2437 = vsel %vm419, %v2436, %v2433
      %v2438 = vpack.c.bf16 %v2437, %v2437
      %v2440 = vsel %vm417, %v2438, 0
      %2442 = vmatpush.bf16.msra.mxu0 0
      %2443 = vmatpush.bf16.msra.mxu0 0
      %2444 = vmatpush.bf16.msra.mxu0 0
      %2445 = vmatpush.bf16.msra.mxu0 0
      %2446 = vmatpush.bf16.msra.mxu0 0
      %2447 = vmatpush.bf16.msra.mxu0 0
      %2448 = vmatpush.bf16.msra.mxu0 0
      %2449 = vmatpush.bf16.msra.mxu0 %v2440
      %2450 = vmatmul.bf16.gmra.mxu0 %v454
      %v2451 = vpop.f32.mrf.mxu0
      %v2452 = vadd.f32 %v425, %v2451
      %v2453 = vpop.f32.mrf.mxu0
      %v2454 = vadd.f32 %v430, %v2453
      %2455 = vmatmul.bf16.gmra.mxu0 %v457
      %v2456 = vpop.f32.mrf.mxu0
      %v2457 = vadd.f32 %v435, %v2456
      %v2458 = vpop.f32.mrf.mxu0
      %v2459 = vadd.f32 %v440, %v2458
      %2460 = vdwg.mxu0
      %v2461 = vpack.c.bf16 %v2452, %v2452
      %v2462 = vpack.c.bf16 %v2454, %v2454
      %v2463 = vpack.c.bf16 %v2457, %v2457
      %v2464 = vpack.c.bf16 %v2459, %v2459
      %v2465 = vunpack.c.l.bf16 %v2461
      %v2466 = vunpack.c.l.bf16 %v2462
      %v2467 = vunpack.c.l.bf16 %v2463
      %v2468 = vunpack.c.l.bf16 %v2464
      %v2469 = vmul.f32 %v2465, 0.5
      %v2470 = vmul.f32 %v2466, 0.5
      %v2471 = vmul.f32 %v2467, 0.5
      %v2472 = vmul.f32 %v2468, 0.5
      %v2473 = vpack.c.bf16 %v2469, %v2469
      %v2474 = vpack.c.bf16 %v2470, %v2470
      %v2475 = vpack.c.bf16 %v2471, %v2471
      %v2476 = vpack.c.bf16 %v2472, %v2472
      %v2477 = vunpack.c.l.bf16 %v2473
      %v2478 = vunpack.c.l.bf16 %v2474
      %v2479 = vunpack.c.l.bf16 %v2475
      %v2480 = vunpack.c.l.bf16 %v2476
      %v2481 = vtanh.pop %v2477
      %v2482 = vtanh.pop %v2478
      %v2483 = vtanh.pop %v2479
      %v2484 = vtanh.pop %v2480
      %v2485 = vpack.c.bf16 %v2481, %v2481
      %v2486 = vpack.c.bf16 %v2482, %v2482
      %v2487 = vpack.c.bf16 %v2483, %v2483
      %v2488 = vpack.c.bf16 %v2484, %v2484
      %v2489 = vunpack.c.l.bf16 %v2485
      %v2490 = vunpack.c.l.bf16 %v2486
      %v2491 = vunpack.c.l.bf16 %v2487
      %v2492 = vunpack.c.l.bf16 %v2488
      %v2493 = vmul.f32 %v2477, %v2489
      %v2494 = vmul.f32 %v2478, %v2490
      %v2495 = vmul.f32 %v2479, %v2491
      %v2496 = vmul.f32 %v2480, %v2492
      %v2497 = vpack.c.bf16 %v2493, %v2493
      %v2498 = vpack.c.bf16 %v2494, %v2494
      %v2499 = vpack.c.bf16 %v2495, %v2495
      %v2500 = vpack.c.bf16 %v2496, %v2496
      %v2501 = vunpack.c.l.bf16 %v2497
      %v2502 = vunpack.c.l.bf16 %v2498
      %v2503 = vunpack.c.l.bf16 %v2499
      %v2504 = vunpack.c.l.bf16 %v2500
      %v2505 = vadd.f32 %v2477, %v2501
      %v2506 = vadd.f32 %v2478, %v2502
      %v2507 = vadd.f32 %v2479, %v2503
      %v2508 = vadd.f32 %v2480, %v2504
      %v2509 = vpack.c.bf16 %v2506, %v2505
      %v2510 = vpack.c.bf16 %v2508, %v2507
      %2511 = vmatpush.bf16.msra.mxu0 0
      %2512 = vmatpush.bf16.msra.mxu0 0
      %2513 = vmatpush.bf16.msra.mxu0 0
      %2514 = vmatpush.bf16.msra.mxu0 0
      %2515 = vmatpush.bf16.msra.mxu0 0
      %2516 = vmatpush.bf16.msra.mxu0 0
      %2517 = vmatpush.bf16.msra.mxu0 %v2510
      %2518 = vmatpush.bf16.msra.mxu0 %v2509
      %2519 = vmatmul.bf16.gmra.mxu0 %v563
      %v2520 = vpop.f32.mrf.mxu0
      %v2521 = vadd.f32 %v534, %v2520
      %v2522 = vpop.f32.mrf.mxu0
      %v2523 = vadd.f32 %v539, %v2522
      %2524 = vmatmul.bf16.gmra.mxu0 %v566
      %v2525 = vpop.f32.mrf.mxu0
      %v2526 = vadd.f32 %v544, %v2525
      %v2527 = vpop.f32.mrf.mxu0
      %v2528 = vadd.f32 %v549, %v2527
      %2529 = vdwg.mxu0
      %v2530 = vpack.c.bf16 %v2521, %v2521
      %v2531 = vpack.c.bf16 %v2523, %v2523
      %v2532 = vpack.c.bf16 %v2526, %v2526
      %v2533 = vpack.c.bf16 %v2528, %v2528
      %v2534 = vunpack.c.l.bf16 %v2530
      %v2535 = vunpack.c.l.bf16 %v2531
      %v2536 = vunpack.c.l.bf16 %v2532
      %v2537 = vunpack.c.l.bf16 %v2533
      %v2538 = vmul.f32 %v2534, 0.5
      %v2539 = vmul.f32 %v2535, 0.5
      %v2540 = vmul.f32 %v2536, 0.5
      %v2541 = vmul.f32 %v2537, 0.5
      %v2542 = vpack.c.bf16 %v2538, %v2538
      %v2543 = vpack.c.bf16 %v2539, %v2539
      %v2544 = vpack.c.bf16 %v2540, %v2540
      %v2545 = vpack.c.bf16 %v2541, %v2541
      %v2546 = vunpack.c.l.bf16 %v2542
      %v2547 = vunpack.c.l.bf16 %v2543
      %v2548 = vunpack.c.l.bf16 %v2544
      %v2549 = vunpack.c.l.bf16 %v2545
      %v2550 = vtanh.pop %v2546
      %v2551 = vtanh.pop %v2547
      %v2552 = vtanh.pop %v2548
      %v2553 = vtanh.pop %v2549
      %v2554 = vpack.c.bf16 %v2550, %v2550
      %v2555 = vpack.c.bf16 %v2551, %v2551
      %v2556 = vpack.c.bf16 %v2552, %v2552
      %v2557 = vpack.c.bf16 %v2553, %v2553
      %v2558 = vunpack.c.l.bf16 %v2554
      %v2559 = vunpack.c.l.bf16 %v2555
      %v2560 = vunpack.c.l.bf16 %v2556
      %v2561 = vunpack.c.l.bf16 %v2557
      %v2562 = vmul.f32 %v2546, %v2558
      %v2563 = vmul.f32 %v2547, %v2559
      %v2564 = vmul.f32 %v2548, %v2560
      %v2565 = vmul.f32 %v2549, %v2561
      %v2566 = vpack.c.bf16 %v2562, %v2562
      %v2567 = vpack.c.bf16 %v2563, %v2563
      %v2568 = vpack.c.bf16 %v2564, %v2564
      %v2569 = vpack.c.bf16 %v2565, %v2565
      %v2570 = vunpack.c.l.bf16 %v2566
      %v2571 = vunpack.c.l.bf16 %v2567
      %v2572 = vunpack.c.l.bf16 %v2568
      %v2573 = vunpack.c.l.bf16 %v2569
      %v2574 = vadd.f32 %v2546, %v2570
      %v2575 = vadd.f32 %v2547, %v2571
      %v2576 = vadd.f32 %v2548, %v2572
      %v2577 = vadd.f32 %v2549, %v2573
      %v2578 = vpack.c.bf16 %v2575, %v2574
      %v2579 = vpack.c.bf16 %v2577, %v2576
      %2580 = vmatpush.bf16.msra.mxu0 0
      %2581 = vmatpush.bf16.msra.mxu0 0
      %2582 = vmatpush.bf16.msra.mxu0 0
      %2583 = vmatpush.bf16.msra.mxu0 0
      %2584 = vmatpush.bf16.msra.mxu0 0
      %2585 = vmatpush.bf16.msra.mxu0 0
      %2586 = vmatpush.bf16.msra.mxu0 %v2579
      %2587 = vmatpush.bf16.msra.mxu0 %v2578
      %2588 = vmatmul.bf16.gmra.mxu0 %v643
      %v2589 = vpop.f32.mrf.mxu0
      %v2590 = vadd.f32 %v640, %v2589
      %v2591 = vpop.f32.mrf.mxu0
      %2592 = vdwg.mxu0
      %p2593 = scmp.ge.s32.totalorder %s2423, 1
      %s2594 = scalar_select %p2593, 1, 0
      %v2595 = vstv %s2594
      %vm2596 = vcmp.eq.s32.totalorder %v2595, 1
      %vm2597 = vmand %vm2596, %vm384
      %v2598 = vsel %vm2597, 1, 0
      %vm2599 = vcmp.eq.s32.totalorder %v2598, 1
      %v2600 = vsel %vm2599, %v2590, 0.0
      %v2602 = vrot.slane %v2600, 1
      %v2603 = vrot.slane %v2600, 2
      %v2604 = vrot.slane %v2600, 3
      %2608 = vst.msk [vmem:[%s357 + $0xa] sm:$0x1] %vm673, %v2600
      %2609 = vst.msk [vmem:[%s357 + $0x1a] sm:$0x1] %vm673, %v2602
      %2610 = vst.msk [vmem:[%s357 + $0x2a] sm:$0x1] %vm673, %v2603
      %2611 = vst.msk [vmem:[%s357 + $0x3a] sm:$0x1] %vm673, %v2604
      %s2612 = sadd.s32 %s385, 11
      %s2613 = scvt.s32.f32 %s2612
      %v2614 = vstv %s2613
      %v2615 = vsub.f32 %v2614, %v383
      %v2616 = vmul.f32 %v2615, 0.001953125
      %v2617 = vfloor.f32 %v2616
      %v2618 = vsub.f32 %v2616, %v2617
      %v2619 = vrot.slane %v2233, 2
      %v2621 = vrot.slane %v2236, 1
      %v2623 = vsel %vm415, %v2618, %v2619
      %v2624 = vsel %vm417, %v2623, %v2621
      %v2625 = vsel %vm419, %v2624, %v2239
      %v2626 = vpack.c.bf16 %v2625, %v2625
      %v2628 = vsel %vm417, %v2626, 0
      %2630 = vmatpush.bf16.msra.mxu0 0
      %2631 = vmatpush.bf16.msra.mxu0 0
      %2632 = vmatpush.bf16.msra.mxu0 0
      %2633 = vmatpush.bf16.msra.mxu0 0
      %2634 = vmatpush.bf16.msra.mxu0 0
      %2635 = vmatpush.bf16.msra.mxu0 0
      %2636 = vmatpush.bf16.msra.mxu0 0
      %2637 = vmatpush.bf16.msra.mxu0 %v2628
      %2638 = vmatmul.bf16.gmra.mxu0 %v454
      %v2639 = vpop.f32.mrf.mxu0
      %v2640 = vadd.f32 %v425, %v2639
      %v2641 = vpop.f32.mrf.mxu0
      %v2642 = vadd.f32 %v430, %v2641
      %2643 = vmatmul.bf16.gmra.mxu0 %v457
      %v2644 = vpop.f32.mrf.mxu0
      %v2645 = vadd.f32 %v435, %v2644
      %v2646 = vpop.f32.mrf.mxu0
      %v2647 = vadd.f32 %v440, %v2646
      %2648 = vdwg.mxu0
      %v2649 = vpack.c.bf16 %v2640, %v2640
      %v2650 = vpack.c.bf16 %v2642, %v2642
      %v2651 = vpack.c.bf16 %v2645, %v2645
      %v2652 = vpack.c.bf16 %v2647, %v2647
      %v2653 = vunpack.c.l.bf16 %v2649
      %v2654 = vunpack.c.l.bf16 %v2650
      %v2655 = vunpack.c.l.bf16 %v2651
      %v2656 = vunpack.c.l.bf16 %v2652
      %v2657 = vmul.f32 %v2653, 0.5
      %v2658 = vmul.f32 %v2654, 0.5
      %v2659 = vmul.f32 %v2655, 0.5
      %v2660 = vmul.f32 %v2656, 0.5
      %v2661 = vpack.c.bf16 %v2657, %v2657
      %v2662 = vpack.c.bf16 %v2658, %v2658
      %v2663 = vpack.c.bf16 %v2659, %v2659
      %v2664 = vpack.c.bf16 %v2660, %v2660
      %v2665 = vunpack.c.l.bf16 %v2661
      %v2666 = vunpack.c.l.bf16 %v2662
      %v2667 = vunpack.c.l.bf16 %v2663
      %v2668 = vunpack.c.l.bf16 %v2664
      %v2669 = vtanh.pop %v2665
      %v2670 = vtanh.pop %v2666
      %v2671 = vtanh.pop %v2667
      %v2672 = vtanh.pop %v2668
      %v2673 = vpack.c.bf16 %v2669, %v2669
      %v2674 = vpack.c.bf16 %v2670, %v2670
      %v2675 = vpack.c.bf16 %v2671, %v2671
      %v2676 = vpack.c.bf16 %v2672, %v2672
      %v2677 = vunpack.c.l.bf16 %v2673
      %v2678 = vunpack.c.l.bf16 %v2674
      %v2679 = vunpack.c.l.bf16 %v2675
      %v2680 = vunpack.c.l.bf16 %v2676
      %v2681 = vmul.f32 %v2665, %v2677
      %v2682 = vmul.f32 %v2666, %v2678
      %v2683 = vmul.f32 %v2667, %v2679
      %v2684 = vmul.f32 %v2668, %v2680
      %v2685 = vpack.c.bf16 %v2681, %v2681
      %v2686 = vpack.c.bf16 %v2682, %v2682
      %v2687 = vpack.c.bf16 %v2683, %v2683
      %v2688 = vpack.c.bf16 %v2684, %v2684
      %v2689 = vunpack.c.l.bf16 %v2685
      %v2690 = vunpack.c.l.bf16 %v2686
      %v2691 = vunpack.c.l.bf16 %v2687
      %v2692 = vunpack.c.l.bf16 %v2688
      %v2693 = vadd.f32 %v2665, %v2689
      %v2694 = vadd.f32 %v2666, %v2690
      %v2695 = vadd.f32 %v2667, %v2691
      %v2696 = vadd.f32 %v2668, %v2692
      %v2697 = vpack.c.bf16 %v2694, %v2693
      %v2698 = vpack.c.bf16 %v2696, %v2695
      %2699 = vmatpush.bf16.msra.mxu0 0
      %2700 = vmatpush.bf16.msra.mxu0 0
      %2701 = vmatpush.bf16.msra.mxu0 0
      %2702 = vmatpush.bf16.msra.mxu0 0
      %2703 = vmatpush.bf16.msra.mxu0 0
      %2704 = vmatpush.bf16.msra.mxu0 0
      %2705 = vmatpush.bf16.msra.mxu0 %v2698
      %2706 = vmatpush.bf16.msra.mxu0 %v2697
      %2707 = vmatmul.bf16.gmra.mxu0 %v563
      %v2708 = vpop.f32.mrf.mxu0
      %v2709 = vadd.f32 %v534, %v2708
      %v2710 = vpop.f32.mrf.mxu0
      %v2711 = vadd.f32 %v539, %v2710
      %2712 = vmatmul.bf16.gmra.mxu0 %v566
      %v2713 = vpop.f32.mrf.mxu0
      %v2714 = vadd.f32 %v544, %v2713
      %v2715 = vpop.f32.mrf.mxu0
      %v2716 = vadd.f32 %v549, %v2715
      %2717 = vdwg.mxu0
      %v2718 = vpack.c.bf16 %v2709, %v2709
      %v2719 = vpack.c.bf16 %v2711, %v2711
      %v2720 = vpack.c.bf16 %v2714, %v2714
      %v2721 = vpack.c.bf16 %v2716, %v2716
      %v2722 = vunpack.c.l.bf16 %v2718
      %v2723 = vunpack.c.l.bf16 %v2719
      %v2724 = vunpack.c.l.bf16 %v2720
      %v2725 = vunpack.c.l.bf16 %v2721
      %v2726 = vmul.f32 %v2722, 0.5
      %v2727 = vmul.f32 %v2723, 0.5
      %v2728 = vmul.f32 %v2724, 0.5
      %v2729 = vmul.f32 %v2725, 0.5
      %v2730 = vpack.c.bf16 %v2726, %v2726
      %v2731 = vpack.c.bf16 %v2727, %v2727
      %v2732 = vpack.c.bf16 %v2728, %v2728
      %v2733 = vpack.c.bf16 %v2729, %v2729
      %v2734 = vunpack.c.l.bf16 %v2730
      %v2735 = vunpack.c.l.bf16 %v2731
      %v2736 = vunpack.c.l.bf16 %v2732
      %v2737 = vunpack.c.l.bf16 %v2733
      %v2738 = vtanh.pop %v2734
      %v2739 = vtanh.pop %v2735
      %v2740 = vtanh.pop %v2736
      %v2741 = vtanh.pop %v2737
      %v2742 = vpack.c.bf16 %v2738, %v2738
      %v2743 = vpack.c.bf16 %v2739, %v2739
      %v2744 = vpack.c.bf16 %v2740, %v2740
      %v2745 = vpack.c.bf16 %v2741, %v2741
      %v2746 = vunpack.c.l.bf16 %v2742
      %v2747 = vunpack.c.l.bf16 %v2743
      %v2748 = vunpack.c.l.bf16 %v2744
      %v2749 = vunpack.c.l.bf16 %v2745
      %v2750 = vmul.f32 %v2734, %v2746
      %v2751 = vmul.f32 %v2735, %v2747
      %v2752 = vmul.f32 %v2736, %v2748
      %v2753 = vmul.f32 %v2737, %v2749
      %v2754 = vpack.c.bf16 %v2750, %v2750
      %v2755 = vpack.c.bf16 %v2751, %v2751
      %v2756 = vpack.c.bf16 %v2752, %v2752
      %v2757 = vpack.c.bf16 %v2753, %v2753
      %v2758 = vunpack.c.l.bf16 %v2754
      %v2759 = vunpack.c.l.bf16 %v2755
      %v2760 = vunpack.c.l.bf16 %v2756
      %v2761 = vunpack.c.l.bf16 %v2757
      %v2762 = vadd.f32 %v2734, %v2758
      %v2763 = vadd.f32 %v2735, %v2759
      %v2764 = vadd.f32 %v2736, %v2760
      %v2765 = vadd.f32 %v2737, %v2761
      %v2766 = vpack.c.bf16 %v2763, %v2762
      %v2767 = vpack.c.bf16 %v2765, %v2764
      %2768 = vmatpush.bf16.msra.mxu0 0
      %2769 = vmatpush.bf16.msra.mxu0 0
      %2770 = vmatpush.bf16.msra.mxu0 0
      %2771 = vmatpush.bf16.msra.mxu0 0
      %2772 = vmatpush.bf16.msra.mxu0 0
      %2773 = vmatpush.bf16.msra.mxu0 0
      %2774 = vmatpush.bf16.msra.mxu0 %v2767
      %2775 = vmatpush.bf16.msra.mxu0 %v2766
      %2776 = vmatmul.bf16.gmra.mxu0 %v643
      %v2777 = vpop.f32.mrf.mxu0
      %v2778 = vadd.f32 %v640, %v2777
      %v2779 = vpop.f32.mrf.mxu0
      %2780 = vdwg.mxu0
      %p2781 = scmp.ge.s32.totalorder %s2612, 1
      %s2782 = scalar_select %p2781, 1, 0
      %v2783 = vstv %s2782
      %vm2784 = vcmp.eq.s32.totalorder %v2783, 1
      %vm2785 = vmand %vm2784, %vm384
      %v2786 = vsel %vm2785, 1, 0
      %vm2787 = vcmp.eq.s32.totalorder %v2786, 1
      %v2788 = vsel %vm2787, %v2778, 0.0
      %v2790 = vrot.slane %v2788, 1
      %v2791 = vrot.slane %v2788, 2
      %v2792 = vrot.slane %v2788, 3
      %2796 = vst.msk [vmem:[%s357 + $0xb] sm:$0x1] %vm673, %v2788
      %2797 = vst.msk [vmem:[%s357 + $0x1b] sm:$0x1] %vm673, %v2790
      %2798 = vst.msk [vmem:[%s357 + $0x2b] sm:$0x1] %vm673, %v2791
      %2799 = vst.msk [vmem:[%s357 + $0x3b] sm:$0x1] %vm673, %v2792
      %s2800 = sadd.s32 %s385, 12
      %s2801 = scvt.s32.f32 %s2800
      %v2802 = vstv %s2801
      %v2803 = vsub.f32 %v2802, %v383
      %v2804 = vmul.f32 %v2803, 0.001953125
      %v2805 = vfloor.f32 %v2804
      %v2806 = vsub.f32 %v2804, %v2805
      %v2807 = vrot.slane %v2233, 3
      %v2809 = vrot.slane %v2236, 2
      %v2811 = vrot.slane %v2239, 1
      %v2813 = vsel %vm415, %v2806, %v2807
      %v2814 = vsel %vm417, %v2813, %v2809
      %v2815 = vsel %vm419, %v2814, %v2811
      %v2816 = vpack.c.bf16 %v2815, %v2815
      %v2818 = vsel %vm417, %v2816, 0
      %2820 = vmatpush.bf16.msra.mxu0 0
      %2821 = vmatpush.bf16.msra.mxu0 0
      %2822 = vmatpush.bf16.msra.mxu0 0
      %2823 = vmatpush.bf16.msra.mxu0 0
      %2824 = vmatpush.bf16.msra.mxu0 0
      %2825 = vmatpush.bf16.msra.mxu0 0
      %2826 = vmatpush.bf16.msra.mxu0 0
      %2827 = vmatpush.bf16.msra.mxu0 %v2818
      %2828 = vmatmul.bf16.gmra.mxu0 %v454
      %v2829 = vpop.f32.mrf.mxu0
      %v2830 = vadd.f32 %v425, %v2829
      %v2831 = vpop.f32.mrf.mxu0
      %v2832 = vadd.f32 %v430, %v2831
      %2833 = vmatmul.bf16.gmra.mxu0 %v457
      %v2834 = vpop.f32.mrf.mxu0
      %v2835 = vadd.f32 %v435, %v2834
      %v2836 = vpop.f32.mrf.mxu0
      %v2837 = vadd.f32 %v440, %v2836
      %2838 = vdwg.mxu0
      %v2839 = vpack.c.bf16 %v2830, %v2830
      %v2840 = vpack.c.bf16 %v2832, %v2832
      %v2841 = vpack.c.bf16 %v2835, %v2835
      %v2842 = vpack.c.bf16 %v2837, %v2837
      %v2843 = vunpack.c.l.bf16 %v2839
      %v2844 = vunpack.c.l.bf16 %v2840
      %v2845 = vunpack.c.l.bf16 %v2841
      %v2846 = vunpack.c.l.bf16 %v2842
      %v2847 = vmul.f32 %v2843, 0.5
      %v2848 = vmul.f32 %v2844, 0.5
      %v2849 = vmul.f32 %v2845, 0.5
      %v2850 = vmul.f32 %v2846, 0.5
      %v2851 = vpack.c.bf16 %v2847, %v2847
      %v2852 = vpack.c.bf16 %v2848, %v2848
      %v2853 = vpack.c.bf16 %v2849, %v2849
      %v2854 = vpack.c.bf16 %v2850, %v2850
      %v2855 = vunpack.c.l.bf16 %v2851
      %v2856 = vunpack.c.l.bf16 %v2852
      %v2857 = vunpack.c.l.bf16 %v2853
      %v2858 = vunpack.c.l.bf16 %v2854
      %v2859 = vtanh.pop %v2855
      %v2860 = vtanh.pop %v2856
      %v2861 = vtanh.pop %v2857
      %v2862 = vtanh.pop %v2858
      %v2863 = vpack.c.bf16 %v2859, %v2859
      %v2864 = vpack.c.bf16 %v2860, %v2860
      %v2865 = vpack.c.bf16 %v2861, %v2861
      %v2866 = vpack.c.bf16 %v2862, %v2862
      %v2867 = vunpack.c.l.bf16 %v2863
      %v2868 = vunpack.c.l.bf16 %v2864
      %v2869 = vunpack.c.l.bf16 %v2865
      %v2870 = vunpack.c.l.bf16 %v2866
      %v2871 = vmul.f32 %v2855, %v2867
      %v2872 = vmul.f32 %v2856, %v2868
      %v2873 = vmul.f32 %v2857, %v2869
      %v2874 = vmul.f32 %v2858, %v2870
      %v2875 = vpack.c.bf16 %v2871, %v2871
      %v2876 = vpack.c.bf16 %v2872, %v2872
      %v2877 = vpack.c.bf16 %v2873, %v2873
      %v2878 = vpack.c.bf16 %v2874, %v2874
      %v2879 = vunpack.c.l.bf16 %v2875
      %v2880 = vunpack.c.l.bf16 %v2876
      %v2881 = vunpack.c.l.bf16 %v2877
      %v2882 = vunpack.c.l.bf16 %v2878
      %v2883 = vadd.f32 %v2855, %v2879
      %v2884 = vadd.f32 %v2856, %v2880
      %v2885 = vadd.f32 %v2857, %v2881
      %v2886 = vadd.f32 %v2858, %v2882
      %v2887 = vpack.c.bf16 %v2884, %v2883
      %v2888 = vpack.c.bf16 %v2886, %v2885
      %2889 = vmatpush.bf16.msra.mxu0 0
      %2890 = vmatpush.bf16.msra.mxu0 0
      %2891 = vmatpush.bf16.msra.mxu0 0
      %2892 = vmatpush.bf16.msra.mxu0 0
      %2893 = vmatpush.bf16.msra.mxu0 0
      %2894 = vmatpush.bf16.msra.mxu0 0
      %2895 = vmatpush.bf16.msra.mxu0 %v2888
      %2896 = vmatpush.bf16.msra.mxu0 %v2887
      %2897 = vmatmul.bf16.gmra.mxu0 %v563
      %v2898 = vpop.f32.mrf.mxu0
      %v2899 = vadd.f32 %v534, %v2898
      %v2900 = vpop.f32.mrf.mxu0
      %v2901 = vadd.f32 %v539, %v2900
      %2902 = vmatmul.bf16.gmra.mxu0 %v566
      %v2903 = vpop.f32.mrf.mxu0
      %v2904 = vadd.f32 %v544, %v2903
      %v2905 = vpop.f32.mrf.mxu0
      %v2906 = vadd.f32 %v549, %v2905
      %2907 = vdwg.mxu0
      %v2908 = vpack.c.bf16 %v2899, %v2899
      %v2909 = vpack.c.bf16 %v2901, %v2901
      %v2910 = vpack.c.bf16 %v2904, %v2904
      %v2911 = vpack.c.bf16 %v2906, %v2906
      %v2912 = vunpack.c.l.bf16 %v2908
      %v2913 = vunpack.c.l.bf16 %v2909
      %v2914 = vunpack.c.l.bf16 %v2910
      %v2915 = vunpack.c.l.bf16 %v2911
      %v2916 = vmul.f32 %v2912, 0.5
      %v2917 = vmul.f32 %v2913, 0.5
      %v2918 = vmul.f32 %v2914, 0.5
      %v2919 = vmul.f32 %v2915, 0.5
      %v2920 = vpack.c.bf16 %v2916, %v2916
      %v2921 = vpack.c.bf16 %v2917, %v2917
      %v2922 = vpack.c.bf16 %v2918, %v2918
      %v2923 = vpack.c.bf16 %v2919, %v2919
      %v2924 = vunpack.c.l.bf16 %v2920
      %v2925 = vunpack.c.l.bf16 %v2921
      %v2926 = vunpack.c.l.bf16 %v2922
      %v2927 = vunpack.c.l.bf16 %v2923
      %v2928 = vtanh.pop %v2924
      %v2929 = vtanh.pop %v2925
      %v2930 = vtanh.pop %v2926
      %v2931 = vtanh.pop %v2927
      %v2932 = vpack.c.bf16 %v2928, %v2928
      %v2933 = vpack.c.bf16 %v2929, %v2929
      %v2934 = vpack.c.bf16 %v2930, %v2930
      %v2935 = vpack.c.bf16 %v2931, %v2931
      %v2936 = vunpack.c.l.bf16 %v2932
      %v2937 = vunpack.c.l.bf16 %v2933
      %v2938 = vunpack.c.l.bf16 %v2934
      %v2939 = vunpack.c.l.bf16 %v2935
      %v2940 = vmul.f32 %v2924, %v2936
      %v2941 = vmul.f32 %v2925, %v2937
      %v2942 = vmul.f32 %v2926, %v2938
      %v2943 = vmul.f32 %v2927, %v2939
      %v2944 = vpack.c.bf16 %v2940, %v2940
      %v2945 = vpack.c.bf16 %v2941, %v2941
      %v2946 = vpack.c.bf16 %v2942, %v2942
      %v2947 = vpack.c.bf16 %v2943, %v2943
      %v2948 = vunpack.c.l.bf16 %v2944
      %v2949 = vunpack.c.l.bf16 %v2945
      %v2950 = vunpack.c.l.bf16 %v2946
      %v2951 = vunpack.c.l.bf16 %v2947
      %v2952 = vadd.f32 %v2924, %v2948
      %v2953 = vadd.f32 %v2925, %v2949
      %v2954 = vadd.f32 %v2926, %v2950
      %v2955 = vadd.f32 %v2927, %v2951
      %v2956 = vpack.c.bf16 %v2953, %v2952
      %v2957 = vpack.c.bf16 %v2955, %v2954
      %2958 = vmatpush.bf16.msra.mxu0 0
      %2959 = vmatpush.bf16.msra.mxu0 0
      %2960 = vmatpush.bf16.msra.mxu0 0
      %2961 = vmatpush.bf16.msra.mxu0 0
      %2962 = vmatpush.bf16.msra.mxu0 0
      %2963 = vmatpush.bf16.msra.mxu0 0
      %2964 = vmatpush.bf16.msra.mxu0 %v2957
      %2965 = vmatpush.bf16.msra.mxu0 %v2956
      %2966 = vmatmul.bf16.gmra.mxu0 %v643
      %v2967 = vpop.f32.mrf.mxu0
      %v2968 = vadd.f32 %v640, %v2967
      %v2969 = vpop.f32.mrf.mxu0
      %2970 = vdwg.mxu0
      %p2971 = scmp.ge.s32.totalorder %s2800, 1
      %s2972 = scalar_select %p2971, 1, 0
      %v2973 = vstv %s2972
      %vm2974 = vcmp.eq.s32.totalorder %v2973, 1
      %vm2975 = vmand %vm2974, %vm384
      %v2976 = vsel %vm2975, 1, 0
      %vm2977 = vcmp.eq.s32.totalorder %v2976, 1
      %v2978 = vsel %vm2977, %v2968, 0.0
      %v2980 = vrot.slane %v2978, 1
      %v2981 = vrot.slane %v2978, 2
      %v2982 = vrot.slane %v2978, 3
      %2986 = vst.msk [vmem:[%s357 + $0xc] sm:$0x1] %vm673, %v2978
      %2987 = vst.msk [vmem:[%s357 + $0x1c] sm:$0x1] %vm673, %v2980
      %2988 = vst.msk [vmem:[%s357 + $0x2c] sm:$0x1] %vm673, %v2981
      %2989 = vst.msk [vmem:[%s357 + $0x3c] sm:$0x1] %vm673, %v2982
      %s2990 = sadd.s32 %s385, 13
      %s2991 = scvt.s32.f32 %s2990
      %v2992 = vstv %s2991
      %v2993 = vsub.f32 %v2992, %v383
      %v2994 = vmul.f32 %v2993, 0.001953125
      %v2995 = vfloor.f32 %v2994
      %v2996 = vsub.f32 %v2994, %v2995
      %v2997 = vrot.slane %v2233, 4
      %v2999 = vrot.slane %v2236, 3
      %v3001 = vrot.slane %v2239, 2
      %v3003 = vsel %vm415, %v2996, %v2997
      %v3004 = vsel %vm417, %v3003, %v2999
      %v3005 = vsel %vm419, %v3004, %v3001
      %v3006 = vpack.c.bf16 %v3005, %v3005
      %v3008 = vsel %vm417, %v3006, 0
      %3010 = vmatpush.bf16.msra.mxu0 0
      %3011 = vmatpush.bf16.msra.mxu0 0
      %3012 = vmatpush.bf16.msra.mxu0 0
      %3013 = vmatpush.bf16.msra.mxu0 0
      %3014 = vmatpush.bf16.msra.mxu0 0
      %3015 = vmatpush.bf16.msra.mxu0 0
      %3016 = vmatpush.bf16.msra.mxu0 0
      %3017 = vmatpush.bf16.msra.mxu0 %v3008
      %3018 = vmatmul.bf16.gmra.mxu0 %v454
      %v3019 = vpop.f32.mrf.mxu0
      %v3020 = vadd.f32 %v425, %v3019
      %v3021 = vpop.f32.mrf.mxu0
      %v3022 = vadd.f32 %v430, %v3021
      %3023 = vmatmul.bf16.gmra.mxu0 %v457
      %v3024 = vpop.f32.mrf.mxu0
      %v3025 = vadd.f32 %v435, %v3024
      %v3026 = vpop.f32.mrf.mxu0
      %v3027 = vadd.f32 %v440, %v3026
      %3028 = vdwg.mxu0
      %v3029 = vpack.c.bf16 %v3020, %v3020
      %v3030 = vpack.c.bf16 %v3022, %v3022
      %v3031 = vpack.c.bf16 %v3025, %v3025
      %v3032 = vpack.c.bf16 %v3027, %v3027
      %v3033 = vunpack.c.l.bf16 %v3029
      %v3034 = vunpack.c.l.bf16 %v3030
      %v3035 = vunpack.c.l.bf16 %v3031
      %v3036 = vunpack.c.l.bf16 %v3032
      %v3037 = vmul.f32 %v3033, 0.5
      %v3038 = vmul.f32 %v3034, 0.5
      %v3039 = vmul.f32 %v3035, 0.5
      %v3040 = vmul.f32 %v3036, 0.5
      %v3041 = vpack.c.bf16 %v3037, %v3037
      %v3042 = vpack.c.bf16 %v3038, %v3038
      %v3043 = vpack.c.bf16 %v3039, %v3039
      %v3044 = vpack.c.bf16 %v3040, %v3040
      %v3045 = vunpack.c.l.bf16 %v3041
      %v3046 = vunpack.c.l.bf16 %v3042
      %v3047 = vunpack.c.l.bf16 %v3043
      %v3048 = vunpack.c.l.bf16 %v3044
      %v3049 = vtanh.pop %v3045
      %v3050 = vtanh.pop %v3046
      %v3051 = vtanh.pop %v3047
      %v3052 = vtanh.pop %v3048
      %v3053 = vpack.c.bf16 %v3049, %v3049
      %v3054 = vpack.c.bf16 %v3050, %v3050
      %v3055 = vpack.c.bf16 %v3051, %v3051
      %v3056 = vpack.c.bf16 %v3052, %v3052
      %v3057 = vunpack.c.l.bf16 %v3053
      %v3058 = vunpack.c.l.bf16 %v3054
      %v3059 = vunpack.c.l.bf16 %v3055
      %v3060 = vunpack.c.l.bf16 %v3056
      %v3061 = vmul.f32 %v3045, %v3057
      %v3062 = vmul.f32 %v3046, %v3058
      %v3063 = vmul.f32 %v3047, %v3059
      %v3064 = vmul.f32 %v3048, %v3060
      %v3065 = vpack.c.bf16 %v3061, %v3061
      %v3066 = vpack.c.bf16 %v3062, %v3062
      %v3067 = vpack.c.bf16 %v3063, %v3063
      %v3068 = vpack.c.bf16 %v3064, %v3064
      %v3069 = vunpack.c.l.bf16 %v3065
      %v3070 = vunpack.c.l.bf16 %v3066
      %v3071 = vunpack.c.l.bf16 %v3067
      %v3072 = vunpack.c.l.bf16 %v3068
      %v3073 = vadd.f32 %v3045, %v3069
      %v3074 = vadd.f32 %v3046, %v3070
      %v3075 = vadd.f32 %v3047, %v3071
      %v3076 = vadd.f32 %v3048, %v3072
      %v3077 = vpack.c.bf16 %v3074, %v3073
      %v3078 = vpack.c.bf16 %v3076, %v3075
      %3079 = vmatpush.bf16.msra.mxu0 0
      %3080 = vmatpush.bf16.msra.mxu0 0
      %3081 = vmatpush.bf16.msra.mxu0 0
      %3082 = vmatpush.bf16.msra.mxu0 0
      %3083 = vmatpush.bf16.msra.mxu0 0
      %3084 = vmatpush.bf16.msra.mxu0 0
      %3085 = vmatpush.bf16.msra.mxu0 %v3078
      %3086 = vmatpush.bf16.msra.mxu0 %v3077
      %3087 = vmatmul.bf16.gmra.mxu0 %v563
      %v3088 = vpop.f32.mrf.mxu0
      %v3089 = vadd.f32 %v534, %v3088
      %v3090 = vpop.f32.mrf.mxu0
      %v3091 = vadd.f32 %v539, %v3090
      %3092 = vmatmul.bf16.gmra.mxu0 %v566
      %v3093 = vpop.f32.mrf.mxu0
      %v3094 = vadd.f32 %v544, %v3093
      %v3095 = vpop.f32.mrf.mxu0
      %v3096 = vadd.f32 %v549, %v3095
      %3097 = vdwg.mxu0
      %v3098 = vpack.c.bf16 %v3089, %v3089
      %v3099 = vpack.c.bf16 %v3091, %v3091
      %v3100 = vpack.c.bf16 %v3094, %v3094
      %v3101 = vpack.c.bf16 %v3096, %v3096
      %v3102 = vunpack.c.l.bf16 %v3098
      %v3103 = vunpack.c.l.bf16 %v3099
      %v3104 = vunpack.c.l.bf16 %v3100
      %v3105 = vunpack.c.l.bf16 %v3101
      %v3106 = vmul.f32 %v3102, 0.5
      %v3107 = vmul.f32 %v3103, 0.5
      %v3108 = vmul.f32 %v3104, 0.5
      %v3109 = vmul.f32 %v3105, 0.5
      %v3110 = vpack.c.bf16 %v3106, %v3106
      %v3111 = vpack.c.bf16 %v3107, %v3107
      %v3112 = vpack.c.bf16 %v3108, %v3108
      %v3113 = vpack.c.bf16 %v3109, %v3109
      %v3114 = vunpack.c.l.bf16 %v3110
      %v3115 = vunpack.c.l.bf16 %v3111
      %v3116 = vunpack.c.l.bf16 %v3112
      %v3117 = vunpack.c.l.bf16 %v3113
      %v3118 = vtanh.pop %v3114
      %v3119 = vtanh.pop %v3115
      %v3120 = vtanh.pop %v3116
      %v3121 = vtanh.pop %v3117
      %v3122 = vpack.c.bf16 %v3118, %v3118
      %v3123 = vpack.c.bf16 %v3119, %v3119
      %v3124 = vpack.c.bf16 %v3120, %v3120
      %v3125 = vpack.c.bf16 %v3121, %v3121
      %v3126 = vunpack.c.l.bf16 %v3122
      %v3127 = vunpack.c.l.bf16 %v3123
      %v3128 = vunpack.c.l.bf16 %v3124
      %v3129 = vunpack.c.l.bf16 %v3125
      %v3130 = vmul.f32 %v3114, %v3126
      %v3131 = vmul.f32 %v3115, %v3127
      %v3132 = vmul.f32 %v3116, %v3128
      %v3133 = vmul.f32 %v3117, %v3129
      %v3134 = vpack.c.bf16 %v3130, %v3130
      %v3135 = vpack.c.bf16 %v3131, %v3131
      %v3136 = vpack.c.bf16 %v3132, %v3132
      %v3137 = vpack.c.bf16 %v3133, %v3133
      %v3138 = vunpack.c.l.bf16 %v3134
      %v3139 = vunpack.c.l.bf16 %v3135
      %v3140 = vunpack.c.l.bf16 %v3136
      %v3141 = vunpack.c.l.bf16 %v3137
      %v3142 = vadd.f32 %v3114, %v3138
      %v3143 = vadd.f32 %v3115, %v3139
      %v3144 = vadd.f32 %v3116, %v3140
      %v3145 = vadd.f32 %v3117, %v3141
      %v3146 = vpack.c.bf16 %v3143, %v3142
      %v3147 = vpack.c.bf16 %v3145, %v3144
      %3148 = vmatpush.bf16.msra.mxu0 0
      %3149 = vmatpush.bf16.msra.mxu0 0
      %3150 = vmatpush.bf16.msra.mxu0 0
      %3151 = vmatpush.bf16.msra.mxu0 0
      %3152 = vmatpush.bf16.msra.mxu0 0
      %3153 = vmatpush.bf16.msra.mxu0 0
      %3154 = vmatpush.bf16.msra.mxu0 %v3147
      %3155 = vmatpush.bf16.msra.mxu0 %v3146
      %3156 = vmatmul.bf16.gmra.mxu0 %v643
      %v3157 = vpop.f32.mrf.mxu0
      %v3158 = vadd.f32 %v640, %v3157
      %v3159 = vpop.f32.mrf.mxu0
      %3160 = vdwg.mxu0
      %p3161 = scmp.ge.s32.totalorder %s2990, 1
      %s3162 = scalar_select %p3161, 1, 0
      %v3163 = vstv %s3162
      %vm3164 = vcmp.eq.s32.totalorder %v3163, 1
      %vm3165 = vmand %vm3164, %vm384
      %v3166 = vsel %vm3165, 1, 0
      %vm3167 = vcmp.eq.s32.totalorder %v3166, 1
      %v3168 = vsel %vm3167, %v3158, 0.0
      %v3170 = vrot.slane %v3168, 1
      %v3171 = vrot.slane %v3168, 2
      %v3172 = vrot.slane %v3168, 3
      %3176 = vst.msk [vmem:[%s357 + $0xd] sm:$0x1] %vm673, %v3168
      %3177 = vst.msk [vmem:[%s357 + $0x1d] sm:$0x1] %vm673, %v3170
      %3178 = vst.msk [vmem:[%s357 + $0x2d] sm:$0x1] %vm673, %v3171
      %3179 = vst.msk [vmem:[%s357 + $0x3d] sm:$0x1] %vm673, %v3172
      %s3180 = sadd.s32 %s385, 14
      %s3181 = scvt.s32.f32 %s3180
      %v3182 = vstv %s3181
      %v3183 = vsub.f32 %v3182, %v383
      %v3184 = vmul.f32 %v3183, 0.001953125
      %v3185 = vfloor.f32 %v3184
      %v3186 = vsub.f32 %v3184, %v3185
      %v3187 = vrot.slane %v2233, 5
      %v3189 = vrot.slane %v2236, 4
      %v3191 = vrot.slane %v2239, 3
      %v3193 = vsel %vm415, %v3186, %v3187
      %v3194 = vsel %vm417, %v3193, %v3189
      %v3195 = vsel %vm419, %v3194, %v3191
      %v3196 = vpack.c.bf16 %v3195, %v3195
      %v3198 = vsel %vm417, %v3196, 0
      %3200 = vmatpush.bf16.msra.mxu0 0
      %3201 = vmatpush.bf16.msra.mxu0 0
      %3202 = vmatpush.bf16.msra.mxu0 0
      %3203 = vmatpush.bf16.msra.mxu0 0
      %3204 = vmatpush.bf16.msra.mxu0 0
      %3205 = vmatpush.bf16.msra.mxu0 0
      %3206 = vmatpush.bf16.msra.mxu0 0
      %3207 = vmatpush.bf16.msra.mxu0 %v3198
      %3208 = vmatmul.bf16.gmra.mxu0 %v454
      %v3209 = vpop.f32.mrf.mxu0
      %v3210 = vadd.f32 %v425, %v3209
      %v3211 = vpop.f32.mrf.mxu0
      %v3212 = vadd.f32 %v430, %v3211
      %3213 = vmatmul.bf16.gmra.mxu0 %v457
      %v3214 = vpop.f32.mrf.mxu0
      %v3215 = vadd.f32 %v435, %v3214
      %v3216 = vpop.f32.mrf.mxu0
      %v3217 = vadd.f32 %v440, %v3216
      %3218 = vdwg.mxu0
      %v3219 = vpack.c.bf16 %v3210, %v3210
      %v3220 = vpack.c.bf16 %v3212, %v3212
      %v3221 = vpack.c.bf16 %v3215, %v3215
      %v3222 = vpack.c.bf16 %v3217, %v3217
      %v3223 = vunpack.c.l.bf16 %v3219
      %v3224 = vunpack.c.l.bf16 %v3220
      %v3225 = vunpack.c.l.bf16 %v3221
      %v3226 = vunpack.c.l.bf16 %v3222
      %v3227 = vmul.f32 %v3223, 0.5
      %v3228 = vmul.f32 %v3224, 0.5
      %v3229 = vmul.f32 %v3225, 0.5
      %v3230 = vmul.f32 %v3226, 0.5
      %v3231 = vpack.c.bf16 %v3227, %v3227
      %v3232 = vpack.c.bf16 %v3228, %v3228
      %v3233 = vpack.c.bf16 %v3229, %v3229
      %v3234 = vpack.c.bf16 %v3230, %v3230
      %v3235 = vunpack.c.l.bf16 %v3231
      %v3236 = vunpack.c.l.bf16 %v3232
      %v3237 = vunpack.c.l.bf16 %v3233
      %v3238 = vunpack.c.l.bf16 %v3234
      %v3239 = vtanh.pop %v3235
      %v3240 = vtanh.pop %v3236
      %v3241 = vtanh.pop %v3237
      %v3242 = vtanh.pop %v3238
      %v3243 = vpack.c.bf16 %v3239, %v3239
      %v3244 = vpack.c.bf16 %v3240, %v3240
      %v3245 = vpack.c.bf16 %v3241, %v3241
      %v3246 = vpack.c.bf16 %v3242, %v3242
      %v3247 = vunpack.c.l.bf16 %v3243
      %v3248 = vunpack.c.l.bf16 %v3244
      %v3249 = vunpack.c.l.bf16 %v3245
      %v3250 = vunpack.c.l.bf16 %v3246
      %v3251 = vmul.f32 %v3235, %v3247
      %v3252 = vmul.f32 %v3236, %v3248
      %v3253 = vmul.f32 %v3237, %v3249
      %v3254 = vmul.f32 %v3238, %v3250
      %v3255 = vpack.c.bf16 %v3251, %v3251
      %v3256 = vpack.c.bf16 %v3252, %v3252
      %v3257 = vpack.c.bf16 %v3253, %v3253
      %v3258 = vpack.c.bf16 %v3254, %v3254
      %v3259 = vunpack.c.l.bf16 %v3255
      %v3260 = vunpack.c.l.bf16 %v3256
      %v3261 = vunpack.c.l.bf16 %v3257
      %v3262 = vunpack.c.l.bf16 %v3258
      %v3263 = vadd.f32 %v3235, %v3259
      %v3264 = vadd.f32 %v3236, %v3260
      %v3265 = vadd.f32 %v3237, %v3261
      %v3266 = vadd.f32 %v3238, %v3262
      %v3267 = vpack.c.bf16 %v3264, %v3263
      %v3268 = vpack.c.bf16 %v3266, %v3265
      %3269 = vmatpush.bf16.msra.mxu0 0
      %3270 = vmatpush.bf16.msra.mxu0 0
      %3271 = vmatpush.bf16.msra.mxu0 0
      %3272 = vmatpush.bf16.msra.mxu0 0
      %3273 = vmatpush.bf16.msra.mxu0 0
      %3274 = vmatpush.bf16.msra.mxu0 0
      %3275 = vmatpush.bf16.msra.mxu0 %v3268
      %3276 = vmatpush.bf16.msra.mxu0 %v3267
      %3277 = vmatmul.bf16.gmra.mxu0 %v563
      %v3278 = vpop.f32.mrf.mxu0
      %v3279 = vadd.f32 %v534, %v3278
      %v3280 = vpop.f32.mrf.mxu0
      %v3281 = vadd.f32 %v539, %v3280
      %3282 = vmatmul.bf16.gmra.mxu0 %v566
      %v3283 = vpop.f32.mrf.mxu0
      %v3284 = vadd.f32 %v544, %v3283
      %v3285 = vpop.f32.mrf.mxu0
      %v3286 = vadd.f32 %v549, %v3285
      %3287 = vdwg.mxu0
      %v3288 = vpack.c.bf16 %v3279, %v3279
      %v3289 = vpack.c.bf16 %v3281, %v3281
      %v3290 = vpack.c.bf16 %v3284, %v3284
      %v3291 = vpack.c.bf16 %v3286, %v3286
      %v3292 = vunpack.c.l.bf16 %v3288
      %v3293 = vunpack.c.l.bf16 %v3289
      %v3294 = vunpack.c.l.bf16 %v3290
      %v3295 = vunpack.c.l.bf16 %v3291
      %v3296 = vmul.f32 %v3292, 0.5
      %v3297 = vmul.f32 %v3293, 0.5
      %v3298 = vmul.f32 %v3294, 0.5
      %v3299 = vmul.f32 %v3295, 0.5
      %v3300 = vpack.c.bf16 %v3296, %v3296
      %v3301 = vpack.c.bf16 %v3297, %v3297
      %v3302 = vpack.c.bf16 %v3298, %v3298
      %v3303 = vpack.c.bf16 %v3299, %v3299
      %v3304 = vunpack.c.l.bf16 %v3300
      %v3305 = vunpack.c.l.bf16 %v3301
      %v3306 = vunpack.c.l.bf16 %v3302
      %v3307 = vunpack.c.l.bf16 %v3303
      %v3308 = vtanh.pop %v3304
      %v3309 = vtanh.pop %v3305
      %v3310 = vtanh.pop %v3306
      %v3311 = vtanh.pop %v3307
      %v3312 = vpack.c.bf16 %v3308, %v3308
      %v3313 = vpack.c.bf16 %v3309, %v3309
      %v3314 = vpack.c.bf16 %v3310, %v3310
      %v3315 = vpack.c.bf16 %v3311, %v3311
      %v3316 = vunpack.c.l.bf16 %v3312
      %v3317 = vunpack.c.l.bf16 %v3313
      %v3318 = vunpack.c.l.bf16 %v3314
      %v3319 = vunpack.c.l.bf16 %v3315
      %v3320 = vmul.f32 %v3304, %v3316
      %v3321 = vmul.f32 %v3305, %v3317
      %v3322 = vmul.f32 %v3306, %v3318
      %v3323 = vmul.f32 %v3307, %v3319
      %v3324 = vpack.c.bf16 %v3320, %v3320
      %v3325 = vpack.c.bf16 %v3321, %v3321
      %v3326 = vpack.c.bf16 %v3322, %v3322
      %v3327 = vpack.c.bf16 %v3323, %v3323
      %v3328 = vunpack.c.l.bf16 %v3324
      %v3329 = vunpack.c.l.bf16 %v3325
      %v3330 = vunpack.c.l.bf16 %v3326
      %v3331 = vunpack.c.l.bf16 %v3327
      %v3332 = vadd.f32 %v3304, %v3328
      %v3333 = vadd.f32 %v3305, %v3329
      %v3334 = vadd.f32 %v3306, %v3330
      %v3335 = vadd.f32 %v3307, %v3331
      %v3336 = vpack.c.bf16 %v3333, %v3332
      %v3337 = vpack.c.bf16 %v3335, %v3334
      %3338 = vmatpush.bf16.msra.mxu0 0
      %3339 = vmatpush.bf16.msra.mxu0 0
      %3340 = vmatpush.bf16.msra.mxu0 0
      %3341 = vmatpush.bf16.msra.mxu0 0
      %3342 = vmatpush.bf16.msra.mxu0 0
      %3343 = vmatpush.bf16.msra.mxu0 0
      %3344 = vmatpush.bf16.msra.mxu0 %v3337
      %3345 = vmatpush.bf16.msra.mxu0 %v3336
      %3346 = vmatmul.bf16.gmra.mxu0 %v643
      %v3347 = vpop.f32.mrf.mxu0
      %v3348 = vadd.f32 %v640, %v3347
      %v3349 = vpop.f32.mrf.mxu0
      %3350 = vdwg.mxu0
      %p3351 = scmp.ge.s32.totalorder %s3180, 1
      %s3352 = scalar_select %p3351, 1, 0
      %v3353 = vstv %s3352
      %vm3354 = vcmp.eq.s32.totalorder %v3353, 1
      %vm3355 = vmand %vm3354, %vm384
      %v3356 = vsel %vm3355, 1, 0
      %vm3357 = vcmp.eq.s32.totalorder %v3356, 1
      %v3358 = vsel %vm3357, %v3348, 0.0
      %v3360 = vrot.slane %v3358, 1
      %v3361 = vrot.slane %v3358, 2
      %v3362 = vrot.slane %v3358, 3
      %3366 = vst.msk [vmem:[%s357 + $0xe] sm:$0x1] %vm673, %v3358
      %3367 = vst.msk [vmem:[%s357 + $0x1e] sm:$0x1] %vm673, %v3360
      %3368 = vst.msk [vmem:[%s357 + $0x2e] sm:$0x1] %vm673, %v3361
      %3369 = vst.msk [vmem:[%s357 + $0x3e] sm:$0x1] %vm673, %v3362
      %s3370 = sadd.s32 %s385, 15
      %s3371 = scvt.s32.f32 %s3370
      %v3372 = vstv %s3371
      %v3373 = vsub.f32 %v3372, %v383
      %v3374 = vmul.f32 %v3373, 0.001953125
      %v3375 = vfloor.f32 %v3374
      %v3376 = vsub.f32 %v3374, %v3375
      %v3377 = vrot.slane %v2233, 6
      %v3379 = vrot.slane %v2236, 5
      %v3381 = vrot.slane %v2239, 4
      %v3383 = vsel %vm415, %v3376, %v3377
      %v3384 = vsel %vm417, %v3383, %v3379
      %v3385 = vsel %vm419, %v3384, %v3381
      %v3386 = vpack.c.bf16 %v3385, %v3385
      %v3388 = vsel %vm417, %v3386, 0
      %3390 = vmatpush.bf16.msra.mxu0 0
      %3391 = vmatpush.bf16.msra.mxu0 0
      %3392 = vmatpush.bf16.msra.mxu0 0
      %3393 = vmatpush.bf16.msra.mxu0 0
      %3394 = vmatpush.bf16.msra.mxu0 0
      %3395 = vmatpush.bf16.msra.mxu0 0
      %3396 = vmatpush.bf16.msra.mxu0 0
      %3397 = vmatpush.bf16.msra.mxu0 %v3388
      %3398 = vmatmul.bf16.gmra.mxu0 %v454
      %v3399 = vpop.f32.mrf.mxu0
      %v3400 = vadd.f32 %v425, %v3399
      %v3401 = vpop.f32.mrf.mxu0
      %v3402 = vadd.f32 %v430, %v3401
      %3403 = vmatmul.bf16.gmra.mxu0 %v457
      %v3404 = vpop.f32.mrf.mxu0
      %v3405 = vadd.f32 %v435, %v3404
      %v3406 = vpop.f32.mrf.mxu0
      %v3407 = vadd.f32 %v440, %v3406
      %3408 = vdwg.mxu0
      %v3409 = vpack.c.bf16 %v3400, %v3400
      %v3410 = vpack.c.bf16 %v3402, %v3402
      %v3411 = vpack.c.bf16 %v3405, %v3405
      %v3412 = vpack.c.bf16 %v3407, %v3407
      %v3413 = vunpack.c.l.bf16 %v3409
      %v3414 = vunpack.c.l.bf16 %v3410
      %v3415 = vunpack.c.l.bf16 %v3411
      %v3416 = vunpack.c.l.bf16 %v3412
      %v3417 = vmul.f32 %v3413, 0.5
      %v3418 = vmul.f32 %v3414, 0.5
      %v3419 = vmul.f32 %v3415, 0.5
      %v3420 = vmul.f32 %v3416, 0.5
      %v3421 = vpack.c.bf16 %v3417, %v3417
      %v3422 = vpack.c.bf16 %v3418, %v3418
      %v3423 = vpack.c.bf16 %v3419, %v3419
      %v3424 = vpack.c.bf16 %v3420, %v3420
      %v3425 = vunpack.c.l.bf16 %v3421
      %v3426 = vunpack.c.l.bf16 %v3422
      %v3427 = vunpack.c.l.bf16 %v3423
      %v3428 = vunpack.c.l.bf16 %v3424
      %v3429 = vtanh.pop %v3425
      %v3430 = vtanh.pop %v3426
      %v3431 = vtanh.pop %v3427
      %v3432 = vtanh.pop %v3428
      %v3433 = vpack.c.bf16 %v3429, %v3429
      %v3434 = vpack.c.bf16 %v3430, %v3430
      %v3435 = vpack.c.bf16 %v3431, %v3431
      %v3436 = vpack.c.bf16 %v3432, %v3432
      %v3437 = vunpack.c.l.bf16 %v3433
      %v3438 = vunpack.c.l.bf16 %v3434
      %v3439 = vunpack.c.l.bf16 %v3435
      %v3440 = vunpack.c.l.bf16 %v3436
      %v3441 = vmul.f32 %v3425, %v3437
      %v3442 = vmul.f32 %v3426, %v3438
      %v3443 = vmul.f32 %v3427, %v3439
      %v3444 = vmul.f32 %v3428, %v3440
      %v3445 = vpack.c.bf16 %v3441, %v3441
      %v3446 = vpack.c.bf16 %v3442, %v3442
      %v3447 = vpack.c.bf16 %v3443, %v3443
      %v3448 = vpack.c.bf16 %v3444, %v3444
      %v3449 = vunpack.c.l.bf16 %v3445
      %v3450 = vunpack.c.l.bf16 %v3446
      %v3451 = vunpack.c.l.bf16 %v3447
      %v3452 = vunpack.c.l.bf16 %v3448
      %v3453 = vadd.f32 %v3425, %v3449
      %v3454 = vadd.f32 %v3426, %v3450
      %v3455 = vadd.f32 %v3427, %v3451
      %v3456 = vadd.f32 %v3428, %v3452
      %v3457 = vpack.c.bf16 %v3454, %v3453
      %v3458 = vpack.c.bf16 %v3456, %v3455
      %3459 = vmatpush.bf16.msra.mxu0 0
      %3460 = vmatpush.bf16.msra.mxu0 0
      %3461 = vmatpush.bf16.msra.mxu0 0
      %3462 = vmatpush.bf16.msra.mxu0 0
      %3463 = vmatpush.bf16.msra.mxu0 0
      %3464 = vmatpush.bf16.msra.mxu0 0
      %3465 = vmatpush.bf16.msra.mxu0 %v3458
      %3466 = vmatpush.bf16.msra.mxu0 %v3457
      %3467 = vmatmul.bf16.gmra.mxu0 %v563
      %v3468 = vpop.f32.mrf.mxu0
      %v3469 = vadd.f32 %v534, %v3468
      %v3470 = vpop.f32.mrf.mxu0
      %v3471 = vadd.f32 %v539, %v3470
      %3472 = vmatmul.bf16.gmra.mxu0 %v566
      %v3473 = vpop.f32.mrf.mxu0
      %v3474 = vadd.f32 %v544, %v3473
      %v3475 = vpop.f32.mrf.mxu0
      %v3476 = vadd.f32 %v549, %v3475
      %3477 = vdwg.mxu0
      %v3478 = vpack.c.bf16 %v3469, %v3469
      %v3479 = vpack.c.bf16 %v3471, %v3471
      %v3480 = vpack.c.bf16 %v3474, %v3474
      %v3481 = vpack.c.bf16 %v3476, %v3476
      %v3482 = vunpack.c.l.bf16 %v3478
      %v3483 = vunpack.c.l.bf16 %v3479
      %v3484 = vunpack.c.l.bf16 %v3480
      %v3485 = vunpack.c.l.bf16 %v3481
      %v3486 = vmul.f32 %v3482, 0.5
      %v3487 = vmul.f32 %v3483, 0.5
      %v3488 = vmul.f32 %v3484, 0.5
      %v3489 = vmul.f32 %v3485, 0.5
      %v3490 = vpack.c.bf16 %v3486, %v3486
      %v3491 = vpack.c.bf16 %v3487, %v3487
      %v3492 = vpack.c.bf16 %v3488, %v3488
      %v3493 = vpack.c.bf16 %v3489, %v3489
      %v3494 = vunpack.c.l.bf16 %v3490
      %v3495 = vunpack.c.l.bf16 %v3491
      %v3496 = vunpack.c.l.bf16 %v3492
      %v3497 = vunpack.c.l.bf16 %v3493
      %v3498 = vtanh.pop %v3494
      %v3499 = vtanh.pop %v3495
      %v3500 = vtanh.pop %v3496
      %v3501 = vtanh.pop %v3497
      %v3502 = vpack.c.bf16 %v3498, %v3498
      %v3503 = vpack.c.bf16 %v3499, %v3499
      %v3504 = vpack.c.bf16 %v3500, %v3500
      %v3505 = vpack.c.bf16 %v3501, %v3501
      %v3506 = vunpack.c.l.bf16 %v3502
      %v3507 = vunpack.c.l.bf16 %v3503
      %v3508 = vunpack.c.l.bf16 %v3504
      %v3509 = vunpack.c.l.bf16 %v3505
      %v3510 = vmul.f32 %v3494, %v3506
      %v3511 = vmul.f32 %v3495, %v3507
      %v3512 = vmul.f32 %v3496, %v3508
      %v3513 = vmul.f32 %v3497, %v3509
      %v3514 = vpack.c.bf16 %v3510, %v3510
      %v3515 = vpack.c.bf16 %v3511, %v3511
      %v3516 = vpack.c.bf16 %v3512, %v3512
      %v3517 = vpack.c.bf16 %v3513, %v3513
      %v3518 = vunpack.c.l.bf16 %v3514
      %v3519 = vunpack.c.l.bf16 %v3515
      %v3520 = vunpack.c.l.bf16 %v3516
      %v3521 = vunpack.c.l.bf16 %v3517
      %v3522 = vadd.f32 %v3494, %v3518
      %v3523 = vadd.f32 %v3495, %v3519
      %v3524 = vadd.f32 %v3496, %v3520
      %v3525 = vadd.f32 %v3497, %v3521
      %v3526 = vpack.c.bf16 %v3523, %v3522
      %v3527 = vpack.c.bf16 %v3525, %v3524
      %3528 = vmatpush.bf16.msra.mxu0 0
      %3529 = vmatpush.bf16.msra.mxu0 0
      %3530 = vmatpush.bf16.msra.mxu0 0
      %3531 = vmatpush.bf16.msra.mxu0 0
      %3532 = vmatpush.bf16.msra.mxu0 0
      %3533 = vmatpush.bf16.msra.mxu0 0
      %3534 = vmatpush.bf16.msra.mxu0 %v3527
      %3535 = vmatpush.bf16.msra.mxu0 %v3526
      %3536 = vmatmul.bf16.gmra.mxu0 %v643
      %v3537 = vpop.f32.mrf.mxu0
      %v3538 = vadd.f32 %v640, %v3537
      %v3539 = vpop.f32.mrf.mxu0
      %3540 = vdwg.mxu0
      %p3541 = scmp.ge.s32.totalorder %s3370, 1
      %s3542 = scalar_select %p3541, 1, 0
      %v3543 = vstv %s3542
      %vm3544 = vcmp.eq.s32.totalorder %v3543, 1
      %vm3545 = vmand %vm3544, %vm384
      %v3546 = vsel %vm3545, 1, 0
      %vm3547 = vcmp.eq.s32.totalorder %v3546, 1
      %v3548 = vsel %vm3547, %v3538, 0.0
      %v3550 = vrot.slane %v3548, 1
      %v3551 = vrot.slane %v3548, 2
      %v3552 = vrot.slane %v3548, 3
      %3556 = vst.msk [vmem:[%s357 + $0xf] sm:$0x1] %vm673, %v3548
      %3557 = vst.msk [vmem:[%s357 + $0x1f] sm:$0x1] %vm673, %v3550
      %3558 = vst.msk [vmem:[%s357 + $0x2f] sm:$0x1] %vm673, %v3551
      %3559 = vst.msk [vmem:[%s357 + $0x3f] sm:$0x1] %vm673, %v3552
      %s3560 = smul.u32 2, %s23
      %p3561 = scmp.lt.s32.totalorder %s24, 1
      %s3562 = scalar_select %p3561, %s24, 1
      %p3563 = scmp.lt.s32.totalorder %s3560, 1
      %s3564 = scalar_select %p3563, %s3560, 1
      %s3565 = smul.addr %s3562, 8
      %s3566 = sadd.s32 %s3564, %s3565
      %s3567 = smul.addr %s3566, 8
      %s3568 = scalar_lea.vmem %s8, %s3567
      // Predicated region
      $region53: #{tpu_custom_call.1} parent=51 // pred_check
        %p3569 = pneg %p231
      $region54: #{tpu_custom_call.1} parent=51 // pred_check_branch
        %3571 = sbr.rel (%p3569) target = $region56
      $region55: #{tpu_custom_call.1} parent=51 // pred_region
        %s3572 = smul.u32 2, %s23
      $region56: #{tpu_custom_call.1} parent=51 // pred_fallthru
        _
    $region52: #{tpu_custom_call.1} parent=5 // pred_fallthru
      _
    %p3573 = scmp.le.s32.totalorder 2, %s14
    // Predicated region
    $region57: #{tpu_custom_call.1} parent=5 // pred_check
      %p3574 = pneg %p3573
    $region58: #{tpu_custom_call.1} parent=5 // pred_check_branch
      %3576 = sbr.rel (%p3574) target = $region60
    $region59: #{tpu_custom_call.1} parent=5 // pred_region
      %s3577 = ssub.s32 %s14, 2
      // Predicated region
      $region61: #{tpu_custom_call.1} parent=59 // pred_check
        %p3578 = pneg %p237
      $region62: #{tpu_custom_call.1} parent=59 // pred_check_branch
        %3580 = sbr.rel (%p3578) target = $region64
      $region63: #{tpu_custom_call.1} parent=59 // pred_region
        %s3581 = smul.u32 2, %s25
        %p3582 = scmp.lt.s32.totalorder %s26, 1
        %s3583 = scalar_select %p3582, %s26, 1
        %p3584 = scmp.lt.s32.totalorder %s3581, 1
        %s3585 = scalar_select %p3584, %s3581, 1
        %s3586 = smul.addr %s3583, 8
        %s3587 = sadd.s32 %s3585, %s3586
        %s3588 = smul.addr %s3587, 8
        %s3589 = scalar_lea.vmem %s8, %s3588
      $region64: #{tpu_custom_call.1} parent=59 // pred_fallthru
        _
    $region60: #{tpu_custom_call.1} parent=5 // pred_fallthru
      _
  $region6: #{tpu_custom_call.1} parent=0 // loop_footer
    %s18 = sadd.s32 1, %s14
  $region7: #{tpu_custom_call.1} parent=0 // loop_footer_branch
    %13 = sbr.rel target = $region3
  $region8: #{tpu_custom_call.1} parent=0 // loop_exit
    _

</llo_original>
